<compile_context>
chip_gen: v6e
topology: v6e:2x2x1
jax: 0.10.0
libtpu: 0.0.40
codegen_flags: <defaults>
</compile_context>

<pallas_src>
import math

import jax
import jax.numpy as jnp
import numpy as np
from jax.experimental import pallas as pl
from jax.experimental.pallas import tpu as pltpu

# ----------------------------- model config ---------------------------------
B = 2           # batch
N = 8           # tokens (seq)
DIM = 32        # embedding dim
DEPTH = 2
HEADS = 4
DIM_HEAD = 16
MLP_DIM = 64
INNER = HEADS * DIM_HEAD
SCALE = DIM_HEAD ** (-0.5)
LN_EPS = 1e-5
_SQRT2_INV = 1.0 / math.sqrt(2.0)


# ----------------------------- kernel ----------------------------------------
def _layernorm(x, gamma, beta):
    mu = jnp.mean(x, axis=-1, keepdims=True)
    var = jnp.mean((x - mu) ** 2, axis=-1, keepdims=True)
    return (x - mu) * jax.lax.rsqrt(var + LN_EPS) * gamma + beta


def transformer_kernel(x_ref,
                       ln1g_ref, ln1b_ref, wqkv_ref, wo_ref, bo_ref,
                       ln2g_ref, ln2b_ref, w1_ref, b1_ref, w2_ref, b2_ref,
                       o_ref):
    """Full DEPTH-layer transformer. x is resident as a (B*N, DIM) value."""
    x = x_ref[...]                                          # (B*N, DIM)

    for d in range(DEPTH):                                  # static unroll over depth
        # ---------- PreNorm + multi-head attention + residual ----------------
        wqkv = wqkv_ref[d]                                  # (DIM, 3*INNER)
        wo = wo_ref[d]                                      # (INNER, DIM)
        xn = _layernorm(x, ln1g_ref[d], ln1b_ref[d])        # (B*N, DIM)
        # packed q/k/v projection: one wide MXU push
        qkv = jnp.dot(xn, wqkv, preferred_element_type=jnp.float32)   # (B*N, 3*INNER)

        attn_out = jnp.zeros((B * N, DIM), jnp.float32)
        for h in range(HEADS):                              # static unroll over heads
            lo = h * DIM_HEAD
            qh = qkv[:, lo:lo + DIM_HEAD].reshape(B, N, DIM_HEAD)
            kh = qkv[:, INNER + lo:INNER + lo + DIM_HEAD].reshape(B, N, DIM_HEAD)
            vh = qkv[:, 2 * INNER + lo:2 * INNER + lo + DIM_HEAD].reshape(B, N, DIM_HEAD)

            dots = jnp.einsum("bnd,bmd->bnm", qh, kh,
                              preferred_element_type=jnp.float32) * SCALE   # (B, N, N)
            m = jnp.max(dots, axis=-1, keepdims=True)
            e = jnp.exp(dots - m)
            p = e * pl.reciprocal(jnp.sum(e, axis=-1, keepdims=True), approx=False)
            oh = jnp.einsum("bnm,bmd->bnd", p, vh,
                            preferred_element_type=jnp.float32)             # (B, N, Dh)
            oh = oh.reshape(B * N, DIM_HEAD)
            # accumulate the output projection per head (avoids the lane concat)
            attn_out = attn_out + jnp.dot(oh, wo[lo:lo + DIM_HEAD, :],
                                          preferred_element_type=jnp.float32)
        x = attn_out + bo_ref[d] + x                        # residual

        # ---------- PreNorm + feed-forward (exact GELU) + residual ------------
        xn = _layernorm(x, ln2g_ref[d], ln2b_ref[d])
        hdn = jnp.dot(xn, w1_ref[d], preferred_element_type=jnp.float32) + b1_ref[d]
        hdn = 0.5 * hdn * (1.0 + jax.lax.erf(hdn * _SQRT2_INV))
        x = jnp.dot(hdn, w2_ref[d], preferred_element_type=jnp.float32) + b2_ref[d] + x
        # dropout p=0.0 -> identity

    o_ref[...] = x


# ----------------------------- wrapper ----------------------------------------
@jax.jit
def transformer_forward(x, p):
    xf = x.reshape(B * N, DIM)
    out = pl.pallas_call(
        transformer_kernel,
        out_shape=jax.ShapeDtypeStruct((B * N, DIM), jnp.float32),
        # no grid: everything (x + all stacked weights, ~100 KB fp32) is one
        # VMEM-resident block, loaded once.
        compiler_params=pltpu.CompilerParams(vmem_limit_bytes=32 * 1024 * 1024),
    )(xf,
      p["ln1_g"], p["ln1_b"], p["wqkv"], p["wo"], p["bo"],
      p["ln2_g"], p["ln2_b"], p["w1"], p["b1"], p["w2"], p["b2"])
    return out.reshape(B, N, DIM)


# ----------------------------- parameter init ---------------------------------
def init_params(key):
    ks = jax.random.split(key, 6)

    def nrm(k, shape, scale=0.02):
        return scale * jax.random.normal(k, shape, jnp.float32)

    return {
        "ln1_g": jnp.ones((DEPTH, 1, DIM), jnp.float32),
        "ln1_b": jnp.zeros((DEPTH, 1, DIM), jnp.float32),
        # packed per-head q|k|v weights, [D, 3*H*Dh]
        "wqkv": nrm(ks[0], (DEPTH, DIM, 3 * INNER)),
        "wo": nrm(ks[1], (DEPTH, INNER, DIM)),
        "bo": nrm(ks[2], (DEPTH, 1, DIM), 0.01),
        "ln2_g": jnp.ones((DEPTH, 1, DIM), jnp.float32),
        "ln2_b": jnp.zeros((DEPTH, 1, DIM), jnp.float32),
        "w1": nrm(ks[3], (DEPTH, DIM, MLP_DIM)),
        "b1": nrm(ks[4], (DEPTH, 1, MLP_DIM), 0.01),
        "w2": nrm(ks[5], (DEPTH, MLP_DIM, DIM)),
        "b2": jnp.zeros((DEPTH, 1, DIM), jnp.float32),
    }


# ----------------------------- pure-JAX reference ------------------------------
def reference_forward(x, p):
    def ln(v, g, b):
        mu = jnp.mean(v, -1, keepdims=True)
        var = jnp.mean((v - mu) ** 2, -1, keepdims=True)
        return (v - mu) / jnp.sqrt(var + LN_EPS) * g + b

    for d in range(DEPTH):
        xn = ln(x, p["ln1_g"][d], p["ln1_b"][d])
        qkv = xn @ p["wqkv"][d]
        q = qkv[..., :INNER].reshape(B, N, HEADS, DIM_HEAD).transpose(0, 2, 1, 3)
        k = qkv[..., INNER:2 * INNER].reshape(B, N, HEADS, DIM_HEAD).transpose(0, 2, 1, 3)
        v = qkv[..., 2 * INNER:].reshape(B, N, HEADS, DIM_HEAD).transpose(0, 2, 1, 3)
        dots = jnp.einsum("bhnd,bhmd->bhnm", q, k) * SCALE
        attn = jax.nn.softmax(dots, axis=-1)
        out = jnp.einsum("bhnm,bhmd->bhnd", attn, v)
        out = out.transpose(0, 2, 1, 3).reshape(B, N, INNER)
        x = out @ p["wo"][d] + p["bo"][d] + x

        xn = ln(x, p["ln2_g"][d], p["ln2_b"][d])
        h = xn @ p["w1"][d] + p["b1"][d]
        h = 0.5 * h * (1.0 + jax.lax.erf(h * _SQRT2_INV))
        x = h @ p["w2"][d] + p["b2"][d] + x
    return x


# ----------------------------- main --------------------------------------------
if __name__ == "__main__":
    key = jax.random.PRNGKey(0)
    kx, kp = jax.random.split(key)
    x = jax.random.normal(kx, (B, N, DIM), jnp.float32)
    params = init_params(kp)

    out = jax.block_until_ready(transformer_forward(x, params))

    ref = reference_forward(x, params)
    np.testing.assert_allclose(np.asarray(out), np.asarray(ref), rtol=1e-4, atol=1e-4)

    print("KERNEL_OK")
</pallas_src>

<mosaic_0001>
module attributes {stable_mosaic.version = 11 : i64} {
  func.func @transformer_kernel(%arg0: memref<16x32xf32, #tpu.memory_space<vmem>>, %arg1: memref<2x1x32xf32, #tpu.memory_space<vmem>>, %arg2: memref<2x1x32xf32, #tpu.memory_space<vmem>>, %arg3: memref<2x32x192xf32, #tpu.memory_space<vmem>>, %arg4: memref<2x64x32xf32, #tpu.memory_space<vmem>>, %arg5: memref<2x1x32xf32, #tpu.memory_space<vmem>>, %arg6: memref<2x1x32xf32, #tpu.memory_space<vmem>>, %arg7: memref<2x1x32xf32, #tpu.memory_space<vmem>>, %arg8: memref<2x32x64xf32, #tpu.memory_space<vmem>>, %arg9: memref<2x1x64xf32, #tpu.memory_space<vmem>>, %arg10: memref<2x64x32xf32, #tpu.memory_space<vmem>>, %arg11: memref<2x1x32xf32, #tpu.memory_space<vmem>>, %arg12: memref<16x32xf32, #tpu.memory_space<vmem>>) attributes {dimension_semantics = [], scalar_prefetch = 0 : i64, scratch_operands = 0 : i64, tpu.core_type = #tpu.core_type<tc>} {
    %c0 = arith.constant 0 : index
    %c0_0 = arith.constant 0 : index
    %0 = vector.load %arg0[%c0, %c0_0] : memref<16x32xf32, #tpu.memory_space<vmem>>, vector<16x32xf32>
    %c0_1 = arith.constant 0 : index
    %c0_2 = arith.constant 0 : index
    %c0_3 = arith.constant 0 : index
    %1 = vector.load %arg3[%c0_1, %c0_2, %c0_3] : memref<2x32x192xf32, #tpu.memory_space<vmem>>, vector<1x32x192xf32>
    %2 = vector.shape_cast %1 : vector<1x32x192xf32> to vector<32x192xf32>
    %c0_4 = arith.constant 0 : index
    %c0_5 = arith.constant 0 : index
    %c0_6 = arith.constant 0 : index
    %3 = vector.load %arg4[%c0_4, %c0_5, %c0_6] : memref<2x64x32xf32, #tpu.memory_space<vmem>>, vector<1x64x32xf32>
    %4 = vector.shape_cast %3 : vector<1x64x32xf32> to vector<64x32xf32>
    %c0_7 = arith.constant 0 : index
    %c0_8 = arith.constant 0 : index
    %c0_9 = arith.constant 0 : index
    %5 = vector.load %arg1[%c0_7, %c0_8, %c0_9] : memref<2x1x32xf32, #tpu.memory_space<vmem>>, vector<1x1x32xf32>
    %6 = vector.shape_cast %5 : vector<1x1x32xf32> to vector<1x32xf32>
    %c0_10 = arith.constant 0 : index
    %c0_11 = arith.constant 0 : index
    %c0_12 = arith.constant 0 : index
    %7 = vector.load %arg2[%c0_10, %c0_11, %c0_12] : memref<2x1x32xf32, #tpu.memory_space<vmem>>, vector<1x1x32xf32>
    %8 = vector.shape_cast %7 : vector<1x1x32xf32> to vector<1x32xf32>
    %cst = arith.constant dense<0.000000e+00> : vector<16xf32>
    %9 = vector.multi_reduction <add>, %0, %cst [1] : vector<16x32xf32> to vector<16xf32>
    %10 = vector.shape_cast %9 : vector<16xf32> to vector<16x1xf32>
    %cst_13 = arith.constant 3.200000e+01 : f32
    %11 = vector.broadcast %cst_13 : f32 to vector<16x1xf32>
    %12 = arith.divf %10, %11 : vector<16x1xf32>
    %13 = vector.broadcast %12 : vector<16x1xf32> to vector<16x32xf32>
    %14 = arith.subf %0, %13 : vector<16x32xf32>
    %15 = arith.mulf %14, %14 : vector<16x32xf32>
    %cst_14 = arith.constant dense<0.000000e+00> : vector<16xf32>
    %16 = vector.multi_reduction <add>, %15, %cst_14 [1] : vector<16x32xf32> to vector<16xf32>
    %17 = vector.shape_cast %16 : vector<16xf32> to vector<16x1xf32>
    %cst_15 = arith.constant 3.200000e+01 : f32
    %18 = vector.broadcast %cst_15 : f32 to vector<16x1xf32>
    %19 = arith.divf %17, %18 : vector<16x1xf32>
    %20 = vector.broadcast %12 : vector<16x1xf32> to vector<16x32xf32>
    %21 = arith.subf %0, %20 : vector<16x32xf32>
    %cst_16 = arith.constant 9.99999974E-6 : f32
    %22 = vector.broadcast %cst_16 : f32 to vector<16x1xf32>
    %23 = arith.addf %19, %22 : vector<16x1xf32>
    %24 = math.rsqrt %23 : vector<16x1xf32>
    %25 = vector.broadcast %24 : vector<16x1xf32> to vector<16x32xf32>
    %26 = arith.mulf %21, %25 : vector<16x32xf32>
    %27 = vector.broadcast %6 : vector<1x32xf32> to vector<16x32xf32>
    %28 = arith.mulf %26, %27 : vector<16x32xf32>
    %29 = vector.broadcast %8 : vector<1x32xf32> to vector<16x32xf32>
    %30 = arith.addf %28, %29 : vector<16x32xf32>
    %cst_17 = arith.constant dense<0.000000e+00> : vector<16x192xf32>
    %31 = tpu.matmul %30, %2, %cst_17 {dimension_numbers = #tpu.dot_dimension_numbers<[1], [0], [0], [1], [0, 0, 1, 1], [], []>} : vector<16x32xf32>, vector<32x192xf32>, vector<16x192xf32> -> vector<16x192xf32>
    %cst_18 = arith.constant 0.000000e+00 : f32
    %32 = vector.broadcast %cst_18 : f32 to vector<16x32xf32>
    %33 = vector.extract_strided_slice %31 {offsets = [0, 0], sizes = [16, 16], strides = [1, 1]} : vector<16x192xf32> to vector<16x16xf32>
    %34 = vector.shape_cast %33 : vector<16x16xf32> to vector<2x8x16xf32>
    %35 = vector.extract_strided_slice %31 {offsets = [0, 64], sizes = [16, 16], strides = [1, 1]} : vector<16x192xf32> to vector<16x16xf32>
    %36 = vector.shape_cast %35 : vector<16x16xf32> to vector<2x8x16xf32>
    %37 = vector.extract_strided_slice %31 {offsets = [0, 128], sizes = [16, 16], strides = [1, 1]} : vector<16x192xf32> to vector<16x16xf32>
    %38 = vector.shape_cast %37 : vector<16x16xf32> to vector<2x8x16xf32>
    "tpu.trace_start"() <{level = 10 : i32, message = "bnd,bmd->bnm"}> : () -> ()
    %cst_19 = arith.constant dense<0.000000e+00> : vector<2x8x8xf32>
    %39 = tpu.matmul %34, %36, %cst_19 {dimension_numbers = #tpu.dot_dimension_numbers<[2], [2], [1], [1], [0, 0, 0, 1, 1, 1], [0], [0]>} : vector<2x8x16xf32>, vector<2x8x16xf32>, vector<2x8x8xf32> -> vector<2x8x8xf32>
    "tpu.trace_stop"() : () -> ()
    %cst_20 = arith.constant 2.500000e-01 : f32
    %40 = vector.broadcast %cst_20 : f32 to vector<2x8x8xf32>
    %41 = arith.mulf %39, %40 : vector<2x8x8xf32>
    %cst_21 = arith.constant dense<0xFF800000> : vector<2x8xf32>
    %42 = vector.multi_reduction <maximumf>, %41, %cst_21 [2] : vector<2x8x8xf32> to vector<2x8xf32>
    %43 = vector.shape_cast %42 : vector<2x8xf32> to vector<2x8x1xf32>
    %44 = vector.broadcast %43 : vector<2x8x1xf32> to vector<2x8x8xf32>
    %45 = arith.subf %41, %44 : vector<2x8x8xf32>
    %46 = math.exp %45 : vector<2x8x8xf32>
    %cst_22 = arith.constant dense<0.000000e+00> : vector<2x8xf32>
    %47 = vector.multi_reduction <add>, %46, %cst_22 [2] : vector<2x8x8xf32> to vector<2x8xf32>
    %48 = vector.shape_cast %47 : vector<2x8xf32> to vector<2x8x1xf32>
    %49 = tpu.reciprocal %48 : vector<2x8x1xf32> -> vector<2x8x1xf32>
    %50 = vector.broadcast %49 : vector<2x8x1xf32> to vector<2x8x8xf32>
    %51 = arith.mulf %46, %50 : vector<2x8x8xf32>
    "tpu.trace_start"() <{level = 10 : i32, message = "bnm,bmd->bnd"}> : () -> ()
    %cst_23 = arith.constant dense<0.000000e+00> : vector<2x8x16xf32>
    %52 = tpu.matmul %51, %38, %cst_23 {dimension_numbers = #tpu.dot_dimension_numbers<[2], [1], [1], [2], [0, 0, 0, 1, 1, 2], [0], [0]>} : vector<2x8x8xf32>, vector<2x8x16xf32>, vector<2x8x16xf32> -> vector<2x8x16xf32>
    "tpu.trace_stop"() : () -> ()
    %53 = vector.shape_cast %52 : vector<2x8x16xf32> to vector<16x16xf32>
    %54 = vector.extract_strided_slice %4 {offsets = [0, 0], sizes = [16, 32], strides = [1, 1]} : vector<64x32xf32> to vector<16x32xf32>
    %cst_24 = arith.constant dense<0.000000e+00> : vector<16x32xf32>
    %55 = tpu.matmul %53, %54, %cst_24 {dimension_numbers = #tpu.dot_dimension_numbers<[1], [0], [0], [1], [0, 0, 1, 1], [], []>} : vector<16x16xf32>, vector<16x32xf32>, vector<16x32xf32> -> vector<16x32xf32>
    %56 = arith.addf %32, %55 : vector<16x32xf32>
    %57 = vector.extract_strided_slice %31 {offsets = [0, 16], sizes = [16, 16], strides = [1, 1]} : vector<16x192xf32> to vector<16x16xf32>
    %58 = vector.shape_cast %57 : vector<16x16xf32> to vector<2x8x16xf32>
    %59 = vector.extract_strided_slice %31 {offsets = [0, 80], sizes = [16, 16], strides = [1, 1]} : vector<16x192xf32> to vector<16x16xf32>
    %60 = vector.shape_cast %59 : vector<16x16xf32> to vector<2x8x16xf32>
    %61 = vector.extract_strided_slice %31 {offsets = [0, 144], sizes = [16, 16], strides = [1, 1]} : vector<16x192xf32> to vector<16x16xf32>
    %62 = vector.shape_cast %61 : vector<16x16xf32> to vector<2x8x16xf32>
    "tpu.trace_start"() <{level = 10 : i32, message = "bnd,bmd->bnm"}> : () -> ()
    %cst_25 = arith.constant dense<0.000000e+00> : vector<2x8x8xf32>
    %63 = tpu.matmul %58, %60, %cst_25 {dimension_numbers = #tpu.dot_dimension_numbers<[2], [2], [1], [1], [0, 0, 0, 1, 1, 1], [0], [0]>} : vector<2x8x16xf32>, vector<2x8x16xf32>, vector<2x8x8xf32> -> vector<2x8x8xf32>
    "tpu.trace_stop"() : () -> ()
    %cst_26 = arith.constant 2.500000e-01 : f32
    %64 = vector.broadcast %cst_26 : f32 to vector<2x8x8xf32>
    %65 = arith.mulf %63, %64 : vector<2x8x8xf32>
    %cst_27 = arith.constant dense<0xFF800000> : vector<2x8xf32>
    %66 = vector.multi_reduction <maximumf>, %65, %cst_27 [2] : vector<2x8x8xf32> to vector<2x8xf32>
    %67 = vector.shape_cast %66 : vector<2x8xf32> to vector<2x8x1xf32>
    %68 = vector.broadcast %67 : vector<2x8x1xf32> to vector<2x8x8xf32>
    %69 = arith.subf %65, %68 : vector<2x8x8xf32>
    %70 = math.exp %69 : vector<2x8x8xf32>
    %cst_28 = arith.constant dense<0.000000e+00> : vector<2x8xf32>
    %71 = vector.multi_reduction <add>, %70, %cst_28 [2] : vector<2x8x8xf32> to vector<2x8xf32>
    %72 = vector.shape_cast %71 : vector<2x8xf32> to vector<2x8x1xf32>
    %73 = tpu.reciprocal %72 : vector<2x8x1xf32> -> vector<2x8x1xf32>
    %74 = vector.broadcast %73 : vector<2x8x1xf32> to vector<2x8x8xf32>
    %75 = arith.mulf %70, %74 : vector<2x8x8xf32>
    "tpu.trace_start"() <{level = 10 : i32, message = "bnm,bmd->bnd"}> : () -> ()
    %cst_29 = arith.constant dense<0.000000e+00> : vector<2x8x16xf32>
    %76 = tpu.matmul %75, %62, %cst_29 {dimension_numbers = #tpu.dot_dimension_numbers<[2], [1], [1], [2], [0, 0, 0, 1, 1, 2], [0], [0]>} : vector<2x8x8xf32>, vector<2x8x16xf32>, vector<2x8x16xf32> -> vector<2x8x16xf32>
    "tpu.trace_stop"() : () -> ()
    %77 = vector.shape_cast %76 : vector<2x8x16xf32> to vector<16x16xf32>
    %78 = vector.extract_strided_slice %4 {offsets = [16, 0], sizes = [16, 32], strides = [1, 1]} : vector<64x32xf32> to vector<16x32xf32>
    %cst_30 = arith.constant dense<0.000000e+00> : vector<16x32xf32>
    %79 = tpu.matmul %77, %78, %cst_30 {dimension_numbers = #tpu.dot_dimension_numbers<[1], [0], [0], [1], [0, 0, 1, 1], [], []>} : vector<16x16xf32>, vector<16x32xf32>, vector<16x32xf32> -> vector<16x32xf32>
    %80 = arith.addf %56, %79 : vector<16x32xf32>
    %81 = vector.extract_strided_slice %31 {offsets = [0, 32], sizes = [16, 16], strides = [1, 1]} : vector<16x192xf32> to vector<16x16xf32>
    %82 = vector.shape_cast %81 : vector<16x16xf32> to vector<2x8x16xf32>
    %83 = vector.extract_strided_slice %31 {offsets = [0, 96], sizes = [16, 16], strides = [1, 1]} : vector<16x192xf32> to vector<16x16xf32>
    %84 = vector.shape_cast %83 : vector<16x16xf32> to vector<2x8x16xf32>
    %85 = vector.extract_strided_slice %31 {offsets = [0, 160], sizes = [16, 16], strides = [1, 1]} : vector<16x192xf32> to vector<16x16xf32>
    %86 = vector.shape_cast %85 : vector<16x16xf32> to vector<2x8x16xf32>
    "tpu.trace_start"() <{level = 10 : i32, message = "bnd,bmd->bnm"}> : () -> ()
    %cst_31 = arith.constant dense<0.000000e+00> : vector<2x8x8xf32>
    %87 = tpu.matmul %82, %84, %cst_31 {dimension_numbers = #tpu.dot_dimension_numbers<[2], [2], [1], [1], [0, 0, 0, 1, 1, 1], [0], [0]>} : vector<2x8x16xf32>, vector<2x8x16xf32>, vector<2x8x8xf32> -> vector<2x8x8xf32>
    "tpu.trace_stop"() : () -> ()
    %cst_32 = arith.constant 2.500000e-01 : f32
    %88 = vector.broadcast %cst_32 : f32 to vector<2x8x8xf32>
    %89 = arith.mulf %87, %88 : vector<2x8x8xf32>
    %cst_33 = arith.constant dense<0xFF800000> : vector<2x8xf32>
    %90 = vector.multi_reduction <maximumf>, %89, %cst_33 [2] : vector<2x8x8xf32> to vector<2x8xf32>
    %91 = vector.shape_cast %90 : vector<2x8xf32> to vector<2x8x1xf32>
    %92 = vector.broadcast %91 : vector<2x8x1xf32> to vector<2x8x8xf32>
    %93 = arith.subf %89, %92 : vector<2x8x8xf32>
    %94 = math.exp %93 : vector<2x8x8xf32>
    %cst_34 = arith.constant dense<0.000000e+00> : vector<2x8xf32>
    %95 = vector.multi_reduction <add>, %94, %cst_34 [2] : vector<2x8x8xf32> to vector<2x8xf32>
    %96 = vector.shape_cast %95 : vector<2x8xf32> to vector<2x8x1xf32>
    %97 = tpu.reciprocal %96 : vector<2x8x1xf32> -> vector<2x8x1xf32>
    %98 = vector.broadcast %97 : vector<2x8x1xf32> to vector<2x8x8xf32>
    %99 = arith.mulf %94, %98 : vector<2x8x8xf32>
    "tpu.trace_start"() <{level = 10 : i32, message = "bnm,bmd->bnd"}> : () -> ()
    %cst_35 = arith.constant dense<0.000000e+00> : vector<2x8x16xf32>
    %100 = tpu.matmul %99, %86, %cst_35 {dimension_numbers = #tpu.dot_dimension_numbers<[2], [1], [1], [2], [0, 0, 0, 1, 1, 2], [0], [0]>} : vector<2x8x8xf32>, vector<2x8x16xf32>, vector<2x8x16xf32> -> vector<2x8x16xf32>
    "tpu.trace_stop"() : () -> ()
    %101 = vector.shape_cast %100 : vector<2x8x16xf32> to vector<16x16xf32>
    %102 = vector.extract_strided_slice %4 {offsets = [32, 0], sizes = [16, 32], strides = [1, 1]} : vector<64x32xf32> to vector<16x32xf32>
    %cst_36 = arith.constant dense<0.000000e+00> : vector<16x32xf32>
    %103 = tpu.matmul %101, %102, %cst_36 {dimension_numbers = #tpu.dot_dimension_numbers<[1], [0], [0], [1], [0, 0, 1, 1], [], []>} : vector<16x16xf32>, vector<16x32xf32>, vector<16x32xf32> -> vector<16x32xf32>
    %104 = arith.addf %80, %103 : vector<16x32xf32>
    %105 = vector.extract_strided_slice %31 {offsets = [0, 48], sizes = [16, 16], strides = [1, 1]} : vector<16x192xf32> to vector<16x16xf32>
    %106 = vector.shape_cast %105 : vector<16x16xf32> to vector<2x8x16xf32>
    %107 = vector.extract_strided_slice %31 {offsets = [0, 112], sizes = [16, 16], strides = [1, 1]} : vector<16x192xf32> to vector<16x16xf32>
    %108 = vector.shape_cast %107 : vector<16x16xf32> to vector<2x8x16xf32>
    %109 = vector.extract_strided_slice %31 {offsets = [0, 176], sizes = [16, 16], strides = [1, 1]} : vector<16x192xf32> to vector<16x16xf32>
    %110 = vector.shape_cast %109 : vector<16x16xf32> to vector<2x8x16xf32>
    "tpu.trace_start"() <{level = 10 : i32, message = "bnd,bmd->bnm"}> : () -> ()
    %cst_37 = arith.constant dense<0.000000e+00> : vector<2x8x8xf32>
    %111 = tpu.matmul %106, %108, %cst_37 {dimension_numbers = #tpu.dot_dimension_numbers<[2], [2], [1], [1], [0, 0, 0, 1, 1, 1], [0], [0]>} : vector<2x8x16xf32>, vector<2x8x16xf32>, vector<2x8x8xf32> -> vector<2x8x8xf32>
    "tpu.trace_stop"() : () -> ()
    %cst_38 = arith.constant 2.500000e-01 : f32
    %112 = vector.broadcast %cst_38 : f32 to vector<2x8x8xf32>
    %113 = arith.mulf %111, %112 : vector<2x8x8xf32>
    %cst_39 = arith.constant dense<0xFF800000> : vector<2x8xf32>
    %114 = vector.multi_reduction <maximumf>, %113, %cst_39 [2] : vector<2x8x8xf32> to vector<2x8xf32>
    %115 = vector.shape_cast %114 : vector<2x8xf32> to vector<2x8x1xf32>
    %116 = vector.broadcast %115 : vector<2x8x1xf32> to vector<2x8x8xf32>
    %117 = arith.subf %113, %116 : vector<2x8x8xf32>
    %118 = math.exp %117 : vector<2x8x8xf32>
    %cst_40 = arith.constant dense<0.000000e+00> : vector<2x8xf32>
    %119 = vector.multi_reduction <add>, %118, %cst_40 [2] : vector<2x8x8xf32> to vector<2x8xf32>
    %120 = vector.shape_cast %119 : vector<2x8xf32> to vector<2x8x1xf32>
    %121 = tpu.reciprocal %120 : vector<2x8x1xf32> -> vector<2x8x1xf32>
    %122 = vector.broadcast %121 : vector<2x8x1xf32> to vector<2x8x8xf32>
    %123 = arith.mulf %118, %122 : vector<2x8x8xf32>
    "tpu.trace_start"() <{level = 10 : i32, message = "bnm,bmd->bnd"}> : () -> ()
    %cst_41 = arith.constant dense<0.000000e+00> : vector<2x8x16xf32>
    %124 = tpu.matmul %123, %110, %cst_41 {dimension_numbers = #tpu.dot_dimension_numbers<[2], [1], [1], [2], [0, 0, 0, 1, 1, 2], [0], [0]>} : vector<2x8x8xf32>, vector<2x8x16xf32>, vector<2x8x16xf32> -> vector<2x8x16xf32>
    "tpu.trace_stop"() : () -> ()
    %125 = vector.shape_cast %124 : vector<2x8x16xf32> to vector<16x16xf32>
    %126 = vector.extract_strided_slice %4 {offsets = [48, 0], sizes = [16, 32], strides = [1, 1]} : vector<64x32xf32> to vector<16x32xf32>
    %cst_42 = arith.constant dense<0.000000e+00> : vector<16x32xf32>
    %127 = tpu.matmul %125, %126, %cst_42 {dimension_numbers = #tpu.dot_dimension_numbers<[1], [0], [0], [1], [0, 0, 1, 1], [], []>} : vector<16x16xf32>, vector<16x32xf32>, vector<16x32xf32> -> vector<16x32xf32>
    %128 = arith.addf %104, %127 : vector<16x32xf32>
    %c0_43 = arith.constant 0 : index
    %c0_44 = arith.constant 0 : index
    %c0_45 = arith.constant 0 : index
    %129 = vector.load %arg5[%c0_43, %c0_44, %c0_45] : memref<2x1x32xf32, #tpu.memory_space<vmem>>, vector<1x1x32xf32>
    %130 = vector.shape_cast %129 : vector<1x1x32xf32> to vector<1x32xf32>
    %131 = vector.broadcast %130 : vector<1x32xf32> to vector<16x32xf32>
    %132 = arith.addf %128, %131 : vector<16x32xf32>
    %133 = arith.addf %132, %0 : vector<16x32xf32>
    %c0_46 = arith.constant 0 : index
    %c0_47 = arith.constant 0 : index
    %c0_48 = arith.constant 0 : index
    %134 = vector.load %arg6[%c0_46, %c0_47, %c0_48] : memref<2x1x32xf32, #tpu.memory_space<vmem>>, vector<1x1x32xf32>
    %135 = vector.shape_cast %134 : vector<1x1x32xf32> to vector<1x32xf32>
    %c0_49 = arith.constant 0 : index
    %c0_50 = arith.constant 0 : index
    %c0_51 = arith.constant 0 : index
    %136 = vector.load %arg7[%c0_49, %c0_50, %c0_51] : memref<2x1x32xf32, #tpu.memory_space<vmem>>, vector<1x1x32xf32>
    %137 = vector.shape_cast %136 : vector<1x1x32xf32> to vector<1x32xf32>
    %cst_52 = arith.constant dense<0.000000e+00> : vector<16xf32>
    %138 = vector.multi_reduction <add>, %133, %cst_52 [1] : vector<16x32xf32> to vector<16xf32>
    %139 = vector.shape_cast %138 : vector<16xf32> to vector<16x1xf32>
    %cst_53 = arith.constant 3.200000e+01 : f32
    %140 = vector.broadcast %cst_53 : f32 to vector<16x1xf32>
    %141 = arith.divf %139, %140 : vector<16x1xf32>
    %142 = vector.broadcast %141 : vector<16x1xf32> to vector<16x32xf32>
    %143 = arith.subf %133, %142 : vector<16x32xf32>
    %144 = arith.mulf %143, %143 : vector<16x32xf32>
    %cst_54 = arith.constant dense<0.000000e+00> : vector<16xf32>
    %145 = vector.multi_reduction <add>, %144, %cst_54 [1] : vector<16x32xf32> to vector<16xf32>
    %146 = vector.shape_cast %145 : vector<16xf32> to vector<16x1xf32>
    %cst_55 = arith.constant 3.200000e+01 : f32
    %147 = vector.broadcast %cst_55 : f32 to vector<16x1xf32>
    %148 = arith.divf %146, %147 : vector<16x1xf32>
    %149 = vector.broadcast %141 : vector<16x1xf32> to vector<16x32xf32>
    %150 = arith.subf %133, %149 : vector<16x32xf32>
    %cst_56 = arith.constant 9.99999974E-6 : f32
    %151 = vector.broadcast %cst_56 : f32 to vector<16x1xf32>
    %152 = arith.addf %148, %151 : vector<16x1xf32>
    %153 = math.rsqrt %152 : vector<16x1xf32>
    %154 = vector.broadcast %153 : vector<16x1xf32> to vector<16x32xf32>
    %155 = arith.mulf %150, %154 : vector<16x32xf32>
    %156 = vector.broadcast %135 : vector<1x32xf32> to vector<16x32xf32>
    %157 = arith.mulf %155, %156 : vector<16x32xf32>
    %158 = vector.broadcast %137 : vector<1x32xf32> to vector<16x32xf32>
    %159 = arith.addf %157, %158 : vector<16x32xf32>
    %c0_57 = arith.constant 0 : index
    %c0_58 = arith.constant 0 : index
    %c0_59 = arith.constant 0 : index
    %160 = vector.load %arg8[%c0_57, %c0_58, %c0_59] : memref<2x32x64xf32, #tpu.memory_space<vmem>>, vector<1x32x64xf32>
    %161 = vector.shape_cast %160 : vector<1x32x64xf32> to vector<32x64xf32>
    %cst_60 = arith.constant dense<0.000000e+00> : vector<16x64xf32>
    %162 = tpu.matmul %159, %161, %cst_60 {dimension_numbers = #tpu.dot_dimension_numbers<[1], [0], [0], [1], [0, 0, 1, 1], [], []>} : vector<16x32xf32>, vector<32x64xf32>, vector<16x64xf32> -> vector<16x64xf32>
    %c0_61 = arith.constant 0 : index
    %c0_62 = arith.constant 0 : index
    %c0_63 = arith.constant 0 : index
    %163 = vector.load %arg9[%c0_61, %c0_62, %c0_63] : memref<2x1x64xf32, #tpu.memory_space<vmem>>, vector<1x1x64xf32>
    %164 = vector.shape_cast %163 : vector<1x1x64xf32> to vector<1x64xf32>
    %165 = vector.broadcast %164 : vector<1x64xf32> to vector<16x64xf32>
    %166 = arith.addf %162, %165 : vector<16x64xf32>
    %cst_64 = arith.constant 5.000000e-01 : f32
    %167 = vector.broadcast %cst_64 : f32 to vector<16x64xf32>
    %168 = arith.mulf %167, %166 : vector<16x64xf32>
    %cst_65 = arith.constant 0.707106769 : f32
    %169 = vector.broadcast %cst_65 : f32 to vector<16x64xf32>
    %170 = arith.mulf %166, %169 : vector<16x64xf32>
    %171 = math.erf %170 : vector<16x64xf32>
    %cst_66 = arith.constant 1.000000e+00 : f32
    %172 = vector.broadcast %cst_66 : f32 to vector<16x64xf32>
    %173 = arith.addf %172, %171 : vector<16x64xf32>
    %174 = arith.mulf %168, %173 : vector<16x64xf32>
    %c0_67 = arith.constant 0 : index
    %c0_68 = arith.constant 0 : index
    %c0_69 = arith.constant 0 : index
    %175 = vector.load %arg10[%c0_67, %c0_68, %c0_69] : memref<2x64x32xf32, #tpu.memory_space<vmem>>, vector<1x64x32xf32>
    %176 = vector.shape_cast %175 : vector<1x64x32xf32> to vector<64x32xf32>
    %cst_70 = arith.constant dense<0.000000e+00> : vector<16x32xf32>
    %177 = tpu.matmul %174, %176, %cst_70 {dimension_numbers = #tpu.dot_dimension_numbers<[1], [0], [0], [1], [0, 0, 1, 1], [], []>} : vector<16x64xf32>, vector<64x32xf32>, vector<16x32xf32> -> vector<16x32xf32>
    %c0_71 = arith.constant 0 : index
    %c0_72 = arith.constant 0 : index
    %c0_73 = arith.constant 0 : index
    %178 = vector.load %arg11[%c0_71, %c0_72, %c0_73] : memref<2x1x32xf32, #tpu.memory_space<vmem>>, vector<1x1x32xf32>
    %179 = vector.shape_cast %178 : vector<1x1x32xf32> to vector<1x32xf32>
    %180 = vector.broadcast %179 : vector<1x32xf32> to vector<16x32xf32>
    %181 = arith.addf %177, %180 : vector<16x32xf32>
    %182 = arith.addf %181, %133 : vector<16x32xf32>
    %c1 = arith.constant 1 : index
    %c0_74 = arith.constant 0 : index
    %c0_75 = arith.constant 0 : index
    %183 = vector.load %arg3[%c1, %c0_74, %c0_75] : memref<2x32x192xf32, #tpu.memory_space<vmem>>, vector<1x32x192xf32>
    %184 = vector.shape_cast %183 : vector<1x32x192xf32> to vector<32x192xf32>
    %c1_76 = arith.constant 1 : index
    %c0_77 = arith.constant 0 : index
    %c0_78 = arith.constant 0 : index
    %185 = vector.load %arg4[%c1_76, %c0_77, %c0_78] : memref<2x64x32xf32, #tpu.memory_space<vmem>>, vector<1x64x32xf32>
    %186 = vector.shape_cast %185 : vector<1x64x32xf32> to vector<64x32xf32>
    %c1_79 = arith.constant 1 : index
    %c0_80 = arith.constant 0 : index
    %c0_81 = arith.constant 0 : index
    %187 = vector.load %arg1[%c1_79, %c0_80, %c0_81] : memref<2x1x32xf32, #tpu.memory_space<vmem>>, vector<1x1x32xf32>
    %188 = vector.shape_cast %187 : vector<1x1x32xf32> to vector<1x32xf32>
    %c1_82 = arith.constant 1 : index
    %c0_83 = arith.constant 0 : index
    %c0_84 = arith.constant 0 : index
    %189 = vector.load %arg2[%c1_82, %c0_83, %c0_84] : memref<2x1x32xf32, #tpu.memory_space<vmem>>, vector<1x1x32xf32>
    %190 = vector.shape_cast %189 : vector<1x1x32xf32> to vector<1x32xf32>
    %cst_85 = arith.constant dense<0.000000e+00> : vector<16xf32>
    %191 = vector.multi_reduction <add>, %182, %cst_85 [1] : vector<16x32xf32> to vector<16xf32>
    %192 = vector.shape_cast %191 : vector<16xf32> to vector<16x1xf32>
    %cst_86 = arith.constant 3.200000e+01 : f32
    %193 = vector.broadcast %cst_86 : f32 to vector<16x1xf32>
    %194 = arith.divf %192, %193 : vector<16x1xf32>
    %195 = vector.broadcast %194 : vector<16x1xf32> to vector<16x32xf32>
    %196 = arith.subf %182, %195 : vector<16x32xf32>
    %197 = arith.mulf %196, %196 : vector<16x32xf32>
    %cst_87 = arith.constant dense<0.000000e+00> : vector<16xf32>
    %198 = vector.multi_reduction <add>, %197, %cst_87 [1] : vector<16x32xf32> to vector<16xf32>
    %199 = vector.shape_cast %198 : vector<16xf32> to vector<16x1xf32>
    %cst_88 = arith.constant 3.200000e+01 : f32
    %200 = vector.broadcast %cst_88 : f32 to vector<16x1xf32>
    %201 = arith.divf %199, %200 : vector<16x1xf32>
    %202 = vector.broadcast %194 : vector<16x1xf32> to vector<16x32xf32>
    %203 = arith.subf %182, %202 : vector<16x32xf32>
    %cst_89 = arith.constant 9.99999974E-6 : f32
    %204 = vector.broadcast %cst_89 : f32 to vector<16x1xf32>
    %205 = arith.addf %201, %204 : vector<16x1xf32>
    %206 = math.rsqrt %205 : vector<16x1xf32>
    %207 = vector.broadcast %206 : vector<16x1xf32> to vector<16x32xf32>
    %208 = arith.mulf %203, %207 : vector<16x32xf32>
    %209 = vector.broadcast %188 : vector<1x32xf32> to vector<16x32xf32>
    %210 = arith.mulf %208, %209 : vector<16x32xf32>
    %211 = vector.broadcast %190 : vector<1x32xf32> to vector<16x32xf32>
    %212 = arith.addf %210, %211 : vector<16x32xf32>
    %cst_90 = arith.constant dense<0.000000e+00> : vector<16x192xf32>
    %213 = tpu.matmul %212, %184, %cst_90 {dimension_numbers = #tpu.dot_dimension_numbers<[1], [0], [0], [1], [0, 0, 1, 1], [], []>} : vector<16x32xf32>, vector<32x192xf32>, vector<16x192xf32> -> vector<16x192xf32>
    %cst_91 = arith.constant 0.000000e+00 : f32
    %214 = vector.broadcast %cst_91 : f32 to vector<16x32xf32>
    %215 = vector.extract_strided_slice %213 {offsets = [0, 0], sizes = [16, 16], strides = [1, 1]} : vector<16x192xf32> to vector<16x16xf32>
    %216 = vector.shape_cast %215 : vector<16x16xf32> to vector<2x8x16xf32>
    %217 = vector.extract_strided_slice %213 {offsets = [0, 64], sizes = [16, 16], strides = [1, 1]} : vector<16x192xf32> to vector<16x16xf32>
    %218 = vector.shape_cast %217 : vector<16x16xf32> to vector<2x8x16xf32>
    %219 = vector.extract_strided_slice %213 {offsets = [0, 128], sizes = [16, 16], strides = [1, 1]} : vector<16x192xf32> to vector<16x16xf32>
    %220 = vector.shape_cast %219 : vector<16x16xf32> to vector<2x8x16xf32>
    "tpu.trace_start"() <{level = 10 : i32, message = "bnd,bmd->bnm"}> : () -> ()
    %cst_92 = arith.constant dense<0.000000e+00> : vector<2x8x8xf32>
    %221 = tpu.matmul %216, %218, %cst_92 {dimension_numbers = #tpu.dot_dimension_numbers<[2], [2], [1], [1], [0, 0, 0, 1, 1, 1], [0], [0]>} : vector<2x8x16xf32>, vector<2x8x16xf32>, vector<2x8x8xf32> -> vector<2x8x8xf32>
    "tpu.trace_stop"() : () -> ()
    %cst_93 = arith.constant 2.500000e-01 : f32
    %222 = vector.broadcast %cst_93 : f32 to vector<2x8x8xf32>
    %223 = arith.mulf %221, %222 : vector<2x8x8xf32>
    %cst_94 = arith.constant dense<0xFF800000> : vector<2x8xf32>
    %224 = vector.multi_reduction <maximumf>, %223, %cst_94 [2] : vector<2x8x8xf32> to vector<2x8xf32>
    %225 = vector.shape_cast %224 : vector<2x8xf32> to vector<2x8x1xf32>
    %226 = vector.broadcast %225 : vector<2x8x1xf32> to vector<2x8x8xf32>
    %227 = arith.subf %223, %226 : vector<2x8x8xf32>
    %228 = math.exp %227 : vector<2x8x8xf32>
    %cst_95 = arith.constant dense<0.000000e+00> : vector<2x8xf32>
    %229 = vector.multi_reduction <add>, %228, %cst_95 [2] : vector<2x8x8xf32> to vector<2x8xf32>
    %230 = vector.shape_cast %229 : vector<2x8xf32> to vector<2x8x1xf32>
    %231 = tpu.reciprocal %230 : vector<2x8x1xf32> -> vector<2x8x1xf32>
    %232 = vector.broadcast %231 : vector<2x8x1xf32> to vector<2x8x8xf32>
    %233 = arith.mulf %228, %232 : vector<2x8x8xf32>
    "tpu.trace_start"() <{level = 10 : i32, message = "bnm,bmd->bnd"}> : () -> ()
    %cst_96 = arith.constant dense<0.000000e+00> : vector<2x8x16xf32>
    %234 = tpu.matmul %233, %220, %cst_96 {dimension_numbers = #tpu.dot_dimension_numbers<[2], [1], [1], [2], [0, 0, 0, 1, 1, 2], [0], [0]>} : vector<2x8x8xf32>, vector<2x8x16xf32>, vector<2x8x16xf32> -> vector<2x8x16xf32>
    "tpu.trace_stop"() : () -> ()
    %235 = vector.shape_cast %234 : vector<2x8x16xf32> to vector<16x16xf32>
    %236 = vector.extract_strided_slice %186 {offsets = [0, 0], sizes = [16, 32], strides = [1, 1]} : vector<64x32xf32> to vector<16x32xf32>
    %cst_97 = arith.constant dense<0.000000e+00> : vector<16x32xf32>
    %237 = tpu.matmul %235, %236, %cst_97 {dimension_numbers = #tpu.dot_dimension_numbers<[1], [0], [0], [1], [0, 0, 1, 1], [], []>} : vector<16x16xf32>, vector<16x32xf32>, vector<16x32xf32> -> vector<16x32xf32>
    %238 = arith.addf %214, %237 : vector<16x32xf32>
    %239 = vector.extract_strided_slice %213 {offsets = [0, 16], sizes = [16, 16], strides = [1, 1]} : vector<16x192xf32> to vector<16x16xf32>
    %240 = vector.shape_cast %239 : vector<16x16xf32> to vector<2x8x16xf32>
    %241 = vector.extract_strided_slice %213 {offsets = [0, 80], sizes = [16, 16], strides = [1, 1]} : vector<16x192xf32> to vector<16x16xf32>
    %242 = vector.shape_cast %241 : vector<16x16xf32> to vector<2x8x16xf32>
    %243 = vector.extract_strided_slice %213 {offsets = [0, 144], sizes = [16, 16], strides = [1, 1]} : vector<16x192xf32> to vector<16x16xf32>
    %244 = vector.shape_cast %243 : vector<16x16xf32> to vector<2x8x16xf32>
    "tpu.trace_start"() <{level = 10 : i32, message = "bnd,bmd->bnm"}> : () -> ()
    %cst_98 = arith.constant dense<0.000000e+00> : vector<2x8x8xf32>
    %245 = tpu.matmul %240, %242, %cst_98 {dimension_numbers = #tpu.dot_dimension_numbers<[2], [2], [1], [1], [0, 0, 0, 1, 1, 1], [0], [0]>} : vector<2x8x16xf32>, vector<2x8x16xf32>, vector<2x8x8xf32> -> vector<2x8x8xf32>
    "tpu.trace_stop"() : () -> ()
    %cst_99 = arith.constant 2.500000e-01 : f32
    %246 = vector.broadcast %cst_99 : f32 to vector<2x8x8xf32>
    %247 = arith.mulf %245, %246 : vector<2x8x8xf32>
    %cst_100 = arith.constant dense<0xFF800000> : vector<2x8xf32>
    %248 = vector.multi_reduction <maximumf>, %247, %cst_100 [2] : vector<2x8x8xf32> to vector<2x8xf32>
    %249 = vector.shape_cast %248 : vector<2x8xf32> to vector<2x8x1xf32>
    %250 = vector.broadcast %249 : vector<2x8x1xf32> to vector<2x8x8xf32>
    %251 = arith.subf %247, %250 : vector<2x8x8xf32>
    %252 = math.exp %251 : vector<2x8x8xf32>
    %cst_101 = arith.constant dense<0.000000e+00> : vector<2x8xf32>
    %253 = vector.multi_reduction <add>, %252, %cst_101 [2] : vector<2x8x8xf32> to vector<2x8xf32>
    %254 = vector.shape_cast %253 : vector<2x8xf32> to vector<2x8x1xf32>
    %255 = tpu.reciprocal %254 : vector<2x8x1xf32> -> vector<2x8x1xf32>
    %256 = vector.broadcast %255 : vector<2x8x1xf32> to vector<2x8x8xf32>
    %257 = arith.mulf %252, %256 : vector<2x8x8xf32>
    "tpu.trace_start"() <{level = 10 : i32, message = "bnm,bmd->bnd"}> : () -> ()
    %cst_102 = arith.constant dense<0.000000e+00> : vector<2x8x16xf32>
    %258 = tpu.matmul %257, %244, %cst_102 {dimension_numbers = #tpu.dot_dimension_numbers<[2], [1], [1], [2], [0, 0, 0, 1, 1, 2], [0], [0]>} : vector<2x8x8xf32>, vector<2x8x16xf32>, vector<2x8x16xf32> -> vector<2x8x16xf32>
    "tpu.trace_stop"() : () -> ()
    %259 = vector.shape_cast %258 : vector<2x8x16xf32> to vector<16x16xf32>
    %260 = vector.extract_strided_slice %186 {offsets = [16, 0], sizes = [16, 32], strides = [1, 1]} : vector<64x32xf32> to vector<16x32xf32>
    %cst_103 = arith.constant dense<0.000000e+00> : vector<16x32xf32>
    %261 = tpu.matmul %259, %260, %cst_103 {dimension_numbers = #tpu.dot_dimension_numbers<[1], [0], [0], [1], [0, 0, 1, 1], [], []>} : vector<16x16xf32>, vector<16x32xf32>, vector<16x32xf32> -> vector<16x32xf32>
    %262 = arith.addf %238, %261 : vector<16x32xf32>
    %263 = vector.extract_strided_slice %213 {offsets = [0, 32], sizes = [16, 16], strides = [1, 1]} : vector<16x192xf32> to vector<16x16xf32>
    %264 = vector.shape_cast %263 : vector<16x16xf32> to vector<2x8x16xf32>
    %265 = vector.extract_strided_slice %213 {offsets = [0, 96], sizes = [16, 16], strides = [1, 1]} : vector<16x192xf32> to vector<16x16xf32>
    %266 = vector.shape_cast %265 : vector<16x16xf32> to vector<2x8x16xf32>
    %267 = vector.extract_strided_slice %213 {offsets = [0, 160], sizes = [16, 16], strides = [1, 1]} : vector<16x192xf32> to vector<16x16xf32>
    %268 = vector.shape_cast %267 : vector<16x16xf32> to vector<2x8x16xf32>
    "tpu.trace_start"() <{level = 10 : i32, message = "bnd,bmd->bnm"}> : () -> ()
    %cst_104 = arith.constant dense<0.000000e+00> : vector<2x8x8xf32>
    %269 = tpu.matmul %264, %266, %cst_104 {dimension_numbers = #tpu.dot_dimension_numbers<[2], [2], [1], [1], [0, 0, 0, 1, 1, 1], [0], [0]>} : vector<2x8x16xf32>, vector<2x8x16xf32>, vector<2x8x8xf32> -> vector<2x8x8xf32>
    "tpu.trace_stop"() : () -> ()
    %cst_105 = arith.constant 2.500000e-01 : f32
    %270 = vector.broadcast %cst_105 : f32 to vector<2x8x8xf32>
    %271 = arith.mulf %269, %270 : vector<2x8x8xf32>
    %cst_106 = arith.constant dense<0xFF800000> : vector<2x8xf32>
    %272 = vector.multi_reduction <maximumf>, %271, %cst_106 [2] : vector<2x8x8xf32> to vector<2x8xf32>
    %273 = vector.shape_cast %272 : vector<2x8xf32> to vector<2x8x1xf32>
    %274 = vector.broadcast %273 : vector<2x8x1xf32> to vector<2x8x8xf32>
    %275 = arith.subf %271, %274 : vector<2x8x8xf32>
    %276 = math.exp %275 : vector<2x8x8xf32>
    %cst_107 = arith.constant dense<0.000000e+00> : vector<2x8xf32>
    %277 = vector.multi_reduction <add>, %276, %cst_107 [2] : vector<2x8x8xf32> to vector<2x8xf32>
    %278 = vector.shape_cast %277 : vector<2x8xf32> to vector<2x8x1xf32>
    %279 = tpu.reciprocal %278 : vector<2x8x1xf32> -> vector<2x8x1xf32>
    %280 = vector.broadcast %279 : vector<2x8x1xf32> to vector<2x8x8xf32>
    %281 = arith.mulf %276, %280 : vector<2x8x8xf32>
    "tpu.trace_start"() <{level = 10 : i32, message = "bnm,bmd->bnd"}> : () -> ()
    %cst_108 = arith.constant dense<0.000000e+00> : vector<2x8x16xf32>
    %282 = tpu.matmul %281, %268, %cst_108 {dimension_numbers = #tpu.dot_dimension_numbers<[2], [1], [1], [2], [0, 0, 0, 1, 1, 2], [0], [0]>} : vector<2x8x8xf32>, vector<2x8x16xf32>, vector<2x8x16xf32> -> vector<2x8x16xf32>
    "tpu.trace_stop"() : () -> ()
    %283 = vector.shape_cast %282 : vector<2x8x16xf32> to vector<16x16xf32>
    %284 = vector.extract_strided_slice %186 {offsets = [32, 0], sizes = [16, 32], strides = [1, 1]} : vector<64x32xf32> to vector<16x32xf32>
    %cst_109 = arith.constant dense<0.000000e+00> : vector<16x32xf32>
    %285 = tpu.matmul %283, %284, %cst_109 {dimension_numbers = #tpu.dot_dimension_numbers<[1], [0], [0], [1], [0, 0, 1, 1], [], []>} : vector<16x16xf32>, vector<16x32xf32>, vector<16x32xf32> -> vector<16x32xf32>
    %286 = arith.addf %262, %285 : vector<16x32xf32>
    %287 = vector.extract_strided_slice %213 {offsets = [0, 48], sizes = [16, 16], strides = [1, 1]} : vector<16x192xf32> to vector<16x16xf32>
    %288 = vector.shape_cast %287 : vector<16x16xf32> to vector<2x8x16xf32>
    %289 = vector.extract_strided_slice %213 {offsets = [0, 112], sizes = [16, 16], strides = [1, 1]} : vector<16x192xf32> to vector<16x16xf32>
    %290 = vector.shape_cast %289 : vector<16x16xf32> to vector<2x8x16xf32>
    %291 = vector.extract_strided_slice %213 {offsets = [0, 176], sizes = [16, 16], strides = [1, 1]} : vector<16x192xf32> to vector<16x16xf32>
    %292 = vector.shape_cast %291 : vector<16x16xf32> to vector<2x8x16xf32>
    "tpu.trace_start"() <{level = 10 : i32, message = "bnd,bmd->bnm"}> : () -> ()
    %cst_110 = arith.constant dense<0.000000e+00> : vector<2x8x8xf32>
    %293 = tpu.matmul %288, %290, %cst_110 {dimension_numbers = #tpu.dot_dimension_numbers<[2], [2], [1], [1], [0, 0, 0, 1, 1, 1], [0], [0]>} : vector<2x8x16xf32>, vector<2x8x16xf32>, vector<2x8x8xf32> -> vector<2x8x8xf32>
    "tpu.trace_stop"() : () -> ()
    %cst_111 = arith.constant 2.500000e-01 : f32
    %294 = vector.broadcast %cst_111 : f32 to vector<2x8x8xf32>
    %295 = arith.mulf %293, %294 : vector<2x8x8xf32>
    %cst_112 = arith.constant dense<0xFF800000> : vector<2x8xf32>
    %296 = vector.multi_reduction <maximumf>, %295, %cst_112 [2] : vector<2x8x8xf32> to vector<2x8xf32>
    %297 = vector.shape_cast %296 : vector<2x8xf32> to vector<2x8x1xf32>
    %298 = vector.broadcast %297 : vector<2x8x1xf32> to vector<2x8x8xf32>
    %299 = arith.subf %295, %298 : vector<2x8x8xf32>
    %300 = math.exp %299 : vector<2x8x8xf32>
    %cst_113 = arith.constant dense<0.000000e+00> : vector<2x8xf32>
    %301 = vector.multi_reduction <add>, %300, %cst_113 [2] : vector<2x8x8xf32> to vector<2x8xf32>
    %302 = vector.shape_cast %301 : vector<2x8xf32> to vector<2x8x1xf32>
    %303 = tpu.reciprocal %302 : vector<2x8x1xf32> -> vector<2x8x1xf32>
    %304 = vector.broadcast %303 : vector<2x8x1xf32> to vector<2x8x8xf32>
    %305 = arith.mulf %300, %304 : vector<2x8x8xf32>
    "tpu.trace_start"() <{level = 10 : i32, message = "bnm,bmd->bnd"}> : () -> ()
    %cst_114 = arith.constant dense<0.000000e+00> : vector<2x8x16xf32>
    %306 = tpu.matmul %305, %292, %cst_114 {dimension_numbers = #tpu.dot_dimension_numbers<[2], [1], [1], [2], [0, 0, 0, 1, 1, 2], [0], [0]>} : vector<2x8x8xf32>, vector<2x8x16xf32>, vector<2x8x16xf32> -> vector<2x8x16xf32>
    "tpu.trace_stop"() : () -> ()
    %307 = vector.shape_cast %306 : vector<2x8x16xf32> to vector<16x16xf32>
    %308 = vector.extract_strided_slice %186 {offsets = [48, 0], sizes = [16, 32], strides = [1, 1]} : vector<64x32xf32> to vector<16x32xf32>
    %cst_115 = arith.constant dense<0.000000e+00> : vector<16x32xf32>
    %309 = tpu.matmul %307, %308, %cst_115 {dimension_numbers = #tpu.dot_dimension_numbers<[1], [0], [0], [1], [0, 0, 1, 1], [], []>} : vector<16x16xf32>, vector<16x32xf32>, vector<16x32xf32> -> vector<16x32xf32>
    %310 = arith.addf %286, %309 : vector<16x32xf32>
    %c1_116 = arith.constant 1 : index
    %c0_117 = arith.constant 0 : index
    %c0_118 = arith.constant 0 : index
    %311 = vector.load %arg5[%c1_116, %c0_117, %c0_118] : memref<2x1x32xf32, #tpu.memory_space<vmem>>, vector<1x1x32xf32>
    %312 = vector.shape_cast %311 : vector<1x1x32xf32> to vector<1x32xf32>
    %313 = vector.broadcast %312 : vector<1x32xf32> to vector<16x32xf32>
    %314 = arith.addf %310, %313 : vector<16x32xf32>
    %315 = arith.addf %314, %182 : vector<16x32xf32>
    %c1_119 = arith.constant 1 : index
    %c0_120 = arith.constant 0 : index
    %c0_121 = arith.constant 0 : index
    %316 = vector.load %arg6[%c1_119, %c0_120, %c0_121] : memref<2x1x32xf32, #tpu.memory_space<vmem>>, vector<1x1x32xf32>
    %317 = vector.shape_cast %316 : vector<1x1x32xf32> to vector<1x32xf32>
    %c1_122 = arith.constant 1 : index
    %c0_123 = arith.constant 0 : index
    %c0_124 = arith.constant 0 : index
    %318 = vector.load %arg7[%c1_122, %c0_123, %c0_124] : memref<2x1x32xf32, #tpu.memory_space<vmem>>, vector<1x1x32xf32>
    %319 = vector.shape_cast %318 : vector<1x1x32xf32> to vector<1x32xf32>
    %cst_125 = arith.constant dense<0.000000e+00> : vector<16xf32>
    %320 = vector.multi_reduction <add>, %315, %cst_125 [1] : vector<16x32xf32> to vector<16xf32>
    %321 = vector.shape_cast %320 : vector<16xf32> to vector<16x1xf32>
    %cst_126 = arith.constant 3.200000e+01 : f32
    %322 = vector.broadcast %cst_126 : f32 to vector<16x1xf32>
    %323 = arith.divf %321, %322 : vector<16x1xf32>
    %324 = vector.broadcast %323 : vector<16x1xf32> to vector<16x32xf32>
    %325 = arith.subf %315, %324 : vector<16x32xf32>
    %326 = arith.mulf %325, %325 : vector<16x32xf32>
    %cst_127 = arith.constant dense<0.000000e+00> : vector<16xf32>
    %327 = vector.multi_reduction <add>, %326, %cst_127 [1] : vector<16x32xf32> to vector<16xf32>
    %328 = vector.shape_cast %327 : vector<16xf32> to vector<16x1xf32>
    %cst_128 = arith.constant 3.200000e+01 : f32
    %329 = vector.broadcast %cst_128 : f32 to vector<16x1xf32>
    %330 = arith.divf %328, %329 : vector<16x1xf32>
    %331 = vector.broadcast %323 : vector<16x1xf32> to vector<16x32xf32>
    %332 = arith.subf %315, %331 : vector<16x32xf32>
    %cst_129 = arith.constant 9.99999974E-6 : f32
    %333 = vector.broadcast %cst_129 : f32 to vector<16x1xf32>
    %334 = arith.addf %330, %333 : vector<16x1xf32>
    %335 = math.rsqrt %334 : vector<16x1xf32>
    %336 = vector.broadcast %335 : vector<16x1xf32> to vector<16x32xf32>
    %337 = arith.mulf %332, %336 : vector<16x32xf32>
    %338 = vector.broadcast %317 : vector<1x32xf32> to vector<16x32xf32>
    %339 = arith.mulf %337, %338 : vector<16x32xf32>
    %340 = vector.broadcast %319 : vector<1x32xf32> to vector<16x32xf32>
    %341 = arith.addf %339, %340 : vector<16x32xf32>
    %c1_130 = arith.constant 1 : index
    %c0_131 = arith.constant 0 : index
    %c0_132 = arith.constant 0 : index
    %342 = vector.load %arg8[%c1_130, %c0_131, %c0_132] : memref<2x32x64xf32, #tpu.memory_space<vmem>>, vector<1x32x64xf32>
    %343 = vector.shape_cast %342 : vector<1x32x64xf32> to vector<32x64xf32>
    %cst_133 = arith.constant dense<0.000000e+00> : vector<16x64xf32>
    %344 = tpu.matmul %341, %343, %cst_133 {dimension_numbers = #tpu.dot_dimension_numbers<[1], [0], [0], [1], [0, 0, 1, 1], [], []>} : vector<16x32xf32>, vector<32x64xf32>, vector<16x64xf32> -> vector<16x64xf32>
    %c1_134 = arith.constant 1 : index
    %c0_135 = arith.constant 0 : index
    %c0_136 = arith.constant 0 : index
    %345 = vector.load %arg9[%c1_134, %c0_135, %c0_136] : memref<2x1x64xf32, #tpu.memory_space<vmem>>, vector<1x1x64xf32>
    %346 = vector.shape_cast %345 : vector<1x1x64xf32> to vector<1x64xf32>
    %347 = vector.broadcast %346 : vector<1x64xf32> to vector<16x64xf32>
    %348 = arith.addf %344, %347 : vector<16x64xf32>
    %cst_137 = arith.constant 5.000000e-01 : f32
    %349 = vector.broadcast %cst_137 : f32 to vector<16x64xf32>
    %350 = arith.mulf %349, %348 : vector<16x64xf32>
    %cst_138 = arith.constant 0.707106769 : f32
    %351 = vector.broadcast %cst_138 : f32 to vector<16x64xf32>
    %352 = arith.mulf %348, %351 : vector<16x64xf32>
    %353 = math.erf %352 : vector<16x64xf32>
    %cst_139 = arith.constant 1.000000e+00 : f32
    %354 = vector.broadcast %cst_139 : f32 to vector<16x64xf32>
    %355 = arith.addf %354, %353 : vector<16x64xf32>
    %356 = arith.mulf %350, %355 : vector<16x64xf32>
    %c1_140 = arith.constant 1 : index
    %c0_141 = arith.constant 0 : index
    %c0_142 = arith.constant 0 : index
    %357 = vector.load %arg10[%c1_140, %c0_141, %c0_142] : memref<2x64x32xf32, #tpu.memory_space<vmem>>, vector<1x64x32xf32>
    %358 = vector.shape_cast %357 : vector<1x64x32xf32> to vector<64x32xf32>
    %cst_143 = arith.constant dense<0.000000e+00> : vector<16x32xf32>
    %359 = tpu.matmul %356, %358, %cst_143 {dimension_numbers = #tpu.dot_dimension_numbers<[1], [0], [0], [1], [0, 0, 1, 1], [], []>} : vector<16x64xf32>, vector<64x32xf32>, vector<16x32xf32> -> vector<16x32xf32>
    %c1_144 = arith.constant 1 : index
    %c0_145 = arith.constant 0 : index
    %c0_146 = arith.constant 0 : index
    %360 = vector.load %arg11[%c1_144, %c0_145, %c0_146] : memref<2x1x32xf32, #tpu.memory_space<vmem>>, vector<1x1x32xf32>
    %361 = vector.shape_cast %360 : vector<1x1x32xf32> to vector<1x32xf32>
    %362 = vector.broadcast %361 : vector<1x32xf32> to vector<16x32xf32>
    %363 = arith.addf %359, %362 : vector<16x32xf32>
    %364 = arith.addf %363, %315 : vector<16x32xf32>
    %c0_147 = arith.constant 0 : index
    %c0_148 = arith.constant 0 : index
    %365 = vector.load %arg12[%c0_147, %c0_148] : memref<16x32xf32, #tpu.memory_space<vmem>>, vector<16x32xf32>
    tpu.vector_store %arg12[%c0_147, %c0_148], %364 {strides = array<i32>} : memref<16x32xf32, #tpu.memory_space<vmem>>, vector<16x32xf32>,
    return
  }
}

</mosaic_0001>

<llo_original>
// kernel: transformer_forward.1
$region0: #{transformer_forward.1}
  #allocation0 [shape = 'u32[]', space=smem, size = 0x4, offset = 0x4, fixed_abs, tag = 'smem constant byte address 0x4 - core index']
  #allocation1 [shape = 'u32[144,128]{1,0:T(1,128)}', space=vmem, size = 0x12000, scoped, tag = 'internal scratch']
  %s0 = inlined_call_operand.vmem [shape: f32[16,32], index: 0, kind: input, shape index: {}]
  %s1 = inlined_call_operand.vmem [shape: f32[2,1,32], index: 1, kind: input, shape index: {}]
  %s2 = inlined_call_operand.vmem [shape: f32[2,1,32], index: 2, kind: input, shape index: {}]
  %s3 = inlined_call_operand.vmem [shape: f32[2,32,192], index: 3, kind: input, shape index: {}]
  %s4 = inlined_call_operand.vmem [shape: f32[2,64,32], index: 4, kind: input, shape index: {}]
  %s5 = inlined_call_operand.vmem [shape: f32[2,1,32], index: 5, kind: input, shape index: {}]
  %s6 = inlined_call_operand.vmem [shape: f32[2,1,32], index: 6, kind: input, shape index: {}]
  %s7 = inlined_call_operand.vmem [shape: f32[2,1,32], index: 7, kind: input, shape index: {}]
  %s8 = inlined_call_operand.vmem [shape: f32[2,32,64], index: 8, kind: input, shape index: {}]
  %s9 = inlined_call_operand.vmem [shape: f32[2,1,64], index: 9, kind: input, shape index: {}]
  %s10 = inlined_call_operand.vmem [shape: f32[2,64,32], index: 10, kind: input, shape index: {}]
  %s11 = inlined_call_operand.vmem [shape: f32[2,1,32], index: 11, kind: input, shape index: {}]
  %s12 = inlined_call_operand.hbm [shape: f32[16,32], index: 12, kind: output, shape index: {}]
  %s13 = sld [smem:[#allocation0]]
  $region58: #{transformer_forward.1} parent=0
    _
  %s15 = ssub.s32 1, %s13
  %s16 = scalar_select 0, %s15, %s13
  $region1: #{transformer_forward.1} parent=0
    #allocation2 [shape = 'u8[8192]{0}', space=vmem, size = 0x2000, scoped, tag = 'output window, operand 0, single buffered']
    #allocation3 [shape = 's32[1]{0}', space=sflag, size = 0x4, scoped, tag = 'scoped memory for transformer_forward.1']
    %17 = vsyncpa [#allocation3], 0
    // Predicated region
    $region2: #{transformer_forward.1} parent=1 // pred_check
      _
    $region3: #{transformer_forward.1} parent=1 // pred_check_branch
      %19 = sbr.rel (0) target = $region5
    $region4: #{transformer_forward.1} parent=1 // pred_region
      _
    $region5: #{transformer_forward.1} parent=1 // pred_fallthru
      _
    // Predicated region
    $region6: #{transformer_forward.1} parent=1 // pred_check
      _
    $region7: #{transformer_forward.1} parent=1 // pred_check_branch
      %21 = sbr.rel (0) target = $region9
    $region8: #{transformer_forward.1} parent=1 // pred_region
      _
    $region9: #{transformer_forward.1} parent=1 // pred_fallthru
      _
    // Predicated region
    $region10: #{transformer_forward.1} parent=1 // pred_check
      _
    $region11: #{transformer_forward.1} parent=1 // pred_check_branch
      %23 = sbr.rel (0) target = $region13
    $region12: #{transformer_forward.1} parent=1 // pred_region
      _
    $region13: #{transformer_forward.1} parent=1 // pred_fallthru
      _
    // Predicated region
    $region14: #{transformer_forward.1} parent=1 // pred_check
      _
    $region15: #{transformer_forward.1} parent=1 // pred_check_branch
      %25 = sbr.rel (0) target = $region17
    $region16: #{transformer_forward.1} parent=1 // pred_region
      _
    $region17: #{transformer_forward.1} parent=1 // pred_fallthru
      _
    // Predicated region
    $region18: #{transformer_forward.1} parent=1 // pred_check
      _
    $region19: #{transformer_forward.1} parent=1 // pred_check_branch
      %27 = sbr.rel (0) target = $region21
    $region20: #{transformer_forward.1} parent=1 // pred_region
      _
    $region21: #{transformer_forward.1} parent=1 // pred_fallthru
      _
    // Predicated region
    $region22: #{transformer_forward.1} parent=1 // pred_check
      _
    $region23: #{transformer_forward.1} parent=1 // pred_check_branch
      %29 = sbr.rel (0) target = $region25
    $region24: #{transformer_forward.1} parent=1 // pred_region
      _
    $region25: #{transformer_forward.1} parent=1 // pred_fallthru
      _
    // Predicated region
    $region26: #{transformer_forward.1} parent=1 // pred_check
      _
    $region27: #{transformer_forward.1} parent=1 // pred_check_branch
      %31 = sbr.rel (0) target = $region29
    $region28: #{transformer_forward.1} parent=1 // pred_region
      _
    $region29: #{transformer_forward.1} parent=1 // pred_fallthru
      _
    // Predicated region
    $region30: #{transformer_forward.1} parent=1 // pred_check
      _
    $region31: #{transformer_forward.1} parent=1 // pred_check_branch
      %33 = sbr.rel (0) target = $region33
    $region32: #{transformer_forward.1} parent=1 // pred_region
      _
    $region33: #{transformer_forward.1} parent=1 // pred_fallthru
      _
    // Predicated region
    $region34: #{transformer_forward.1} parent=1 // pred_check
      _
    $region35: #{transformer_forward.1} parent=1 // pred_check_branch
      %35 = sbr.rel (0) target = $region37
    $region36: #{transformer_forward.1} parent=1 // pred_region
      _
    $region37: #{transformer_forward.1} parent=1 // pred_fallthru
      _
    // Predicated region
    $region38: #{transformer_forward.1} parent=1 // pred_check
      _
    $region39: #{transformer_forward.1} parent=1 // pred_check_branch
      %37 = sbr.rel (0) target = $region41
    $region40: #{transformer_forward.1} parent=1 // pred_region
      _
    $region41: #{transformer_forward.1} parent=1 // pred_fallthru
      _
    // Predicated region
    $region42: #{transformer_forward.1} parent=1 // pred_check
      _
    $region43: #{transformer_forward.1} parent=1 // pred_check_branch
      %39 = sbr.rel (0) target = $region45
    $region44: #{transformer_forward.1} parent=1 // pred_region
      _
    $region45: #{transformer_forward.1} parent=1 // pred_fallthru
      _
    // Predicated region
    $region46: #{transformer_forward.1} parent=1 // pred_check
      _
    $region47: #{transformer_forward.1} parent=1 // pred_check_branch
      %41 = sbr.rel (0) target = $region49
    $region48: #{transformer_forward.1} parent=1 // pred_region
      _
    $region49: #{transformer_forward.1} parent=1 // pred_fallthru
      _
    %v42 = vld [vmem:[%s0] sm:$0xff]
    %v43 = vld [vmem:[%s0 + $0x8] sm:$0xff]
    %v44 = vld [vmem:[%s3] sm:$0xff]
    %v45 = vld [vmem:[%s3 + $0x8] sm:$0xff]
    %v46 = vld [vmem:[%s3 + $0x10] sm:$0xff]
    %v47 = vld [vmem:[%s3 + $0x18] sm:$0xff]
    %v48 = vld [vmem:[%s3 + $0x20] sm:$0xff]
    %v49 = vld [vmem:[%s3 + $0x28] sm:$0xff]
    %v50 = vld [vmem:[%s3 + $0x30] sm:$0xff]
    %v51 = vld [vmem:[%s3 + $0x38] sm:$0xff]
    %v52 = vld [vmem:[%s4] sm:$0xff]
    %v53 = vld [vmem:[%s4 + $0x8] sm:$0xff]
    %v54 = vld [vmem:[%s4 + $0x10] sm:$0xff]
    %v55 = vld [vmem:[%s4 + $0x18] sm:$0xff]
    %v56 = vld [vmem:[%s4 + $0x20] sm:$0xff]
    %v57 = vld [vmem:[%s4 + $0x28] sm:$0xff]
    %v58 = vld [vmem:[%s4 + $0x30] sm:$0xff]
    %v59 = vld [vmem:[%s4 + $0x38] sm:$0xff]
    %v60 = vld [vmem:[%s1] sm:$0x1]
    %v61 = vld [vmem:[%s2] sm:$0x1]
    %vm62 = vcmask 261120
    %v63 = vsel %vm62, %v42, 0.0
    %64 = vadd.xlane.f32.xlu0 %v63
    %v65 = vpop.xlane.xlu0 %64
    %v66 = vsel %vm62, %v43, 0.0
    %67 = vadd.xlane.f32.xlu0 %v66
    %v68 = vpop.xlane.xlu0 %67
    %v69 = vrcp.pop 32.0
    %v70 = vmul.f32 %v65, %v69
    %v71 = vmul.f32 %v68, %v69
    %v72 = vsub.f32 %v42, %v70
    %v73 = vsub.f32 %v43, %v71
    %v74 = vmul.f32 %v72, %v72
    %v75 = vmul.f32 %v73, %v73
    %v76 = vsel %vm62, %v74, 0.0
    %77 = vadd.xlane.f32.xlu0 %v76
    %v78 = vpop.xlane.xlu0 %77
    %v79 = vsel %vm62, %v75, 0.0
    %80 = vadd.xlane.f32.xlu0 %v79
    %v81 = vpop.xlane.xlu0 %80
    %v82 = vmul.f32 %v78, %v69
    %v83 = vmul.f32 %v81, %v69
    %v84 = vadd.f32 %v82, 1e-05
    %v85 = vadd.f32 %v83, 1e-05
    %v86 = vrsqrt.pop %v84
    %v87 = vrsqrt.pop %v85
    %v88 = vmul.f32 %v72, %v86
    %v89 = vmul.f32 %v73, %v87
    %v91 = vlaneseq
    %v92 = vshrl.u32 %v91, 7
    %v93 = vsub.s32 0, %v92
    %v94 = vrot.slane %v60, %v93
    %v96 = vmul.f32 %v88, %v94
    %v97 = vmul.f32 %v89, %v94
    %v99 = vlaneseq
    %v100 = vshrl.u32 %v99, 7
    %v101 = vsub.s32 0, %v100
    %v102 = vrot.slane %v61, %v101
    %v104 = vadd.f32 %v96, %v102
    %v105 = vadd.f32 %v97, %v102
    %v107 = vsel %vm62, %v104, 0
    %v110 = vsel %vm62, %v105, 0
    %112 = vmatprep.subr.mxu0 0.0
    %113 = vmatpush1.msra.mxu0 0.0
    %114 = vmatprep.subr.mxu0 0.0
    %115 = vmatpush1.msra.mxu0 0.0
    %116 = vmatprep.subr.mxu0 0.0
    %117 = vmatpush1.msra.mxu0 0.0
    %118 = vmatprep.subr.mxu0 0.0
    %119 = vmatpush1.msra.mxu0 0.0
    %120 = vmatprep.subr.mxu0 0.0
    %121 = vmatpush1.msra.mxu0 0.0
    %122 = vmatprep.subr.mxu0 0.0
    %123 = vmatpush1.msra.mxu0 0.0
    %124 = vmatprep.subr.mxu0 0.0
    %125 = vmatpush1.msra.mxu0 0.0
    %126 = vmatprep.subr.mxu0 0.0
    %127 = vmatpush1.msra.mxu0 0.0
    %128 = vmatprep.subr.mxu0 0.0
    %129 = vmatpush1.msra.mxu0 0.0
    %130 = vmatprep.subr.mxu0 0.0
    %131 = vmatpush1.msra.mxu0 0.0
    %132 = vmatprep.subr.mxu0 0.0
    %133 = vmatpush1.msra.mxu0 0.0
    %134 = vmatprep.subr.mxu0 0.0
    %135 = vmatpush1.msra.mxu0 0.0
    %136 = vmatprep.subr.mxu0 %v51
    %137 = vmatpush1.msra.mxu0 %v50
    %138 = vmatprep.subr.mxu0 %v49
    %139 = vmatpush1.msra.mxu0 %v48
    %140 = vmatprep.subr.mxu0 %v47
    %141 = vmatpush1.msra.mxu0 %v46
    %142 = vmatprep.subr.mxu0 %v45
    %143 = vmatpush1.msra.mxu0 %v44
    %144 = vmatprep.subr.mxu0 0.0
    %145 = vmatpush2.msra.mxu0 0.0
    %146 = vmatprep.subr.mxu0 0.0
    %147 = vmatpush2.msra.mxu0 0.0
    %148 = vmatprep.subr.mxu0 0.0
    %149 = vmatpush2.msra.mxu0 0.0
    %150 = vmatprep.subr.mxu0 0.0
    %151 = vmatpush2.msra.mxu0 0.0
    %152 = vmatprep.subr.mxu0 0.0
    %153 = vmatpush2.msra.mxu0 0.0
    %154 = vmatprep.subr.mxu0 0.0
    %155 = vmatpush2.msra.mxu0 0.0
    %156 = vmatprep.subr.mxu0 0.0
    %157 = vmatpush2.msra.mxu0 0.0
    %158 = vmatprep.subr.mxu0 0.0
    %159 = vmatpush2.msra.mxu0 0.0
    %160 = vmatprep.subr.mxu0 0.0
    %161 = vmatpush2.msra.mxu0 0.0
    %162 = vmatprep.subr.mxu0 0.0
    %163 = vmatpush2.msra.mxu0 0.0
    %164 = vmatprep.subr.mxu0 0.0
    %165 = vmatpush2.msra.mxu0 0.0
    %166 = vmatprep.subr.mxu0 0.0
    %167 = vmatpush2.msra.mxu0 0.0
    %168 = vmatprep.subr.mxu0 0.0
    %169 = vmatpush2.msra.mxu0 0.0
    %170 = vmatprep.subr.mxu0 0.0
    %171 = vmatpush2.msra.mxu0 0.0
    %172 = vmatprep.subr.mxu0 0.0
    %173 = vmatpush2.msra.mxu0 0.0
    %174 = vmatprep.subr.mxu0 0.0
    %175 = vmatpush2.msra.mxu0 0.0
    %176 = vmatprep.mubr.f32.mxu0 0.0
    %177 = vmatmul.mubr.f32.gmra.mxu0 %v107
    %v178 = vpop.f32.mrf.mxu0
    %v179 = vadd.f32 0.0, %v178
    %v180 = vpop.f32.mrf.mxu0
    %v181 = vadd.f32 0.0, %v180
    %182 = vmatprep.mubr.f32.mxu0 0.0
    %183 = vmatmul.mubr.f32.gmra.mxu0 %v110
    %v184 = vpop.f32.mrf.mxu0
    %v185 = vadd.f32 0.0, %v184
    %v186 = vpop.f32.mrf.mxu0
    %v187 = vadd.f32 0.0, %v186
    %188 = vdwg.mxu0
    %190 = vrot.lane.b32.xlu0 %v179, 64
    %v191 = vpop.permute.xlu0 %190
    %vm192 = vcmask 130048
    %v193 = vsel %vm192, %v179, 0
    %v195 = vsel %vm192, %v191, 0
    %197 = vmatprep.subr.mxu0 0.0
    %198 = vmatpush1.xpose.msra.mxu0 0.0
    %199 = vmatprep.subr.mxu0 0.0
    %200 = vmatpush1.xpose.msra.mxu0 0.0
    %201 = vmatprep.subr.mxu0 0.0
    %202 = vmatpush1.xpose.msra.mxu0 0.0
    %203 = vmatprep.subr.mxu0 0.0
    %204 = vmatpush1.xpose.msra.mxu0 0.0
    %205 = vmatprep.subr.mxu0 0.0
    %206 = vmatpush1.xpose.msra.mxu0 0.0
    %207 = vmatprep.subr.mxu0 0.0
    %208 = vmatpush1.xpose.msra.mxu0 0.0
    %209 = vmatprep.subr.mxu0 0.0
    %210 = vmatpush1.xpose.msra.mxu0 0.0
    %211 = vmatprep.subr.mxu0 0.0
    %212 = vmatpush1.xpose.msra.mxu0 0.0
    %213 = vmatprep.subr.mxu0 0.0
    %214 = vmatpush1.xpose.msra.mxu0 0.0
    %215 = vmatprep.subr.mxu0 0.0
    %216 = vmatpush1.xpose.msra.mxu0 0.0
    %217 = vmatprep.subr.mxu0 0.0
    %218 = vmatpush1.xpose.msra.mxu0 0.0
    %219 = vmatprep.subr.mxu0 0.0
    %220 = vmatpush1.xpose.msra.mxu0 0.0
    %221 = vmatprep.subr.mxu0 0.0
    %222 = vmatpush1.xpose.msra.mxu0 0.0
    %223 = vmatprep.subr.mxu0 0.0
    %224 = vmatpush1.xpose.msra.mxu0 0.0
    %225 = vmatprep.subr.mxu0 0.0
    %226 = vmatpush1.xpose.msra.mxu0 0.0
    %227 = vmatprep.subr.mxu0 0.0
    %228 = vmatpush1.xpose.msra.mxu0 %v195
    %229 = vmatprep.subr.mxu0 0.0
    %230 = vmatpush2.xpose.msra.mxu0 0.0
    %231 = vmatprep.subr.mxu0 0.0
    %232 = vmatpush2.xpose.msra.mxu0 0.0
    %233 = vmatprep.subr.mxu0 0.0
    %234 = vmatpush2.xpose.msra.mxu0 0.0
    %235 = vmatprep.subr.mxu0 0.0
    %236 = vmatpush2.xpose.msra.mxu0 0.0
    %237 = vmatprep.subr.mxu0 0.0
    %238 = vmatpush2.xpose.msra.mxu0 0.0
    %239 = vmatprep.subr.mxu0 0.0
    %240 = vmatpush2.xpose.msra.mxu0 0.0
    %241 = vmatprep.subr.mxu0 0.0
    %242 = vmatpush2.xpose.msra.mxu0 0.0
    %243 = vmatprep.subr.mxu0 0.0
    %244 = vmatpush2.xpose.msra.mxu0 0.0
    %245 = vmatprep.subr.mxu0 0.0
    %246 = vmatpush2.xpose.msra.mxu0 0.0
    %247 = vmatprep.subr.mxu0 0.0
    %248 = vmatpush2.xpose.msra.mxu0 0.0
    %249 = vmatprep.subr.mxu0 0.0
    %250 = vmatpush2.xpose.msra.mxu0 0.0
    %251 = vmatprep.subr.mxu0 0.0
    %252 = vmatpush2.xpose.msra.mxu0 0.0
    %253 = vmatprep.subr.mxu0 0.0
    %254 = vmatpush2.xpose.msra.mxu0 0.0
    %255 = vmatprep.subr.mxu0 0.0
    %256 = vmatpush2.xpose.msra.mxu0 0.0
    %257 = vmatprep.subr.mxu0 0.0
    %258 = vmatpush2.xpose.msra.mxu0 0.0
    %259 = vmatprep.subr.mxu0 0.0
    %260 = vmatpush2.xpose.msra.mxu0 0.0
    %261 = vmatprep.mubr.f32.mxu0 0.0
    %262 = vmatmul.mubr.f32.gmra.mxu0 %v193
    %v263 = vpop.f32.mrf.mxu0
    %v264 = vadd.f32 0.0, %v263
    %v265 = vpop.f32.mrf.mxu0
    %266 = vdwg.mxu0
    %268 = vrot.lane.b32.xlu0 %v185, 64
    %v269 = vpop.permute.xlu0 %268
    %v270 = vsel %vm192, %v185, 0
    %v272 = vsel %vm192, %v269, 0
    %274 = vmatprep.subr.mxu0 0.0
    %275 = vmatpush1.xpose.msra.mxu0 0.0
    %276 = vmatprep.subr.mxu0 0.0
    %277 = vmatpush1.xpose.msra.mxu0 0.0
    %278 = vmatprep.subr.mxu0 0.0
    %279 = vmatpush1.xpose.msra.mxu0 0.0
    %280 = vmatprep.subr.mxu0 0.0
    %281 = vmatpush1.xpose.msra.mxu0 0.0
    %282 = vmatprep.subr.mxu0 0.0
    %283 = vmatpush1.xpose.msra.mxu0 0.0
    %284 = vmatprep.subr.mxu0 0.0
    %285 = vmatpush1.xpose.msra.mxu0 0.0
    %286 = vmatprep.subr.mxu0 0.0
    %287 = vmatpush1.xpose.msra.mxu0 0.0
    %288 = vmatprep.subr.mxu0 0.0
    %289 = vmatpush1.xpose.msra.mxu0 0.0
    %290 = vmatprep.subr.mxu0 0.0
    %291 = vmatpush1.xpose.msra.mxu0 0.0
    %292 = vmatprep.subr.mxu0 0.0
    %293 = vmatpush1.xpose.msra.mxu0 0.0
    %294 = vmatprep.subr.mxu0 0.0
    %295 = vmatpush1.xpose.msra.mxu0 0.0
    %296 = vmatprep.subr.mxu0 0.0
    %297 = vmatpush1.xpose.msra.mxu0 0.0
    %298 = vmatprep.subr.mxu0 0.0
    %299 = vmatpush1.xpose.msra.mxu0 0.0
    %300 = vmatprep.subr.mxu0 0.0
    %301 = vmatpush1.xpose.msra.mxu0 0.0
    %302 = vmatprep.subr.mxu0 0.0
    %303 = vmatpush1.xpose.msra.mxu0 0.0
    %304 = vmatprep.subr.mxu0 0.0
    %305 = vmatpush1.xpose.msra.mxu0 %v272
    %306 = vmatprep.subr.mxu0 0.0
    %307 = vmatpush2.xpose.msra.mxu0 0.0
    %308 = vmatprep.subr.mxu0 0.0
    %309 = vmatpush2.xpose.msra.mxu0 0.0
    %310 = vmatprep.subr.mxu0 0.0
    %311 = vmatpush2.xpose.msra.mxu0 0.0
    %312 = vmatprep.subr.mxu0 0.0
    %313 = vmatpush2.xpose.msra.mxu0 0.0
    %314 = vmatprep.subr.mxu0 0.0
    %315 = vmatpush2.xpose.msra.mxu0 0.0
    %316 = vmatprep.subr.mxu0 0.0
    %317 = vmatpush2.xpose.msra.mxu0 0.0
    %318 = vmatprep.subr.mxu0 0.0
    %319 = vmatpush2.xpose.msra.mxu0 0.0
    %320 = vmatprep.subr.mxu0 0.0
    %321 = vmatpush2.xpose.msra.mxu0 0.0
    %322 = vmatprep.subr.mxu0 0.0
    %323 = vmatpush2.xpose.msra.mxu0 0.0
    %324 = vmatprep.subr.mxu0 0.0
    %325 = vmatpush2.xpose.msra.mxu0 0.0
    %326 = vmatprep.subr.mxu0 0.0
    %327 = vmatpush2.xpose.msra.mxu0 0.0
    %328 = vmatprep.subr.mxu0 0.0
    %329 = vmatpush2.xpose.msra.mxu0 0.0
    %330 = vmatprep.subr.mxu0 0.0
    %331 = vmatpush2.xpose.msra.mxu0 0.0
    %332 = vmatprep.subr.mxu0 0.0
    %333 = vmatpush2.xpose.msra.mxu0 0.0
    %334 = vmatprep.subr.mxu0 0.0
    %335 = vmatpush2.xpose.msra.mxu0 0.0
    %336 = vmatprep.subr.mxu0 0.0
    %337 = vmatpush2.xpose.msra.mxu0 0.0
    %338 = vmatprep.mubr.f32.mxu0 0.0
    %339 = vmatmul.mubr.f32.gmra.mxu0 %v270
    %v340 = vpop.f32.mrf.mxu0
    %v341 = vadd.f32 0.0, %v340
    %v342 = vpop.f32.mrf.mxu0
    %343 = vdwg.mxu0
    %v344 = vmul.f32 %v264, 0.25
    %v345 = vmul.f32 %v341, 0.25
    %vm346 = vcmask 64512
    %v347 = vsel %vm346, %v344, -inf
    %348 = vmax.xlane.f32.xlu0 %v347
    %v349 = vpop.xlane.xlu0 %348
    %v350 = vsel %vm346, %v345, -inf
    %351 = vmax.xlane.f32.xlu0 %v350
    %v352 = vpop.xlane.xlu0 %351
    %v353 = vsub.f32 %v344, %v349
    %v354 = vsub.f32 %v345, %v352
    %v355 = vmul.f32 %v353, 1.442695
    %v356 = vpow.pop %v355
    %v357 = vmul.f32 %v354, 1.442695
    %v358 = vpow.pop %v357
    %v359 = vsel %vm346, %v356, 0.0
    %360 = vadd.xlane.f32.xlu0 %v359
    %v361 = vpop.xlane.xlu0 %360
    %v362 = vsel %vm346, %v358, 0.0
    %363 = vadd.xlane.f32.xlu0 %v362
    %v364 = vpop.xlane.xlu0 %363
    %v365 = vrcp.pop %v361
    %v366 = vrcp.pop %v364
    %v367 = vmul.f32 %v356, %v365
    %v368 = vmul.f32 %v358, %v366
    %v370 = vsel %vm346, %v367, 0
    %372 = vmatprep.subr.mxu0 0.0
    %373 = vmatpush1.msra.mxu0 0.0
    %374 = vmatprep.subr.mxu0 0.0
    %375 = vmatpush1.msra.mxu0 0.0
    %376 = vmatprep.subr.mxu0 0.0
    %377 = vmatpush1.msra.mxu0 0.0
    %378 = vmatprep.subr.mxu0 0.0
    %379 = vmatpush1.msra.mxu0 0.0
    %380 = vmatprep.subr.mxu0 0.0
    %381 = vmatpush1.msra.mxu0 0.0
    %382 = vmatprep.subr.mxu0 0.0
    %383 = vmatpush1.msra.mxu0 0.0
    %384 = vmatprep.subr.mxu0 0.0
    %385 = vmatpush1.msra.mxu0 0.0
    %386 = vmatprep.subr.mxu0 0.0
    %387 = vmatpush1.msra.mxu0 0.0
    %388 = vmatprep.subr.mxu0 0.0
    %389 = vmatpush1.msra.mxu0 0.0
    %390 = vmatprep.subr.mxu0 0.0
    %391 = vmatpush1.msra.mxu0 0.0
    %392 = vmatprep.subr.mxu0 0.0
    %393 = vmatpush1.msra.mxu0 0.0
    %394 = vmatprep.subr.mxu0 0.0
    %395 = vmatpush1.msra.mxu0 0.0
    %396 = vmatprep.subr.mxu0 0.0
    %397 = vmatpush1.msra.mxu0 0.0
    %398 = vmatprep.subr.mxu0 0.0
    %399 = vmatpush1.msra.mxu0 0.0
    %400 = vmatprep.subr.mxu0 0.0
    %401 = vmatpush1.msra.mxu0 0.0
    %402 = vmatprep.subr.mxu0 0.0
    %403 = vmatpush1.msra.mxu0 %v181
    %404 = vmatprep.subr.mxu0 0.0
    %405 = vmatpush2.msra.mxu0 0.0
    %406 = vmatprep.subr.mxu0 0.0
    %407 = vmatpush2.msra.mxu0 0.0
    %408 = vmatprep.subr.mxu0 0.0
    %409 = vmatpush2.msra.mxu0 0.0
    %410 = vmatprep.subr.mxu0 0.0
    %411 = vmatpush2.msra.mxu0 0.0
    %412 = vmatprep.subr.mxu0 0.0
    %413 = vmatpush2.msra.mxu0 0.0
    %414 = vmatprep.subr.mxu0 0.0
    %415 = vmatpush2.msra.mxu0 0.0
    %416 = vmatprep.subr.mxu0 0.0
    %417 = vmatpush2.msra.mxu0 0.0
    %418 = vmatprep.subr.mxu0 0.0
    %419 = vmatpush2.msra.mxu0 0.0
    %420 = vmatprep.subr.mxu0 0.0
    %421 = vmatpush2.msra.mxu0 0.0
    %422 = vmatprep.subr.mxu0 0.0
    %423 = vmatpush2.msra.mxu0 0.0
    %424 = vmatprep.subr.mxu0 0.0
    %425 = vmatpush2.msra.mxu0 0.0
    %426 = vmatprep.subr.mxu0 0.0
    %427 = vmatpush2.msra.mxu0 0.0
    %428 = vmatprep.subr.mxu0 0.0
    %429 = vmatpush2.msra.mxu0 0.0
    %430 = vmatprep.subr.mxu0 0.0
    %431 = vmatpush2.msra.mxu0 0.0
    %432 = vmatprep.subr.mxu0 0.0
    %433 = vmatpush2.msra.mxu0 0.0
    %434 = vmatprep.subr.mxu0 0.0
    %435 = vmatpush2.msra.mxu0 0.0
    %436 = vmatprep.mubr.f32.mxu0 0.0
    %437 = vmatmul.mubr.f32.gmra.mxu0 %v370
    %v438 = vpop.f32.mrf.mxu0
    %v439 = vadd.f32 0.0, %v438
    %v440 = vpop.f32.mrf.mxu0
    %441 = vdwg.mxu0
    %v443 = vsel %vm346, %v368, 0
    %445 = vmatprep.subr.mxu0 0.0
    %446 = vmatpush1.msra.mxu0 0.0
    %447 = vmatprep.subr.mxu0 0.0
    %448 = vmatpush1.msra.mxu0 0.0
    %449 = vmatprep.subr.mxu0 0.0
    %450 = vmatpush1.msra.mxu0 0.0
    %451 = vmatprep.subr.mxu0 0.0
    %452 = vmatpush1.msra.mxu0 0.0
    %453 = vmatprep.subr.mxu0 0.0
    %454 = vmatpush1.msra.mxu0 0.0
    %455 = vmatprep.subr.mxu0 0.0
    %456 = vmatpush1.msra.mxu0 0.0
    %457 = vmatprep.subr.mxu0 0.0
    %458 = vmatpush1.msra.mxu0 0.0
    %459 = vmatprep.subr.mxu0 0.0
    %460 = vmatpush1.msra.mxu0 0.0
    %461 = vmatprep.subr.mxu0 0.0
    %462 = vmatpush1.msra.mxu0 0.0
    %463 = vmatprep.subr.mxu0 0.0
    %464 = vmatpush1.msra.mxu0 0.0
    %465 = vmatprep.subr.mxu0 0.0
    %466 = vmatpush1.msra.mxu0 0.0
    %467 = vmatprep.subr.mxu0 0.0
    %468 = vmatpush1.msra.mxu0 0.0
    %469 = vmatprep.subr.mxu0 0.0
    %470 = vmatpush1.msra.mxu0 0.0
    %471 = vmatprep.subr.mxu0 0.0
    %472 = vmatpush1.msra.mxu0 0.0
    %473 = vmatprep.subr.mxu0 0.0
    %474 = vmatpush1.msra.mxu0 0.0
    %475 = vmatprep.subr.mxu0 0.0
    %476 = vmatpush1.msra.mxu0 %v187
    %477 = vmatprep.subr.mxu0 0.0
    %478 = vmatpush2.msra.mxu0 0.0
    %479 = vmatprep.subr.mxu0 0.0
    %480 = vmatpush2.msra.mxu0 0.0
    %481 = vmatprep.subr.mxu0 0.0
    %482 = vmatpush2.msra.mxu0 0.0
    %483 = vmatprep.subr.mxu0 0.0
    %484 = vmatpush2.msra.mxu0 0.0
    %485 = vmatprep.subr.mxu0 0.0
    %486 = vmatpush2.msra.mxu0 0.0
    %487 = vmatprep.subr.mxu0 0.0
    %488 = vmatpush2.msra.mxu0 0.0
    %489 = vmatprep.subr.mxu0 0.0
    %490 = vmatpush2.msra.mxu0 0.0
    %491 = vmatprep.subr.mxu0 0.0
    %492 = vmatpush2.msra.mxu0 0.0
    %493 = vmatprep.subr.mxu0 0.0
    %494 = vmatpush2.msra.mxu0 0.0
    %495 = vmatprep.subr.mxu0 0.0
    %496 = vmatpush2.msra.mxu0 0.0
    %497 = vmatprep.subr.mxu0 0.0
    %498 = vmatpush2.msra.mxu0 0.0
    %499 = vmatprep.subr.mxu0 0.0
    %500 = vmatpush2.msra.mxu0 0.0
    %501 = vmatprep.subr.mxu0 0.0
    %502 = vmatpush2.msra.mxu0 0.0
    %503 = vmatprep.subr.mxu0 0.0
    %504 = vmatpush2.msra.mxu0 0.0
    %505 = vmatprep.subr.mxu0 0.0
    %506 = vmatpush2.msra.mxu0 0.0
    %507 = vmatprep.subr.mxu0 0.0
    %508 = vmatpush2.msra.mxu0 0.0
    %509 = vmatprep.mubr.f32.mxu0 0.0
    %510 = vmatmul.mubr.f32.gmra.mxu0 %v443
    %v511 = vpop.f32.mrf.mxu0
    %v512 = vadd.f32 0.0, %v511
    %v513 = vpop.f32.mrf.mxu0
    %514 = vdwg.mxu0
    %515 = vrot.lane.b32.xlu0 %v179, 112
    %v516 = vpop.permute.xlu0 %515
    %517 = vrot.lane.b32.xlu0 %v179, 48
    %v518 = vpop.permute.xlu0 %517
    %v519 = vsel %vm192, %v516, 0
    %v521 = vsel %vm192, %v518, 0
    %523 = vmatprep.subr.mxu0 0.0
    %524 = vmatpush1.xpose.msra.mxu0 0.0
    %525 = vmatprep.subr.mxu0 0.0
    %526 = vmatpush1.xpose.msra.mxu0 0.0
    %527 = vmatprep.subr.mxu0 0.0
    %528 = vmatpush1.xpose.msra.mxu0 0.0
    %529 = vmatprep.subr.mxu0 0.0
    %530 = vmatpush1.xpose.msra.mxu0 0.0
    %531 = vmatprep.subr.mxu0 0.0
    %532 = vmatpush1.xpose.msra.mxu0 0.0
    %533 = vmatprep.subr.mxu0 0.0
    %534 = vmatpush1.xpose.msra.mxu0 0.0
    %535 = vmatprep.subr.mxu0 0.0
    %536 = vmatpush1.xpose.msra.mxu0 0.0
    %537 = vmatprep.subr.mxu0 0.0
    %538 = vmatpush1.xpose.msra.mxu0 0.0
    %539 = vmatprep.subr.mxu0 0.0
    %540 = vmatpush1.xpose.msra.mxu0 0.0
    %541 = vmatprep.subr.mxu0 0.0
    %542 = vmatpush1.xpose.msra.mxu0 0.0
    %543 = vmatprep.subr.mxu0 0.0
    %544 = vmatpush1.xpose.msra.mxu0 0.0
    %545 = vmatprep.subr.mxu0 0.0
    %546 = vmatpush1.xpose.msra.mxu0 0.0
    %547 = vmatprep.subr.mxu0 0.0
    %548 = vmatpush1.xpose.msra.mxu0 0.0
    %549 = vmatprep.subr.mxu0 0.0
    %550 = vmatpush1.xpose.msra.mxu0 0.0
    %551 = vmatprep.subr.mxu0 0.0
    %552 = vmatpush1.xpose.msra.mxu0 0.0
    %553 = vmatprep.subr.mxu0 0.0
    %554 = vmatpush1.xpose.msra.mxu0 %v521
    %555 = vmatprep.subr.mxu0 0.0
    %556 = vmatpush2.xpose.msra.mxu0 0.0
    %557 = vmatprep.subr.mxu0 0.0
    %558 = vmatpush2.xpose.msra.mxu0 0.0
    %559 = vmatprep.subr.mxu0 0.0
    %560 = vmatpush2.xpose.msra.mxu0 0.0
    %561 = vmatprep.subr.mxu0 0.0
    %562 = vmatpush2.xpose.msra.mxu0 0.0
    %563 = vmatprep.subr.mxu0 0.0
    %564 = vmatpush2.xpose.msra.mxu0 0.0
    %565 = vmatprep.subr.mxu0 0.0
    %566 = vmatpush2.xpose.msra.mxu0 0.0
    %567 = vmatprep.subr.mxu0 0.0
    %568 = vmatpush2.xpose.msra.mxu0 0.0
    %569 = vmatprep.subr.mxu0 0.0
    %570 = vmatpush2.xpose.msra.mxu0 0.0
    %571 = vmatprep.subr.mxu0 0.0
    %572 = vmatpush2.xpose.msra.mxu0 0.0
    %573 = vmatprep.subr.mxu0 0.0
    %574 = vmatpush2.xpose.msra.mxu0 0.0
    %575 = vmatprep.subr.mxu0 0.0
    %576 = vmatpush2.xpose.msra.mxu0 0.0
    %577 = vmatprep.subr.mxu0 0.0
    %578 = vmatpush2.xpose.msra.mxu0 0.0
    %579 = vmatprep.subr.mxu0 0.0
    %580 = vmatpush2.xpose.msra.mxu0 0.0
    %581 = vmatprep.subr.mxu0 0.0
    %582 = vmatpush2.xpose.msra.mxu0 0.0
    %583 = vmatprep.subr.mxu0 0.0
    %584 = vmatpush2.xpose.msra.mxu0 0.0
    %585 = vmatprep.subr.mxu0 0.0
    %586 = vmatpush2.xpose.msra.mxu0 0.0
    %587 = vmatprep.mubr.f32.mxu0 0.0
    %588 = vmatmul.mubr.f32.gmra.mxu0 %v519
    %v589 = vpop.f32.mrf.mxu0
    %v590 = vadd.f32 0.0, %v589
    %v591 = vpop.f32.mrf.mxu0
    %592 = vdwg.mxu0
    %593 = vrot.lane.b32.xlu0 %v185, 112
    %v594 = vpop.permute.xlu0 %593
    %595 = vrot.lane.b32.xlu0 %v185, 48
    %v596 = vpop.permute.xlu0 %595
    %v597 = vsel %vm192, %v594, 0
    %v599 = vsel %vm192, %v596, 0
    %601 = vmatprep.subr.mxu0 0.0
    %602 = vmatpush1.xpose.msra.mxu0 0.0
    %603 = vmatprep.subr.mxu0 0.0
    %604 = vmatpush1.xpose.msra.mxu0 0.0
    %605 = vmatprep.subr.mxu0 0.0
    %606 = vmatpush1.xpose.msra.mxu0 0.0
    %607 = vmatprep.subr.mxu0 0.0
    %608 = vmatpush1.xpose.msra.mxu0 0.0
    %609 = vmatprep.subr.mxu0 0.0
    %610 = vmatpush1.xpose.msra.mxu0 0.0
    %611 = vmatprep.subr.mxu0 0.0
    %612 = vmatpush1.xpose.msra.mxu0 0.0
    %613 = vmatprep.subr.mxu0 0.0
    %614 = vmatpush1.xpose.msra.mxu0 0.0
    %615 = vmatprep.subr.mxu0 0.0
    %616 = vmatpush1.xpose.msra.mxu0 0.0
    %617 = vmatprep.subr.mxu0 0.0
    %618 = vmatpush1.xpose.msra.mxu0 0.0
    %619 = vmatprep.subr.mxu0 0.0
    %620 = vmatpush1.xpose.msra.mxu0 0.0
    %621 = vmatprep.subr.mxu0 0.0
    %622 = vmatpush1.xpose.msra.mxu0 0.0
    %623 = vmatprep.subr.mxu0 0.0
    %624 = vmatpush1.xpose.msra.mxu0 0.0
    %625 = vmatprep.subr.mxu0 0.0
    %626 = vmatpush1.xpose.msra.mxu0 0.0
    %627 = vmatprep.subr.mxu0 0.0
    %628 = vmatpush1.xpose.msra.mxu0 0.0
    %629 = vmatprep.subr.mxu0 0.0
    %630 = vmatpush1.xpose.msra.mxu0 0.0
    %631 = vmatprep.subr.mxu0 0.0
    %632 = vmatpush1.xpose.msra.mxu0 %v599
    %633 = vmatprep.subr.mxu0 0.0
    %634 = vmatpush2.xpose.msra.mxu0 0.0
    %635 = vmatprep.subr.mxu0 0.0
    %636 = vmatpush2.xpose.msra.mxu0 0.0
    %637 = vmatprep.subr.mxu0 0.0
    %638 = vmatpush2.xpose.msra.mxu0 0.0
    %639 = vmatprep.subr.mxu0 0.0
    %640 = vmatpush2.xpose.msra.mxu0 0.0
    %641 = vmatprep.subr.mxu0 0.0
    %642 = vmatpush2.xpose.msra.mxu0 0.0
    %643 = vmatprep.subr.mxu0 0.0
    %644 = vmatpush2.xpose.msra.mxu0 0.0
    %645 = vmatprep.subr.mxu0 0.0
    %646 = vmatpush2.xpose.msra.mxu0 0.0
    %647 = vmatprep.subr.mxu0 0.0
    %648 = vmatpush2.xpose.msra.mxu0 0.0
    %649 = vmatprep.subr.mxu0 0.0
    %650 = vmatpush2.xpose.msra.mxu0 0.0
    %651 = vmatprep.subr.mxu0 0.0
    %652 = vmatpush2.xpose.msra.mxu0 0.0
    %653 = vmatprep.subr.mxu0 0.0
    %654 = vmatpush2.xpose.msra.mxu0 0.0
    %655 = vmatprep.subr.mxu0 0.0
    %656 = vmatpush2.xpose.msra.mxu0 0.0
    %657 = vmatprep.subr.mxu0 0.0
    %658 = vmatpush2.xpose.msra.mxu0 0.0
    %659 = vmatprep.subr.mxu0 0.0
    %660 = vmatpush2.xpose.msra.mxu0 0.0
    %661 = vmatprep.subr.mxu0 0.0
    %662 = vmatpush2.xpose.msra.mxu0 0.0
    %663 = vmatprep.subr.mxu0 0.0
    %664 = vmatpush2.xpose.msra.mxu0 0.0
    %665 = vmatprep.mubr.f32.mxu0 0.0
    %666 = vmatmul.mubr.f32.gmra.mxu0 %v597
    %v667 = vpop.f32.mrf.mxu0
    %v668 = vadd.f32 0.0, %v667
    %v669 = vpop.f32.mrf.mxu0
    %670 = vdwg.mxu0
    %v671 = vmul.f32 %v590, 0.25
    %v672 = vmul.f32 %v668, 0.25
    %v673 = vsel %vm346, %v671, -inf
    %674 = vmax.xlane.f32.xlu0 %v673
    %v675 = vpop.xlane.xlu0 %674
    %v676 = vsel %vm346, %v672, -inf
    %677 = vmax.xlane.f32.xlu0 %v676
    %v678 = vpop.xlane.xlu0 %677
    %v679 = vsub.f32 %v671, %v675
    %v680 = vsub.f32 %v672, %v678
    %v681 = vmul.f32 %v679, 1.442695
    %v682 = vpow.pop %v681
    %v683 = vmul.f32 %v680, 1.442695
    %v684 = vpow.pop %v683
    %v685 = vsel %vm346, %v682, 0.0
    %686 = vadd.xlane.f32.xlu0 %v685
    %v687 = vpop.xlane.xlu0 %686
    %v688 = vsel %vm346, %v684, 0.0
    %689 = vadd.xlane.f32.xlu0 %v688
    %v690 = vpop.xlane.xlu0 %689
    %v691 = vrcp.pop %v687
    %v692 = vrcp.pop %v690
    %v693 = vmul.f32 %v682, %v691
    %v694 = vmul.f32 %v684, %v692
    %696 = vrot.lane.b32.xlu0 %v181, 112
    %v697 = vpop.permute.xlu0 %696
    %v700 = vsel %vm346, %v693, 0
    %702 = vmatprep.subr.mxu0 0.0
    %703 = vmatpush1.msra.mxu0 0.0
    %704 = vmatprep.subr.mxu0 0.0
    %705 = vmatpush1.msra.mxu0 0.0
    %706 = vmatprep.subr.mxu0 0.0
    %707 = vmatpush1.msra.mxu0 0.0
    %708 = vmatprep.subr.mxu0 0.0
    %709 = vmatpush1.msra.mxu0 0.0
    %710 = vmatprep.subr.mxu0 0.0
    %711 = vmatpush1.msra.mxu0 0.0
    %712 = vmatprep.subr.mxu0 0.0
    %713 = vmatpush1.msra.mxu0 0.0
    %714 = vmatprep.subr.mxu0 0.0
    %715 = vmatpush1.msra.mxu0 0.0
    %716 = vmatprep.subr.mxu0 0.0
    %717 = vmatpush1.msra.mxu0 0.0
    %718 = vmatprep.subr.mxu0 0.0
    %719 = vmatpush1.msra.mxu0 0.0
    %720 = vmatprep.subr.mxu0 0.0
    %721 = vmatpush1.msra.mxu0 0.0
    %722 = vmatprep.subr.mxu0 0.0
    %723 = vmatpush1.msra.mxu0 0.0
    %724 = vmatprep.subr.mxu0 0.0
    %725 = vmatpush1.msra.mxu0 0.0
    %726 = vmatprep.subr.mxu0 0.0
    %727 = vmatpush1.msra.mxu0 0.0
    %728 = vmatprep.subr.mxu0 0.0
    %729 = vmatpush1.msra.mxu0 0.0
    %730 = vmatprep.subr.mxu0 0.0
    %731 = vmatpush1.msra.mxu0 0.0
    %732 = vmatprep.subr.mxu0 0.0
    %733 = vmatpush1.msra.mxu0 %v697
    %734 = vmatprep.subr.mxu0 0.0
    %735 = vmatpush2.msra.mxu0 0.0
    %736 = vmatprep.subr.mxu0 0.0
    %737 = vmatpush2.msra.mxu0 0.0
    %738 = vmatprep.subr.mxu0 0.0
    %739 = vmatpush2.msra.mxu0 0.0
    %740 = vmatprep.subr.mxu0 0.0
    %741 = vmatpush2.msra.mxu0 0.0
    %742 = vmatprep.subr.mxu0 0.0
    %743 = vmatpush2.msra.mxu0 0.0
    %744 = vmatprep.subr.mxu0 0.0
    %745 = vmatpush2.msra.mxu0 0.0
    %746 = vmatprep.subr.mxu0 0.0
    %747 = vmatpush2.msra.mxu0 0.0
    %748 = vmatprep.subr.mxu0 0.0
    %749 = vmatpush2.msra.mxu0 0.0
    %750 = vmatprep.subr.mxu0 0.0
    %751 = vmatpush2.msra.mxu0 0.0
    %752 = vmatprep.subr.mxu0 0.0
    %753 = vmatpush2.msra.mxu0 0.0
    %754 = vmatprep.subr.mxu0 0.0
    %755 = vmatpush2.msra.mxu0 0.0
    %756 = vmatprep.subr.mxu0 0.0
    %757 = vmatpush2.msra.mxu0 0.0
    %758 = vmatprep.subr.mxu0 0.0
    %759 = vmatpush2.msra.mxu0 0.0
    %760 = vmatprep.subr.mxu0 0.0
    %761 = vmatpush2.msra.mxu0 0.0
    %762 = vmatprep.subr.mxu0 0.0
    %763 = vmatpush2.msra.mxu0 0.0
    %764 = vmatprep.subr.mxu0 0.0
    %765 = vmatpush2.msra.mxu0 0.0
    %766 = vmatprep.mubr.f32.mxu0 0.0
    %767 = vmatmul.mubr.f32.gmra.mxu0 %v700
    %v768 = vpop.f32.mrf.mxu0
    %v769 = vadd.f32 0.0, %v768
    %v770 = vpop.f32.mrf.mxu0
    %771 = vdwg.mxu0
    %773 = vrot.lane.b32.xlu0 %v187, 112
    %v774 = vpop.permute.xlu0 %773
    %v777 = vsel %vm346, %v694, 0
    %779 = vmatprep.subr.mxu0 0.0
    %780 = vmatpush1.msra.mxu0 0.0
    %781 = vmatprep.subr.mxu0 0.0
    %782 = vmatpush1.msra.mxu0 0.0
    %783 = vmatprep.subr.mxu0 0.0
    %784 = vmatpush1.msra.mxu0 0.0
    %785 = vmatprep.subr.mxu0 0.0
    %786 = vmatpush1.msra.mxu0 0.0
    %787 = vmatprep.subr.mxu0 0.0
    %788 = vmatpush1.msra.mxu0 0.0
    %789 = vmatprep.subr.mxu0 0.0
    %790 = vmatpush1.msra.mxu0 0.0
    %791 = vmatprep.subr.mxu0 0.0
    %792 = vmatpush1.msra.mxu0 0.0
    %793 = vmatprep.subr.mxu0 0.0
    %794 = vmatpush1.msra.mxu0 0.0
    %795 = vmatprep.subr.mxu0 0.0
    %796 = vmatpush1.msra.mxu0 0.0
    %797 = vmatprep.subr.mxu0 0.0
    %798 = vmatpush1.msra.mxu0 0.0
    %799 = vmatprep.subr.mxu0 0.0
    %800 = vmatpush1.msra.mxu0 0.0
    %801 = vmatprep.subr.mxu0 0.0
    %802 = vmatpush1.msra.mxu0 0.0
    %803 = vmatprep.subr.mxu0 0.0
    %804 = vmatpush1.msra.mxu0 0.0
    %805 = vmatprep.subr.mxu0 0.0
    %806 = vmatpush1.msra.mxu0 0.0
    %807 = vmatprep.subr.mxu0 0.0
    %808 = vmatpush1.msra.mxu0 0.0
    %809 = vmatprep.subr.mxu0 0.0
    %810 = vmatpush1.msra.mxu0 %v774
    %811 = vmatprep.subr.mxu0 0.0
    %812 = vmatpush2.msra.mxu0 0.0
    %813 = vmatprep.subr.mxu0 0.0
    %814 = vmatpush2.msra.mxu0 0.0
    %815 = vmatprep.subr.mxu0 0.0
    %816 = vmatpush2.msra.mxu0 0.0
    %817 = vmatprep.subr.mxu0 0.0
    %818 = vmatpush2.msra.mxu0 0.0
    %819 = vmatprep.subr.mxu0 0.0
    %820 = vmatpush2.msra.mxu0 0.0
    %821 = vmatprep.subr.mxu0 0.0
    %822 = vmatpush2.msra.mxu0 0.0
    %823 = vmatprep.subr.mxu0 0.0
    %824 = vmatpush2.msra.mxu0 0.0
    %825 = vmatprep.subr.mxu0 0.0
    %826 = vmatpush2.msra.mxu0 0.0
    %827 = vmatprep.subr.mxu0 0.0
    %828 = vmatpush2.msra.mxu0 0.0
    %829 = vmatprep.subr.mxu0 0.0
    %830 = vmatpush2.msra.mxu0 0.0
    %831 = vmatprep.subr.mxu0 0.0
    %832 = vmatpush2.msra.mxu0 0.0
    %833 = vmatprep.subr.mxu0 0.0
    %834 = vmatpush2.msra.mxu0 0.0
    %835 = vmatprep.subr.mxu0 0.0
    %836 = vmatpush2.msra.mxu0 0.0
    %837 = vmatprep.subr.mxu0 0.0
    %838 = vmatpush2.msra.mxu0 0.0
    %839 = vmatprep.subr.mxu0 0.0
    %840 = vmatpush2.msra.mxu0 0.0
    %841 = vmatprep.subr.mxu0 0.0
    %842 = vmatpush2.msra.mxu0 0.0
    %843 = vmatprep.mubr.f32.mxu0 0.0
    %844 = vmatmul.mubr.f32.gmra.mxu0 %v777
    %v845 = vpop.f32.mrf.mxu0
    %v846 = vadd.f32 0.0, %v845
    %v847 = vpop.f32.mrf.mxu0
    %848 = vdwg.mxu0
    %v850 = vsel %vm192, %v769, 0
    %v853 = vsel %vm192, %v846, 0
    %855 = vmatprep.subr.mxu0 0.0
    %856 = vmatpush1.msra.mxu0 0.0
    %857 = vmatprep.subr.mxu0 0.0
    %858 = vmatpush1.msra.mxu0 0.0
    %859 = vmatprep.subr.mxu0 0.0
    %860 = vmatpush1.msra.mxu0 0.0
    %861 = vmatprep.subr.mxu0 0.0
    %862 = vmatpush1.msra.mxu0 0.0
    %863 = vmatprep.subr.mxu0 0.0
    %864 = vmatpush1.msra.mxu0 0.0
    %865 = vmatprep.subr.mxu0 0.0
    %866 = vmatpush1.msra.mxu0 0.0
    %867 = vmatprep.subr.mxu0 0.0
    %868 = vmatpush1.msra.mxu0 0.0
    %869 = vmatprep.subr.mxu0 0.0
    %870 = vmatpush1.msra.mxu0 0.0
    %871 = vmatprep.subr.mxu0 0.0
    %872 = vmatpush1.msra.mxu0 0.0
    %873 = vmatprep.subr.mxu0 0.0
    %874 = vmatpush1.msra.mxu0 0.0
    %875 = vmatprep.subr.mxu0 0.0
    %876 = vmatpush1.msra.mxu0 0.0
    %877 = vmatprep.subr.mxu0 0.0
    %878 = vmatpush1.msra.mxu0 0.0
    %879 = vmatprep.subr.mxu0 0.0
    %880 = vmatpush1.msra.mxu0 0.0
    %881 = vmatprep.subr.mxu0 0.0
    %882 = vmatpush1.msra.mxu0 0.0
    %883 = vmatprep.subr.mxu0 0.0
    %884 = vmatpush1.msra.mxu0 %v55
    %885 = vmatprep.subr.mxu0 0.0
    %886 = vmatpush1.msra.mxu0 %v54
    %887 = vmatprep.subr.mxu0 0.0
    %888 = vmatpush2.msra.mxu0 0.0
    %889 = vmatprep.subr.mxu0 0.0
    %890 = vmatpush2.msra.mxu0 0.0
    %891 = vmatprep.subr.mxu0 0.0
    %892 = vmatpush2.msra.mxu0 0.0
    %893 = vmatprep.subr.mxu0 0.0
    %894 = vmatpush2.msra.mxu0 0.0
    %895 = vmatprep.subr.mxu0 0.0
    %896 = vmatpush2.msra.mxu0 0.0
    %897 = vmatprep.subr.mxu0 0.0
    %898 = vmatpush2.msra.mxu0 0.0
    %899 = vmatprep.subr.mxu0 0.0
    %900 = vmatpush2.msra.mxu0 0.0
    %901 = vmatprep.subr.mxu0 0.0
    %902 = vmatpush2.msra.mxu0 0.0
    %903 = vmatprep.subr.mxu0 0.0
    %904 = vmatpush2.msra.mxu0 0.0
    %905 = vmatprep.subr.mxu0 0.0
    %906 = vmatpush2.msra.mxu0 0.0
    %907 = vmatprep.subr.mxu0 0.0
    %908 = vmatpush2.msra.mxu0 0.0
    %909 = vmatprep.subr.mxu0 0.0
    %910 = vmatpush2.msra.mxu0 0.0
    %911 = vmatprep.subr.mxu0 0.0
    %912 = vmatpush2.msra.mxu0 0.0
    %913 = vmatprep.subr.mxu0 0.0
    %914 = vmatpush2.msra.mxu0 0.0
    %915 = vmatprep.subr.mxu0 0.0
    %916 = vmatpush2.msra.mxu0 0.0
    %917 = vmatprep.subr.mxu0 0.0
    %918 = vmatpush2.msra.mxu0 0.0
    %919 = vmatprep.mubr.f32.mxu0 0.0
    %920 = vmatmul.mubr.f32.gmra.mxu0 %v850
    %v921 = vpop.f32.mrf.mxu0
    %v922 = vadd.f32 0.0, %v921
    %v923 = vpop.f32.mrf.mxu0
    %924 = vmatprep.mubr.f32.mxu0 0.0
    %925 = vmatmul.mubr.f32.gmra.mxu0 %v853
    %v926 = vpop.f32.mrf.mxu0
    %v927 = vadd.f32 0.0, %v926
    %v928 = vpop.f32.mrf.mxu0
    %929 = vdwg.mxu0
    %v931 = vsel %vm192, %v439, 0
    %v934 = vsel %vm192, %v512, 0
    %936 = vmatprep.subr.mxu0 0.0
    %937 = vmatpush1.msra.mxu0 0.0
    %938 = vmatprep.subr.mxu0 0.0
    %939 = vmatpush1.msra.mxu0 0.0
    %940 = vmatprep.subr.mxu0 0.0
    %941 = vmatpush1.msra.mxu0 0.0
    %942 = vmatprep.subr.mxu0 0.0
    %943 = vmatpush1.msra.mxu0 0.0
    %944 = vmatprep.subr.mxu0 0.0
    %945 = vmatpush1.msra.mxu0 0.0
    %946 = vmatprep.subr.mxu0 0.0
    %947 = vmatpush1.msra.mxu0 0.0
    %948 = vmatprep.subr.mxu0 0.0
    %949 = vmatpush1.msra.mxu0 0.0
    %950 = vmatprep.subr.mxu0 0.0
    %951 = vmatpush1.msra.mxu0 0.0
    %952 = vmatprep.subr.mxu0 0.0
    %953 = vmatpush1.msra.mxu0 0.0
    %954 = vmatprep.subr.mxu0 0.0
    %955 = vmatpush1.msra.mxu0 0.0
    %956 = vmatprep.subr.mxu0 0.0
    %957 = vmatpush1.msra.mxu0 0.0
    %958 = vmatprep.subr.mxu0 0.0
    %959 = vmatpush1.msra.mxu0 0.0
    %960 = vmatprep.subr.mxu0 0.0
    %961 = vmatpush1.msra.mxu0 0.0
    %962 = vmatprep.subr.mxu0 0.0
    %963 = vmatpush1.msra.mxu0 0.0
    %964 = vmatprep.subr.mxu0 0.0
    %965 = vmatpush1.msra.mxu0 %v53
    %966 = vmatprep.subr.mxu0 0.0
    %967 = vmatpush1.msra.mxu0 %v52
    %968 = vmatprep.subr.mxu0 0.0
    %969 = vmatpush2.msra.mxu0 0.0
    %970 = vmatprep.subr.mxu0 0.0
    %971 = vmatpush2.msra.mxu0 0.0
    %972 = vmatprep.subr.mxu0 0.0
    %973 = vmatpush2.msra.mxu0 0.0
    %974 = vmatprep.subr.mxu0 0.0
    %975 = vmatpush2.msra.mxu0 0.0
    %976 = vmatprep.subr.mxu0 0.0
    %977 = vmatpush2.msra.mxu0 0.0
    %978 = vmatprep.subr.mxu0 0.0
    %979 = vmatpush2.msra.mxu0 0.0
    %980 = vmatprep.subr.mxu0 0.0
    %981 = vmatpush2.msra.mxu0 0.0
    %982 = vmatprep.subr.mxu0 0.0
    %983 = vmatpush2.msra.mxu0 0.0
    %984 = vmatprep.subr.mxu0 0.0
    %985 = vmatpush2.msra.mxu0 0.0
    %986 = vmatprep.subr.mxu0 0.0
    %987 = vmatpush2.msra.mxu0 0.0
    %988 = vmatprep.subr.mxu0 0.0
    %989 = vmatpush2.msra.mxu0 0.0
    %990 = vmatprep.subr.mxu0 0.0
    %991 = vmatpush2.msra.mxu0 0.0
    %992 = vmatprep.subr.mxu0 0.0
    %993 = vmatpush2.msra.mxu0 0.0
    %994 = vmatprep.subr.mxu0 0.0
    %995 = vmatpush2.msra.mxu0 0.0
    %996 = vmatprep.subr.mxu0 0.0
    %997 = vmatpush2.msra.mxu0 0.0
    %998 = vmatprep.subr.mxu0 0.0
    %999 = vmatpush2.msra.mxu0 0.0
    %1000 = vmatprep.mubr.f32.mxu0 0.0
    %1001 = vmatmul.mubr.f32.gmra.mxu0 %v931
    %v1002 = vpop.f32.mrf.mxu0
    %v1003 = vadd.f32 %v922, %v1002
    %v1004 = vpop.f32.mrf.mxu0
    %1005 = vmatprep.mubr.f32.mxu0 0.0
    %1006 = vmatmul.mubr.f32.gmra.mxu0 %v934
    %v1007 = vpop.f32.mrf.mxu0
    %v1008 = vadd.f32 %v927, %v1007
    %v1009 = vpop.f32.mrf.mxu0
    %1010 = vdwg.mxu0
    %1011 = vrot.lane.b32.xlu0 %v179, 96
    %v1012 = vpop.permute.xlu0 %1011
    %1013 = vrot.lane.b32.xlu0 %v179, 32
    %v1014 = vpop.permute.xlu0 %1013
    %v1015 = vsel %vm192, %v1012, 0
    %v1017 = vsel %vm192, %v1014, 0
    %1019 = vmatprep.subr.mxu0 0.0
    %1020 = vmatpush1.xpose.msra.mxu0 0.0
    %1021 = vmatprep.subr.mxu0 0.0
    %1022 = vmatpush1.xpose.msra.mxu0 0.0
    %1023 = vmatprep.subr.mxu0 0.0
    %1024 = vmatpush1.xpose.msra.mxu0 0.0
    %1025 = vmatprep.subr.mxu0 0.0
    %1026 = vmatpush1.xpose.msra.mxu0 0.0
    %1027 = vmatprep.subr.mxu0 0.0
    %1028 = vmatpush1.xpose.msra.mxu0 0.0
    %1029 = vmatprep.subr.mxu0 0.0
    %1030 = vmatpush1.xpose.msra.mxu0 0.0
    %1031 = vmatprep.subr.mxu0 0.0
    %1032 = vmatpush1.xpose.msra.mxu0 0.0
    %1033 = vmatprep.subr.mxu0 0.0
    %1034 = vmatpush1.xpose.msra.mxu0 0.0
    %1035 = vmatprep.subr.mxu0 0.0
    %1036 = vmatpush1.xpose.msra.mxu0 0.0
    %1037 = vmatprep.subr.mxu0 0.0
    %1038 = vmatpush1.xpose.msra.mxu0 0.0
    %1039 = vmatprep.subr.mxu0 0.0
    %1040 = vmatpush1.xpose.msra.mxu0 0.0
    %1041 = vmatprep.subr.mxu0 0.0
    %1042 = vmatpush1.xpose.msra.mxu0 0.0
    %1043 = vmatprep.subr.mxu0 0.0
    %1044 = vmatpush1.xpose.msra.mxu0 0.0
    %1045 = vmatprep.subr.mxu0 0.0
    %1046 = vmatpush1.xpose.msra.mxu0 0.0
    %1047 = vmatprep.subr.mxu0 0.0
    %1048 = vmatpush1.xpose.msra.mxu0 0.0
    %1049 = vmatprep.subr.mxu0 0.0
    %1050 = vmatpush1.xpose.msra.mxu0 %v1017
    %1051 = vmatprep.subr.mxu0 0.0
    %1052 = vmatpush2.xpose.msra.mxu0 0.0
    %1053 = vmatprep.subr.mxu0 0.0
    %1054 = vmatpush2.xpose.msra.mxu0 0.0
    %1055 = vmatprep.subr.mxu0 0.0
    %1056 = vmatpush2.xpose.msra.mxu0 0.0
    %1057 = vmatprep.subr.mxu0 0.0
    %1058 = vmatpush2.xpose.msra.mxu0 0.0
    %1059 = vmatprep.subr.mxu0 0.0
    %1060 = vmatpush2.xpose.msra.mxu0 0.0
    %1061 = vmatprep.subr.mxu0 0.0
    %1062 = vmatpush2.xpose.msra.mxu0 0.0
    %1063 = vmatprep.subr.mxu0 0.0
    %1064 = vmatpush2.xpose.msra.mxu0 0.0
    %1065 = vmatprep.subr.mxu0 0.0
    %1066 = vmatpush2.xpose.msra.mxu0 0.0
    %1067 = vmatprep.subr.mxu0 0.0
    %1068 = vmatpush2.xpose.msra.mxu0 0.0
    %1069 = vmatprep.subr.mxu0 0.0
    %1070 = vmatpush2.xpose.msra.mxu0 0.0
    %1071 = vmatprep.subr.mxu0 0.0
    %1072 = vmatpush2.xpose.msra.mxu0 0.0
    %1073 = vmatprep.subr.mxu0 0.0
    %1074 = vmatpush2.xpose.msra.mxu0 0.0
    %1075 = vmatprep.subr.mxu0 0.0
    %1076 = vmatpush2.xpose.msra.mxu0 0.0
    %1077 = vmatprep.subr.mxu0 0.0
    %1078 = vmatpush2.xpose.msra.mxu0 0.0
    %1079 = vmatprep.subr.mxu0 0.0
    %1080 = vmatpush2.xpose.msra.mxu0 0.0
    %1081 = vmatprep.subr.mxu0 0.0
    %1082 = vmatpush2.xpose.msra.mxu0 0.0
    %1083 = vmatprep.mubr.f32.mxu0 0.0
    %1084 = vmatmul.mubr.f32.gmra.mxu0 %v1015
    %v1085 = vpop.f32.mrf.mxu0
    %v1086 = vadd.f32 0.0, %v1085
    %v1087 = vpop.f32.mrf.mxu0
    %1088 = vdwg.mxu0
    %1089 = vrot.lane.b32.xlu0 %v185, 96
    %v1090 = vpop.permute.xlu0 %1089
    %1091 = vrot.lane.b32.xlu0 %v185, 32
    %v1092 = vpop.permute.xlu0 %1091
    %v1093 = vsel %vm192, %v1090, 0
    %v1095 = vsel %vm192, %v1092, 0
    %1097 = vmatprep.subr.mxu0 0.0
    %1098 = vmatpush1.xpose.msra.mxu0 0.0
    %1099 = vmatprep.subr.mxu0 0.0
    %1100 = vmatpush1.xpose.msra.mxu0 0.0
    %1101 = vmatprep.subr.mxu0 0.0
    %1102 = vmatpush1.xpose.msra.mxu0 0.0
    %1103 = vmatprep.subr.mxu0 0.0
    %1104 = vmatpush1.xpose.msra.mxu0 0.0
    %1105 = vmatprep.subr.mxu0 0.0
    %1106 = vmatpush1.xpose.msra.mxu0 0.0
    %1107 = vmatprep.subr.mxu0 0.0
    %1108 = vmatpush1.xpose.msra.mxu0 0.0
    %1109 = vmatprep.subr.mxu0 0.0
    %1110 = vmatpush1.xpose.msra.mxu0 0.0
    %1111 = vmatprep.subr.mxu0 0.0
    %1112 = vmatpush1.xpose.msra.mxu0 0.0
    %1113 = vmatprep.subr.mxu0 0.0
    %1114 = vmatpush1.xpose.msra.mxu0 0.0
    %1115 = vmatprep.subr.mxu0 0.0
    %1116 = vmatpush1.xpose.msra.mxu0 0.0
    %1117 = vmatprep.subr.mxu0 0.0
    %1118 = vmatpush1.xpose.msra.mxu0 0.0
    %1119 = vmatprep.subr.mxu0 0.0
    %1120 = vmatpush1.xpose.msra.mxu0 0.0
    %1121 = vmatprep.subr.mxu0 0.0
    %1122 = vmatpush1.xpose.msra.mxu0 0.0
    %1123 = vmatprep.subr.mxu0 0.0
    %1124 = vmatpush1.xpose.msra.mxu0 0.0
    %1125 = vmatprep.subr.mxu0 0.0
    %1126 = vmatpush1.xpose.msra.mxu0 0.0
    %1127 = vmatprep.subr.mxu0 0.0
    %1128 = vmatpush1.xpose.msra.mxu0 %v1095
    %1129 = vmatprep.subr.mxu0 0.0
    %1130 = vmatpush2.xpose.msra.mxu0 0.0
    %1131 = vmatprep.subr.mxu0 0.0
    %1132 = vmatpush2.xpose.msra.mxu0 0.0
    %1133 = vmatprep.subr.mxu0 0.0
    %1134 = vmatpush2.xpose.msra.mxu0 0.0
    %1135 = vmatprep.subr.mxu0 0.0
    %1136 = vmatpush2.xpose.msra.mxu0 0.0
    %1137 = vmatprep.subr.mxu0 0.0
    %1138 = vmatpush2.xpose.msra.mxu0 0.0
    %1139 = vmatprep.subr.mxu0 0.0
    %1140 = vmatpush2.xpose.msra.mxu0 0.0
    %1141 = vmatprep.subr.mxu0 0.0
    %1142 = vmatpush2.xpose.msra.mxu0 0.0
    %1143 = vmatprep.subr.mxu0 0.0
    %1144 = vmatpush2.xpose.msra.mxu0 0.0
    %1145 = vmatprep.subr.mxu0 0.0
    %1146 = vmatpush2.xpose.msra.mxu0 0.0
    %1147 = vmatprep.subr.mxu0 0.0
    %1148 = vmatpush2.xpose.msra.mxu0 0.0
    %1149 = vmatprep.subr.mxu0 0.0
    %1150 = vmatpush2.xpose.msra.mxu0 0.0
    %1151 = vmatprep.subr.mxu0 0.0
    %1152 = vmatpush2.xpose.msra.mxu0 0.0
    %1153 = vmatprep.subr.mxu0 0.0
    %1154 = vmatpush2.xpose.msra.mxu0 0.0
    %1155 = vmatprep.subr.mxu0 0.0
    %1156 = vmatpush2.xpose.msra.mxu0 0.0
    %1157 = vmatprep.subr.mxu0 0.0
    %1158 = vmatpush2.xpose.msra.mxu0 0.0
    %1159 = vmatprep.subr.mxu0 0.0
    %1160 = vmatpush2.xpose.msra.mxu0 0.0
    %1161 = vmatprep.mubr.f32.mxu0 0.0
    %1162 = vmatmul.mubr.f32.gmra.mxu0 %v1093
    %v1163 = vpop.f32.mrf.mxu0
    %v1164 = vadd.f32 0.0, %v1163
    %v1165 = vpop.f32.mrf.mxu0
    %1166 = vdwg.mxu0
    %v1167 = vmul.f32 %v1086, 0.25
    %v1168 = vmul.f32 %v1164, 0.25
    %v1169 = vsel %vm346, %v1167, -inf
    %1170 = vmax.xlane.f32.xlu0 %v1169
    %v1171 = vpop.xlane.xlu0 %1170
    %v1172 = vsel %vm346, %v1168, -inf
    %1173 = vmax.xlane.f32.xlu0 %v1172
    %v1174 = vpop.xlane.xlu0 %1173
    %v1175 = vsub.f32 %v1167, %v1171
    %v1176 = vsub.f32 %v1168, %v1174
    %v1177 = vmul.f32 %v1175, 1.442695
    %v1178 = vpow.pop %v1177
    %v1179 = vmul.f32 %v1176, 1.442695
    %v1180 = vpow.pop %v1179
    %v1181 = vsel %vm346, %v1178, 0.0
    %1182 = vadd.xlane.f32.xlu0 %v1181
    %v1183 = vpop.xlane.xlu0 %1182
    %v1184 = vsel %vm346, %v1180, 0.0
    %1185 = vadd.xlane.f32.xlu0 %v1184
    %v1186 = vpop.xlane.xlu0 %1185
    %v1187 = vrcp.pop %v1183
    %v1188 = vrcp.pop %v1186
    %v1189 = vmul.f32 %v1178, %v1187
    %v1190 = vmul.f32 %v1180, %v1188
    %1191 = vrot.lane.b32.xlu0 %v181, 96
    %v1192 = vpop.permute.xlu0 %1191
    %v1195 = vsel %vm346, %v1189, 0
    %1197 = vmatprep.subr.mxu0 0.0
    %1198 = vmatpush1.msra.mxu0 0.0
    %1199 = vmatprep.subr.mxu0 0.0
    %1200 = vmatpush1.msra.mxu0 0.0
    %1201 = vmatprep.subr.mxu0 0.0
    %1202 = vmatpush1.msra.mxu0 0.0
    %1203 = vmatprep.subr.mxu0 0.0
    %1204 = vmatpush1.msra.mxu0 0.0
    %1205 = vmatprep.subr.mxu0 0.0
    %1206 = vmatpush1.msra.mxu0 0.0
    %1207 = vmatprep.subr.mxu0 0.0
    %1208 = vmatpush1.msra.mxu0 0.0
    %1209 = vmatprep.subr.mxu0 0.0
    %1210 = vmatpush1.msra.mxu0 0.0
    %1211 = vmatprep.subr.mxu0 0.0
    %1212 = vmatpush1.msra.mxu0 0.0
    %1213 = vmatprep.subr.mxu0 0.0
    %1214 = vmatpush1.msra.mxu0 0.0
    %1215 = vmatprep.subr.mxu0 0.0
    %1216 = vmatpush1.msra.mxu0 0.0
    %1217 = vmatprep.subr.mxu0 0.0
    %1218 = vmatpush1.msra.mxu0 0.0
    %1219 = vmatprep.subr.mxu0 0.0
    %1220 = vmatpush1.msra.mxu0 0.0
    %1221 = vmatprep.subr.mxu0 0.0
    %1222 = vmatpush1.msra.mxu0 0.0
    %1223 = vmatprep.subr.mxu0 0.0
    %1224 = vmatpush1.msra.mxu0 0.0
    %1225 = vmatprep.subr.mxu0 0.0
    %1226 = vmatpush1.msra.mxu0 0.0
    %1227 = vmatprep.subr.mxu0 0.0
    %1228 = vmatpush1.msra.mxu0 %v1192
    %1229 = vmatprep.subr.mxu0 0.0
    %1230 = vmatpush2.msra.mxu0 0.0
    %1231 = vmatprep.subr.mxu0 0.0
    %1232 = vmatpush2.msra.mxu0 0.0
    %1233 = vmatprep.subr.mxu0 0.0
    %1234 = vmatpush2.msra.mxu0 0.0
    %1235 = vmatprep.subr.mxu0 0.0
    %1236 = vmatpush2.msra.mxu0 0.0
    %1237 = vmatprep.subr.mxu0 0.0
    %1238 = vmatpush2.msra.mxu0 0.0
    %1239 = vmatprep.subr.mxu0 0.0
    %1240 = vmatpush2.msra.mxu0 0.0
    %1241 = vmatprep.subr.mxu0 0.0
    %1242 = vmatpush2.msra.mxu0 0.0
    %1243 = vmatprep.subr.mxu0 0.0
    %1244 = vmatpush2.msra.mxu0 0.0
    %1245 = vmatprep.subr.mxu0 0.0
    %1246 = vmatpush2.msra.mxu0 0.0
    %1247 = vmatprep.subr.mxu0 0.0
    %1248 = vmatpush2.msra.mxu0 0.0
    %1249 = vmatprep.subr.mxu0 0.0
    %1250 = vmatpush2.msra.mxu0 0.0
    %1251 = vmatprep.subr.mxu0 0.0
    %1252 = vmatpush2.msra.mxu0 0.0
    %1253 = vmatprep.subr.mxu0 0.0
    %1254 = vmatpush2.msra.mxu0 0.0
    %1255 = vmatprep.subr.mxu0 0.0
    %1256 = vmatpush2.msra.mxu0 0.0
    %1257 = vmatprep.subr.mxu0 0.0
    %1258 = vmatpush2.msra.mxu0 0.0
    %1259 = vmatprep.subr.mxu0 0.0
    %1260 = vmatpush2.msra.mxu0 0.0
    %1261 = vmatprep.mubr.f32.mxu0 0.0
    %1262 = vmatmul.mubr.f32.gmra.mxu0 %v1195
    %v1263 = vpop.f32.mrf.mxu0
    %v1264 = vadd.f32 0.0, %v1263
    %v1265 = vpop.f32.mrf.mxu0
    %1266 = vdwg.mxu0
    %1267 = vrot.lane.b32.xlu0 %v187, 96
    %v1268 = vpop.permute.xlu0 %1267
    %v1271 = vsel %vm346, %v1190, 0
    %1273 = vmatprep.subr.mxu0 0.0
    %1274 = vmatpush1.msra.mxu0 0.0
    %1275 = vmatprep.subr.mxu0 0.0
    %1276 = vmatpush1.msra.mxu0 0.0
    %1277 = vmatprep.subr.mxu0 0.0
    %1278 = vmatpush1.msra.mxu0 0.0
    %1279 = vmatprep.subr.mxu0 0.0
    %1280 = vmatpush1.msra.mxu0 0.0
    %1281 = vmatprep.subr.mxu0 0.0
    %1282 = vmatpush1.msra.mxu0 0.0
    %1283 = vmatprep.subr.mxu0 0.0
    %1284 = vmatpush1.msra.mxu0 0.0
    %1285 = vmatprep.subr.mxu0 0.0
    %1286 = vmatpush1.msra.mxu0 0.0
    %1287 = vmatprep.subr.mxu0 0.0
    %1288 = vmatpush1.msra.mxu0 0.0
    %1289 = vmatprep.subr.mxu0 0.0
    %1290 = vmatpush1.msra.mxu0 0.0
    %1291 = vmatprep.subr.mxu0 0.0
    %1292 = vmatpush1.msra.mxu0 0.0
    %1293 = vmatprep.subr.mxu0 0.0
    %1294 = vmatpush1.msra.mxu0 0.0
    %1295 = vmatprep.subr.mxu0 0.0
    %1296 = vmatpush1.msra.mxu0 0.0
    %1297 = vmatprep.subr.mxu0 0.0
    %1298 = vmatpush1.msra.mxu0 0.0
    %1299 = vmatprep.subr.mxu0 0.0
    %1300 = vmatpush1.msra.mxu0 0.0
    %1301 = vmatprep.subr.mxu0 0.0
    %1302 = vmatpush1.msra.mxu0 0.0
    %1303 = vmatprep.subr.mxu0 0.0
    %1304 = vmatpush1.msra.mxu0 %v1268
    %1305 = vmatprep.subr.mxu0 0.0
    %1306 = vmatpush2.msra.mxu0 0.0
    %1307 = vmatprep.subr.mxu0 0.0
    %1308 = vmatpush2.msra.mxu0 0.0
    %1309 = vmatprep.subr.mxu0 0.0
    %1310 = vmatpush2.msra.mxu0 0.0
    %1311 = vmatprep.subr.mxu0 0.0
    %1312 = vmatpush2.msra.mxu0 0.0
    %1313 = vmatprep.subr.mxu0 0.0
    %1314 = vmatpush2.msra.mxu0 0.0
    %1315 = vmatprep.subr.mxu0 0.0
    %1316 = vmatpush2.msra.mxu0 0.0
    %1317 = vmatprep.subr.mxu0 0.0
    %1318 = vmatpush2.msra.mxu0 0.0
    %1319 = vmatprep.subr.mxu0 0.0
    %1320 = vmatpush2.msra.mxu0 0.0
    %1321 = vmatprep.subr.mxu0 0.0
    %1322 = vmatpush2.msra.mxu0 0.0
    %1323 = vmatprep.subr.mxu0 0.0
    %1324 = vmatpush2.msra.mxu0 0.0
    %1325 = vmatprep.subr.mxu0 0.0
    %1326 = vmatpush2.msra.mxu0 0.0
    %1327 = vmatprep.subr.mxu0 0.0
    %1328 = vmatpush2.msra.mxu0 0.0
    %1329 = vmatprep.subr.mxu0 0.0
    %1330 = vmatpush2.msra.mxu0 0.0
    %1331 = vmatprep.subr.mxu0 0.0
    %1332 = vmatpush2.msra.mxu0 0.0
    %1333 = vmatprep.subr.mxu0 0.0
    %1334 = vmatpush2.msra.mxu0 0.0
    %1335 = vmatprep.subr.mxu0 0.0
    %1336 = vmatpush2.msra.mxu0 0.0
    %1337 = vmatprep.mubr.f32.mxu0 0.0
    %1338 = vmatmul.mubr.f32.gmra.mxu0 %v1271
    %v1339 = vpop.f32.mrf.mxu0
    %v1340 = vadd.f32 0.0, %v1339
    %v1341 = vpop.f32.mrf.mxu0
    %1342 = vdwg.mxu0
    %v1344 = vsel %vm192, %v1264, 0
    %v1347 = vsel %vm192, %v1340, 0
    %1349 = vmatprep.subr.mxu0 0.0
    %1350 = vmatpush1.msra.mxu0 0.0
    %1351 = vmatprep.subr.mxu0 0.0
    %1352 = vmatpush1.msra.mxu0 0.0
    %1353 = vmatprep.subr.mxu0 0.0
    %1354 = vmatpush1.msra.mxu0 0.0
    %1355 = vmatprep.subr.mxu0 0.0
    %1356 = vmatpush1.msra.mxu0 0.0
    %1357 = vmatprep.subr.mxu0 0.0
    %1358 = vmatpush1.msra.mxu0 0.0
    %1359 = vmatprep.subr.mxu0 0.0
    %1360 = vmatpush1.msra.mxu0 0.0
    %1361 = vmatprep.subr.mxu0 0.0
    %1362 = vmatpush1.msra.mxu0 0.0
    %1363 = vmatprep.subr.mxu0 0.0
    %1364 = vmatpush1.msra.mxu0 0.0
    %1365 = vmatprep.subr.mxu0 0.0
    %1366 = vmatpush1.msra.mxu0 0.0
    %1367 = vmatprep.subr.mxu0 0.0
    %1368 = vmatpush1.msra.mxu0 0.0
    %1369 = vmatprep.subr.mxu0 0.0
    %1370 = vmatpush1.msra.mxu0 0.0
    %1371 = vmatprep.subr.mxu0 0.0
    %1372 = vmatpush1.msra.mxu0 0.0
    %1373 = vmatprep.subr.mxu0 0.0
    %1374 = vmatpush1.msra.mxu0 0.0
    %1375 = vmatprep.subr.mxu0 0.0
    %1376 = vmatpush1.msra.mxu0 0.0
    %1377 = vmatprep.subr.mxu0 0.0
    %1378 = vmatpush1.msra.mxu0 %v57
    %1379 = vmatprep.subr.mxu0 0.0
    %1380 = vmatpush1.msra.mxu0 %v56
    %1381 = vmatprep.subr.mxu0 0.0
    %1382 = vmatpush2.msra.mxu0 0.0
    %1383 = vmatprep.subr.mxu0 0.0
    %1384 = vmatpush2.msra.mxu0 0.0
    %1385 = vmatprep.subr.mxu0 0.0
    %1386 = vmatpush2.msra.mxu0 0.0
    %1387 = vmatprep.subr.mxu0 0.0
    %1388 = vmatpush2.msra.mxu0 0.0
    %1389 = vmatprep.subr.mxu0 0.0
    %1390 = vmatpush2.msra.mxu0 0.0
    %1391 = vmatprep.subr.mxu0 0.0
    %1392 = vmatpush2.msra.mxu0 0.0
    %1393 = vmatprep.subr.mxu0 0.0
    %1394 = vmatpush2.msra.mxu0 0.0
    %1395 = vmatprep.subr.mxu0 0.0
    %1396 = vmatpush2.msra.mxu0 0.0
    %1397 = vmatprep.subr.mxu0 0.0
    %1398 = vmatpush2.msra.mxu0 0.0
    %1399 = vmatprep.subr.mxu0 0.0
    %1400 = vmatpush2.msra.mxu0 0.0
    %1401 = vmatprep.subr.mxu0 0.0
    %1402 = vmatpush2.msra.mxu0 0.0
    %1403 = vmatprep.subr.mxu0 0.0
    %1404 = vmatpush2.msra.mxu0 0.0
    %1405 = vmatprep.subr.mxu0 0.0
    %1406 = vmatpush2.msra.mxu0 0.0
    %1407 = vmatprep.subr.mxu0 0.0
    %1408 = vmatpush2.msra.mxu0 0.0
    %1409 = vmatprep.subr.mxu0 0.0
    %1410 = vmatpush2.msra.mxu0 0.0
    %1411 = vmatprep.subr.mxu0 0.0
    %1412 = vmatpush2.msra.mxu0 0.0
    %1413 = vmatprep.mubr.f32.mxu0 0.0
    %1414 = vmatmul.mubr.f32.gmra.mxu0 %v1344
    %v1415 = vpop.f32.mrf.mxu0
    %v1416 = vadd.f32 0.0, %v1415
    %v1417 = vpop.f32.mrf.mxu0
    %1418 = vmatprep.mubr.f32.mxu0 0.0
    %1419 = vmatmul.mubr.f32.gmra.mxu0 %v1347
    %v1420 = vpop.f32.mrf.mxu0
    %v1421 = vadd.f32 0.0, %v1420
    %v1422 = vpop.f32.mrf.mxu0
    %1423 = vdwg.mxu0
    %v1424 = vadd.f32 %v1003, %v1416
    %v1425 = vadd.f32 %v1008, %v1421
    %1426 = vrot.lane.b32.xlu0 %v179, 80
    %v1427 = vpop.permute.xlu0 %1426
    %1428 = vrot.lane.b32.xlu0 %v179, 16
    %v1429 = vpop.permute.xlu0 %1428
    %v1430 = vsel %vm192, %v1427, 0
    %v1432 = vsel %vm192, %v1429, 0
    %1434 = vmatprep.subr.mxu0 0.0
    %1435 = vmatpush1.xpose.msra.mxu0 0.0
    %1436 = vmatprep.subr.mxu0 0.0
    %1437 = vmatpush1.xpose.msra.mxu0 0.0
    %1438 = vmatprep.subr.mxu0 0.0
    %1439 = vmatpush1.xpose.msra.mxu0 0.0
    %1440 = vmatprep.subr.mxu0 0.0
    %1441 = vmatpush1.xpose.msra.mxu0 0.0
    %1442 = vmatprep.subr.mxu0 0.0
    %1443 = vmatpush1.xpose.msra.mxu0 0.0
    %1444 = vmatprep.subr.mxu0 0.0
    %1445 = vmatpush1.xpose.msra.mxu0 0.0
    %1446 = vmatprep.subr.mxu0 0.0
    %1447 = vmatpush1.xpose.msra.mxu0 0.0
    %1448 = vmatprep.subr.mxu0 0.0
    %1449 = vmatpush1.xpose.msra.mxu0 0.0
    %1450 = vmatprep.subr.mxu0 0.0
    %1451 = vmatpush1.xpose.msra.mxu0 0.0
    %1452 = vmatprep.subr.mxu0 0.0
    %1453 = vmatpush1.xpose.msra.mxu0 0.0
    %1454 = vmatprep.subr.mxu0 0.0
    %1455 = vmatpush1.xpose.msra.mxu0 0.0
    %1456 = vmatprep.subr.mxu0 0.0
    %1457 = vmatpush1.xpose.msra.mxu0 0.0
    %1458 = vmatprep.subr.mxu0 0.0
    %1459 = vmatpush1.xpose.msra.mxu0 0.0
    %1460 = vmatprep.subr.mxu0 0.0
    %1461 = vmatpush1.xpose.msra.mxu0 0.0
    %1462 = vmatprep.subr.mxu0 0.0
    %1463 = vmatpush1.xpose.msra.mxu0 0.0
    %1464 = vmatprep.subr.mxu0 0.0
    %1465 = vmatpush1.xpose.msra.mxu0 %v1432
    %1466 = vmatprep.subr.mxu0 0.0
    %1467 = vmatpush2.xpose.msra.mxu0 0.0
    %1468 = vmatprep.subr.mxu0 0.0
    %1469 = vmatpush2.xpose.msra.mxu0 0.0
    %1470 = vmatprep.subr.mxu0 0.0
    %1471 = vmatpush2.xpose.msra.mxu0 0.0
    %1472 = vmatprep.subr.mxu0 0.0
    %1473 = vmatpush2.xpose.msra.mxu0 0.0
    %1474 = vmatprep.subr.mxu0 0.0
    %1475 = vmatpush2.xpose.msra.mxu0 0.0
    %1476 = vmatprep.subr.mxu0 0.0
    %1477 = vmatpush2.xpose.msra.mxu0 0.0
    %1478 = vmatprep.subr.mxu0 0.0
    %1479 = vmatpush2.xpose.msra.mxu0 0.0
    %1480 = vmatprep.subr.mxu0 0.0
    %1481 = vmatpush2.xpose.msra.mxu0 0.0
    %1482 = vmatprep.subr.mxu0 0.0
    %1483 = vmatpush2.xpose.msra.mxu0 0.0
    %1484 = vmatprep.subr.mxu0 0.0
    %1485 = vmatpush2.xpose.msra.mxu0 0.0
    %1486 = vmatprep.subr.mxu0 0.0
    %1487 = vmatpush2.xpose.msra.mxu0 0.0
    %1488 = vmatprep.subr.mxu0 0.0
    %1489 = vmatpush2.xpose.msra.mxu0 0.0
    %1490 = vmatprep.subr.mxu0 0.0
    %1491 = vmatpush2.xpose.msra.mxu0 0.0
    %1492 = vmatprep.subr.mxu0 0.0
    %1493 = vmatpush2.xpose.msra.mxu0 0.0
    %1494 = vmatprep.subr.mxu0 0.0
    %1495 = vmatpush2.xpose.msra.mxu0 0.0
    %1496 = vmatprep.subr.mxu0 0.0
    %1497 = vmatpush2.xpose.msra.mxu0 0.0
    %1498 = vmatprep.mubr.f32.mxu0 0.0
    %1499 = vmatmul.mubr.f32.gmra.mxu0 %v1430
    %v1500 = vpop.f32.mrf.mxu0
    %v1501 = vadd.f32 0.0, %v1500
    %v1502 = vpop.f32.mrf.mxu0
    %1503 = vdwg.mxu0
    %1504 = vrot.lane.b32.xlu0 %v185, 80
    %v1505 = vpop.permute.xlu0 %1504
    %1506 = vrot.lane.b32.xlu0 %v185, 16
    %v1507 = vpop.permute.xlu0 %1506
    %v1508 = vsel %vm192, %v1505, 0
    %v1510 = vsel %vm192, %v1507, 0
    %1512 = vmatprep.subr.mxu0 0.0
    %1513 = vmatpush1.xpose.msra.mxu0 0.0
    %1514 = vmatprep.subr.mxu0 0.0
    %1515 = vmatpush1.xpose.msra.mxu0 0.0
    %1516 = vmatprep.subr.mxu0 0.0
    %1517 = vmatpush1.xpose.msra.mxu0 0.0
    %1518 = vmatprep.subr.mxu0 0.0
    %1519 = vmatpush1.xpose.msra.mxu0 0.0
    %1520 = vmatprep.subr.mxu0 0.0
    %1521 = vmatpush1.xpose.msra.mxu0 0.0
    %1522 = vmatprep.subr.mxu0 0.0
    %1523 = vmatpush1.xpose.msra.mxu0 0.0
    %1524 = vmatprep.subr.mxu0 0.0
    %1525 = vmatpush1.xpose.msra.mxu0 0.0
    %1526 = vmatprep.subr.mxu0 0.0
    %1527 = vmatpush1.xpose.msra.mxu0 0.0
    %1528 = vmatprep.subr.mxu0 0.0
    %1529 = vmatpush1.xpose.msra.mxu0 0.0
    %1530 = vmatprep.subr.mxu0 0.0
    %1531 = vmatpush1.xpose.msra.mxu0 0.0
    %1532 = vmatprep.subr.mxu0 0.0
    %1533 = vmatpush1.xpose.msra.mxu0 0.0
    %1534 = vmatprep.subr.mxu0 0.0
    %1535 = vmatpush1.xpose.msra.mxu0 0.0
    %1536 = vmatprep.subr.mxu0 0.0
    %1537 = vmatpush1.xpose.msra.mxu0 0.0
    %1538 = vmatprep.subr.mxu0 0.0
    %1539 = vmatpush1.xpose.msra.mxu0 0.0
    %1540 = vmatprep.subr.mxu0 0.0
    %1541 = vmatpush1.xpose.msra.mxu0 0.0
    %1542 = vmatprep.subr.mxu0 0.0
    %1543 = vmatpush1.xpose.msra.mxu0 %v1510
    %1544 = vmatprep.subr.mxu0 0.0
    %1545 = vmatpush2.xpose.msra.mxu0 0.0
    %1546 = vmatprep.subr.mxu0 0.0
    %1547 = vmatpush2.xpose.msra.mxu0 0.0
    %1548 = vmatprep.subr.mxu0 0.0
    %1549 = vmatpush2.xpose.msra.mxu0 0.0
    %1550 = vmatprep.subr.mxu0 0.0
    %1551 = vmatpush2.xpose.msra.mxu0 0.0
    %1552 = vmatprep.subr.mxu0 0.0
    %1553 = vmatpush2.xpose.msra.mxu0 0.0
    %1554 = vmatprep.subr.mxu0 0.0
    %1555 = vmatpush2.xpose.msra.mxu0 0.0
    %1556 = vmatprep.subr.mxu0 0.0
    %1557 = vmatpush2.xpose.msra.mxu0 0.0
    %1558 = vmatprep.subr.mxu0 0.0
    %1559 = vmatpush2.xpose.msra.mxu0 0.0
    %1560 = vmatprep.subr.mxu0 0.0
    %1561 = vmatpush2.xpose.msra.mxu0 0.0
    %1562 = vmatprep.subr.mxu0 0.0
    %1563 = vmatpush2.xpose.msra.mxu0 0.0
    %1564 = vmatprep.subr.mxu0 0.0
    %1565 = vmatpush2.xpose.msra.mxu0 0.0
    %1566 = vmatprep.subr.mxu0 0.0
    %1567 = vmatpush2.xpose.msra.mxu0 0.0
    %1568 = vmatprep.subr.mxu0 0.0
    %1569 = vmatpush2.xpose.msra.mxu0 0.0
    %1570 = vmatprep.subr.mxu0 0.0
    %1571 = vmatpush2.xpose.msra.mxu0 0.0
    %1572 = vmatprep.subr.mxu0 0.0
    %1573 = vmatpush2.xpose.msra.mxu0 0.0
    %1574 = vmatprep.subr.mxu0 0.0
    %1575 = vmatpush2.xpose.msra.mxu0 0.0
    %1576 = vmatprep.mubr.f32.mxu0 0.0
    %1577 = vmatmul.mubr.f32.gmra.mxu0 %v1508
    %v1578 = vpop.f32.mrf.mxu0
    %v1579 = vadd.f32 0.0, %v1578
    %v1580 = vpop.f32.mrf.mxu0
    %1581 = vdwg.mxu0
    %v1582 = vmul.f32 %v1501, 0.25
    %v1583 = vmul.f32 %v1579, 0.25
    %v1584 = vsel %vm346, %v1582, -inf
    %1585 = vmax.xlane.f32.xlu0 %v1584
    %v1586 = vpop.xlane.xlu0 %1585
    %v1587 = vsel %vm346, %v1583, -inf
    %1588 = vmax.xlane.f32.xlu0 %v1587
    %v1589 = vpop.xlane.xlu0 %1588
    %v1590 = vsub.f32 %v1582, %v1586
    %v1591 = vsub.f32 %v1583, %v1589
    %v1592 = vmul.f32 %v1590, 1.442695
    %v1593 = vpow.pop %v1592
    %v1594 = vmul.f32 %v1591, 1.442695
    %v1595 = vpow.pop %v1594
    %v1596 = vsel %vm346, %v1593, 0.0
    %1597 = vadd.xlane.f32.xlu0 %v1596
    %v1598 = vpop.xlane.xlu0 %1597
    %v1599 = vsel %vm346, %v1595, 0.0
    %1600 = vadd.xlane.f32.xlu0 %v1599
    %v1601 = vpop.xlane.xlu0 %1600
    %v1602 = vrcp.pop %v1598
    %v1603 = vrcp.pop %v1601
    %v1604 = vmul.f32 %v1593, %v1602
    %v1605 = vmul.f32 %v1595, %v1603
    %1606 = vrot.lane.b32.xlu0 %v181, 80
    %v1607 = vpop.permute.xlu0 %1606
    %v1610 = vsel %vm346, %v1604, 0
    %1612 = vmatprep.subr.mxu0 0.0
    %1613 = vmatpush1.msra.mxu0 0.0
    %1614 = vmatprep.subr.mxu0 0.0
    %1615 = vmatpush1.msra.mxu0 0.0
    %1616 = vmatprep.subr.mxu0 0.0
    %1617 = vmatpush1.msra.mxu0 0.0
    %1618 = vmatprep.subr.mxu0 0.0
    %1619 = vmatpush1.msra.mxu0 0.0
    %1620 = vmatprep.subr.mxu0 0.0
    %1621 = vmatpush1.msra.mxu0 0.0
    %1622 = vmatprep.subr.mxu0 0.0
    %1623 = vmatpush1.msra.mxu0 0.0
    %1624 = vmatprep.subr.mxu0 0.0
    %1625 = vmatpush1.msra.mxu0 0.0
    %1626 = vmatprep.subr.mxu0 0.0
    %1627 = vmatpush1.msra.mxu0 0.0
    %1628 = vmatprep.subr.mxu0 0.0
    %1629 = vmatpush1.msra.mxu0 0.0
    %1630 = vmatprep.subr.mxu0 0.0
    %1631 = vmatpush1.msra.mxu0 0.0
    %1632 = vmatprep.subr.mxu0 0.0
    %1633 = vmatpush1.msra.mxu0 0.0
    %1634 = vmatprep.subr.mxu0 0.0
    %1635 = vmatpush1.msra.mxu0 0.0
    %1636 = vmatprep.subr.mxu0 0.0
    %1637 = vmatpush1.msra.mxu0 0.0
    %1638 = vmatprep.subr.mxu0 0.0
    %1639 = vmatpush1.msra.mxu0 0.0
    %1640 = vmatprep.subr.mxu0 0.0
    %1641 = vmatpush1.msra.mxu0 0.0
    %1642 = vmatprep.subr.mxu0 0.0
    %1643 = vmatpush1.msra.mxu0 %v1607
    %1644 = vmatprep.subr.mxu0 0.0
    %1645 = vmatpush2.msra.mxu0 0.0
    %1646 = vmatprep.subr.mxu0 0.0
    %1647 = vmatpush2.msra.mxu0 0.0
    %1648 = vmatprep.subr.mxu0 0.0
    %1649 = vmatpush2.msra.mxu0 0.0
    %1650 = vmatprep.subr.mxu0 0.0
    %1651 = vmatpush2.msra.mxu0 0.0
    %1652 = vmatprep.subr.mxu0 0.0
    %1653 = vmatpush2.msra.mxu0 0.0
    %1654 = vmatprep.subr.mxu0 0.0
    %1655 = vmatpush2.msra.mxu0 0.0
    %1656 = vmatprep.subr.mxu0 0.0
    %1657 = vmatpush2.msra.mxu0 0.0
    %1658 = vmatprep.subr.mxu0 0.0
    %1659 = vmatpush2.msra.mxu0 0.0
    %1660 = vmatprep.subr.mxu0 0.0
    %1661 = vmatpush2.msra.mxu0 0.0
    %1662 = vmatprep.subr.mxu0 0.0
    %1663 = vmatpush2.msra.mxu0 0.0
    %1664 = vmatprep.subr.mxu0 0.0
    %1665 = vmatpush2.msra.mxu0 0.0
    %1666 = vmatprep.subr.mxu0 0.0
    %1667 = vmatpush2.msra.mxu0 0.0
    %1668 = vmatprep.subr.mxu0 0.0
    %1669 = vmatpush2.msra.mxu0 0.0
    %1670 = vmatprep.subr.mxu0 0.0
    %1671 = vmatpush2.msra.mxu0 0.0
    %1672 = vmatprep.subr.mxu0 0.0
    %1673 = vmatpush2.msra.mxu0 0.0
    %1674 = vmatprep.subr.mxu0 0.0
    %1675 = vmatpush2.msra.mxu0 0.0
    %1676 = vmatprep.mubr.f32.mxu0 0.0
    %1677 = vmatmul.mubr.f32.gmra.mxu0 %v1610
    %v1678 = vpop.f32.mrf.mxu0
    %v1679 = vadd.f32 0.0, %v1678
    %v1680 = vpop.f32.mrf.mxu0
    %1681 = vdwg.mxu0
    %1682 = vrot.lane.b32.xlu0 %v187, 80
    %v1683 = vpop.permute.xlu0 %1682
    %v1686 = vsel %vm346, %v1605, 0
    %1688 = vmatprep.subr.mxu0 0.0
    %1689 = vmatpush1.msra.mxu0 0.0
    %1690 = vmatprep.subr.mxu0 0.0
    %1691 = vmatpush1.msra.mxu0 0.0
    %1692 = vmatprep.subr.mxu0 0.0
    %1693 = vmatpush1.msra.mxu0 0.0
    %1694 = vmatprep.subr.mxu0 0.0
    %1695 = vmatpush1.msra.mxu0 0.0
    %1696 = vmatprep.subr.mxu0 0.0
    %1697 = vmatpush1.msra.mxu0 0.0
    %1698 = vmatprep.subr.mxu0 0.0
    %1699 = vmatpush1.msra.mxu0 0.0
    %1700 = vmatprep.subr.mxu0 0.0
    %1701 = vmatpush1.msra.mxu0 0.0
    %1702 = vmatprep.subr.mxu0 0.0
    %1703 = vmatpush1.msra.mxu0 0.0
    %1704 = vmatprep.subr.mxu0 0.0
    %1705 = vmatpush1.msra.mxu0 0.0
    %1706 = vmatprep.subr.mxu0 0.0
    %1707 = vmatpush1.msra.mxu0 0.0
    %1708 = vmatprep.subr.mxu0 0.0
    %1709 = vmatpush1.msra.mxu0 0.0
    %1710 = vmatprep.subr.mxu0 0.0
    %1711 = vmatpush1.msra.mxu0 0.0
    %1712 = vmatprep.subr.mxu0 0.0
    %1713 = vmatpush1.msra.mxu0 0.0
    %1714 = vmatprep.subr.mxu0 0.0
    %1715 = vmatpush1.msra.mxu0 0.0
    %1716 = vmatprep.subr.mxu0 0.0
    %1717 = vmatpush1.msra.mxu0 0.0
    %1718 = vmatprep.subr.mxu0 0.0
    %1719 = vmatpush1.msra.mxu0 %v1683
    %1720 = vmatprep.subr.mxu0 0.0
    %1721 = vmatpush2.msra.mxu0 0.0
    %1722 = vmatprep.subr.mxu0 0.0
    %1723 = vmatpush2.msra.mxu0 0.0
    %1724 = vmatprep.subr.mxu0 0.0
    %1725 = vmatpush2.msra.mxu0 0.0
    %1726 = vmatprep.subr.mxu0 0.0
    %1727 = vmatpush2.msra.mxu0 0.0
    %1728 = vmatprep.subr.mxu0 0.0
    %1729 = vmatpush2.msra.mxu0 0.0
    %1730 = vmatprep.subr.mxu0 0.0
    %1731 = vmatpush2.msra.mxu0 0.0
    %1732 = vmatprep.subr.mxu0 0.0
    %1733 = vmatpush2.msra.mxu0 0.0
    %1734 = vmatprep.subr.mxu0 0.0
    %1735 = vmatpush2.msra.mxu0 0.0
    %1736 = vmatprep.subr.mxu0 0.0
    %1737 = vmatpush2.msra.mxu0 0.0
    %1738 = vmatprep.subr.mxu0 0.0
    %1739 = vmatpush2.msra.mxu0 0.0
    %1740 = vmatprep.subr.mxu0 0.0
    %1741 = vmatpush2.msra.mxu0 0.0
    %1742 = vmatprep.subr.mxu0 0.0
    %1743 = vmatpush2.msra.mxu0 0.0
    %1744 = vmatprep.subr.mxu0 0.0
    %1745 = vmatpush2.msra.mxu0 0.0
    %1746 = vmatprep.subr.mxu0 0.0
    %1747 = vmatpush2.msra.mxu0 0.0
    %1748 = vmatprep.subr.mxu0 0.0
    %1749 = vmatpush2.msra.mxu0 0.0
    %1750 = vmatprep.subr.mxu0 0.0
    %1751 = vmatpush2.msra.mxu0 0.0
    %1752 = vmatprep.mubr.f32.mxu0 0.0
    %1753 = vmatmul.mubr.f32.gmra.mxu0 %v1686
    %v1754 = vpop.f32.mrf.mxu0
    %v1755 = vadd.f32 0.0, %v1754
    %v1756 = vpop.f32.mrf.mxu0
    %1757 = vdwg.mxu0
    %v1759 = vsel %vm192, %v1679, 0
    %v1762 = vsel %vm192, %v1755, 0
    %1764 = vmatprep.subr.mxu0 0.0
    %1765 = vmatpush1.msra.mxu0 0.0
    %1766 = vmatprep.subr.mxu0 0.0
    %1767 = vmatpush1.msra.mxu0 0.0
    %1768 = vmatprep.subr.mxu0 0.0
    %1769 = vmatpush1.msra.mxu0 0.0
    %1770 = vmatprep.subr.mxu0 0.0
    %1771 = vmatpush1.msra.mxu0 0.0
    %1772 = vmatprep.subr.mxu0 0.0
    %1773 = vmatpush1.msra.mxu0 0.0
    %1774 = vmatprep.subr.mxu0 0.0
    %1775 = vmatpush1.msra.mxu0 0.0
    %1776 = vmatprep.subr.mxu0 0.0
    %1777 = vmatpush1.msra.mxu0 0.0
    %1778 = vmatprep.subr.mxu0 0.0
    %1779 = vmatpush1.msra.mxu0 0.0
    %1780 = vmatprep.subr.mxu0 0.0
    %1781 = vmatpush1.msra.mxu0 0.0
    %1782 = vmatprep.subr.mxu0 0.0
    %1783 = vmatpush1.msra.mxu0 0.0
    %1784 = vmatprep.subr.mxu0 0.0
    %1785 = vmatpush1.msra.mxu0 0.0
    %1786 = vmatprep.subr.mxu0 0.0
    %1787 = vmatpush1.msra.mxu0 0.0
    %1788 = vmatprep.subr.mxu0 0.0
    %1789 = vmatpush1.msra.mxu0 0.0
    %1790 = vmatprep.subr.mxu0 0.0
    %1791 = vmatpush1.msra.mxu0 0.0
    %1792 = vmatprep.subr.mxu0 0.0
    %1793 = vmatpush1.msra.mxu0 %v59
    %1794 = vmatprep.subr.mxu0 0.0
    %1795 = vmatpush1.msra.mxu0 %v58
    %1796 = vmatprep.subr.mxu0 0.0
    %1797 = vmatpush2.msra.mxu0 0.0
    %1798 = vmatprep.subr.mxu0 0.0
    %1799 = vmatpush2.msra.mxu0 0.0
    %1800 = vmatprep.subr.mxu0 0.0
    %1801 = vmatpush2.msra.mxu0 0.0
    %1802 = vmatprep.subr.mxu0 0.0
    %1803 = vmatpush2.msra.mxu0 0.0
    %1804 = vmatprep.subr.mxu0 0.0
    %1805 = vmatpush2.msra.mxu0 0.0
    %1806 = vmatprep.subr.mxu0 0.0
    %1807 = vmatpush2.msra.mxu0 0.0
    %1808 = vmatprep.subr.mxu0 0.0
    %1809 = vmatpush2.msra.mxu0 0.0
    %1810 = vmatprep.subr.mxu0 0.0
    %1811 = vmatpush2.msra.mxu0 0.0
    %1812 = vmatprep.subr.mxu0 0.0
    %1813 = vmatpush2.msra.mxu0 0.0
    %1814 = vmatprep.subr.mxu0 0.0
    %1815 = vmatpush2.msra.mxu0 0.0
    %1816 = vmatprep.subr.mxu0 0.0
    %1817 = vmatpush2.msra.mxu0 0.0
    %1818 = vmatprep.subr.mxu0 0.0
    %1819 = vmatpush2.msra.mxu0 0.0
    %1820 = vmatprep.subr.mxu0 0.0
    %1821 = vmatpush2.msra.mxu0 0.0
    %1822 = vmatprep.subr.mxu0 0.0
    %1823 = vmatpush2.msra.mxu0 0.0
    %1824 = vmatprep.subr.mxu0 0.0
    %1825 = vmatpush2.msra.mxu0 0.0
    %1826 = vmatprep.subr.mxu0 0.0
    %1827 = vmatpush2.msra.mxu0 0.0
    %1828 = vmatprep.mubr.f32.mxu0 0.0
    %1829 = vmatmul.mubr.f32.gmra.mxu0 %v1759
    %v1830 = vpop.f32.mrf.mxu0
    %v1831 = vadd.f32 0.0, %v1830
    %v1832 = vpop.f32.mrf.mxu0
    %1833 = vmatprep.mubr.f32.mxu0 0.0
    %1834 = vmatmul.mubr.f32.gmra.mxu0 %v1762
    %v1835 = vpop.f32.mrf.mxu0
    %v1836 = vadd.f32 0.0, %v1835
    %v1837 = vpop.f32.mrf.mxu0
    %1838 = vdwg.mxu0
    %v1839 = vadd.f32 %v1424, %v1831
    %v1840 = vadd.f32 %v1425, %v1836
    %v1841 = vld [vmem:[%s5] sm:$0x1]
    %v1843 = vlaneseq
    %v1844 = vshrl.u32 %v1843, 7
    %v1845 = vsub.s32 0, %v1844
    %v1846 = vrot.slane %v1841, %v1845
    %v1848 = vadd.f32 %v1839, %v1846
    %v1849 = vadd.f32 %v1840, %v1846
    %v1850 = vadd.f32 %v1848, %v42
    %v1851 = vadd.f32 %v1849, %v43
    %v1852 = vld [vmem:[%s6] sm:$0x1]
    %v1853 = vld [vmem:[%s7] sm:$0x1]
    %v1854 = vsel %vm62, %v1850, 0.0
    %1855 = vadd.xlane.f32.xlu0 %v1854
    %v1856 = vpop.xlane.xlu0 %1855
    %v1857 = vsel %vm62, %v1851, 0.0
    %1858 = vadd.xlane.f32.xlu0 %v1857
    %v1859 = vpop.xlane.xlu0 %1858
    %v1860 = vmul.f32 %v1856, %v69
    %v1861 = vmul.f32 %v1859, %v69
    %v1862 = vsub.f32 %v1850, %v1860
    %v1863 = vsub.f32 %v1851, %v1861
    %v1864 = vmul.f32 %v1862, %v1862
    %v1865 = vmul.f32 %v1863, %v1863
    %v1866 = vsel %vm62, %v1864, 0.0
    %1867 = vadd.xlane.f32.xlu0 %v1866
    %v1868 = vpop.xlane.xlu0 %1867
    %v1869 = vsel %vm62, %v1865, 0.0
    %1870 = vadd.xlane.f32.xlu0 %v1869
    %v1871 = vpop.xlane.xlu0 %1870
    %v1872 = vmul.f32 %v1868, %v69
    %v1873 = vmul.f32 %v1871, %v69
    %v1874 = vadd.f32 %v1872, 1e-05
    %v1875 = vadd.f32 %v1873, 1e-05
    %v1876 = vrsqrt.pop %v1874
    %v1877 = vrsqrt.pop %v1875
    %v1878 = vmul.f32 %v1862, %v1876
    %v1879 = vmul.f32 %v1863, %v1877
    %v1881 = vlaneseq
    %v1882 = vshrl.u32 %v1881, 7
    %v1883 = vsub.s32 0, %v1882
    %v1884 = vrot.slane %v1852, %v1883
    %v1886 = vmul.f32 %v1878, %v1884
    %v1887 = vmul.f32 %v1879, %v1884
    %v1889 = vlaneseq
    %v1890 = vshrl.u32 %v1889, 7
    %v1891 = vsub.s32 0, %v1890
    %v1892 = vrot.slane %v1853, %v1891
    %v1894 = vadd.f32 %v1886, %v1892
    %v1895 = vadd.f32 %v1887, %v1892
    %v1896 = vld [vmem:[%s8] sm:$0xff]
    %v1897 = vld [vmem:[%s8 + $0x8] sm:$0xff]
    %v1898 = vld [vmem:[%s8 + $0x10] sm:$0xff]
    %v1899 = vld [vmem:[%s8 + $0x18] sm:$0xff]
    %v1900 = vld [vmem:[%s9] sm:$0x1]
    %v1902 = vlaneseq
    %v1903 = vshrl.u32 %v1902, 7
    %v1904 = vsub.s32 0, %v1903
    %v1905 = vrot.slane %v1900, %v1904
    %v1908 = vsel %vm62, %v1894, 0
    %v1911 = vsel %vm62, %v1895, 0
    %1913 = vmatprep.subr.mxu0 0.0
    %1914 = vmatpush1.msra.mxu0 0.0
    %1915 = vmatprep.subr.mxu0 0.0
    %1916 = vmatpush1.msra.mxu0 0.0
    %1917 = vmatprep.subr.mxu0 0.0
    %1918 = vmatpush1.msra.mxu0 0.0
    %1919 = vmatprep.subr.mxu0 0.0
    %1920 = vmatpush1.msra.mxu0 0.0
    %1921 = vmatprep.subr.mxu0 0.0
    %1922 = vmatpush1.msra.mxu0 0.0
    %1923 = vmatprep.subr.mxu0 0.0
    %1924 = vmatpush1.msra.mxu0 0.0
    %1925 = vmatprep.subr.mxu0 0.0
    %1926 = vmatpush1.msra.mxu0 0.0
    %1927 = vmatprep.subr.mxu0 0.0
    %1928 = vmatpush1.msra.mxu0 0.0
    %1929 = vmatprep.subr.mxu0 0.0
    %1930 = vmatpush1.msra.mxu0 0.0
    %1931 = vmatprep.subr.mxu0 0.0
    %1932 = vmatpush1.msra.mxu0 0.0
    %1933 = vmatprep.subr.mxu0 0.0
    %1934 = vmatpush1.msra.mxu0 0.0
    %1935 = vmatprep.subr.mxu0 0.0
    %1936 = vmatpush1.msra.mxu0 0.0
    %1937 = vmatprep.subr.mxu0 0.0
    %1938 = vmatpush1.msra.mxu0 %v1899
    %1939 = vmatprep.subr.mxu0 0.0
    %1940 = vmatpush1.msra.mxu0 %v1898
    %1941 = vmatprep.subr.mxu0 0.0
    %1942 = vmatpush1.msra.mxu0 %v1897
    %1943 = vmatprep.subr.mxu0 0.0
    %1944 = vmatpush1.msra.mxu0 %v1896
    %1945 = vmatprep.subr.mxu0 0.0
    %1946 = vmatpush2.msra.mxu0 0.0
    %1947 = vmatprep.subr.mxu0 0.0
    %1948 = vmatpush2.msra.mxu0 0.0
    %1949 = vmatprep.subr.mxu0 0.0
    %1950 = vmatpush2.msra.mxu0 0.0
    %1951 = vmatprep.subr.mxu0 0.0
    %1952 = vmatpush2.msra.mxu0 0.0
    %1953 = vmatprep.subr.mxu0 0.0
    %1954 = vmatpush2.msra.mxu0 0.0
    %1955 = vmatprep.subr.mxu0 0.0
    %1956 = vmatpush2.msra.mxu0 0.0
    %1957 = vmatprep.subr.mxu0 0.0
    %1958 = vmatpush2.msra.mxu0 0.0
    %1959 = vmatprep.subr.mxu0 0.0
    %1960 = vmatpush2.msra.mxu0 0.0
    %1961 = vmatprep.subr.mxu0 0.0
    %1962 = vmatpush2.msra.mxu0 0.0
    %1963 = vmatprep.subr.mxu0 0.0
    %1964 = vmatpush2.msra.mxu0 0.0
    %1965 = vmatprep.subr.mxu0 0.0
    %1966 = vmatpush2.msra.mxu0 0.0
    %1967 = vmatprep.subr.mxu0 0.0
    %1968 = vmatpush2.msra.mxu0 0.0
    %1969 = vmatprep.subr.mxu0 0.0
    %1970 = vmatpush2.msra.mxu0 0.0
    %1971 = vmatprep.subr.mxu0 0.0
    %1972 = vmatpush2.msra.mxu0 0.0
    %1973 = vmatprep.subr.mxu0 0.0
    %1974 = vmatpush2.msra.mxu0 0.0
    %1975 = vmatprep.subr.mxu0 0.0
    %1976 = vmatpush2.msra.mxu0 0.0
    %1977 = vmatprep.mubr.f32.mxu0 0.0
    %1978 = vmatmul.mubr.f32.gmra.mxu0 %v1908
    %v1979 = vpop.f32.mrf.mxu0
    %v1980 = vadd.f32 %v1905, %v1979
    %v1981 = vpop.f32.mrf.mxu0
    %1982 = vmatprep.mubr.f32.mxu0 0.0
    %1983 = vmatmul.mubr.f32.gmra.mxu0 %v1911
    %v1984 = vpop.f32.mrf.mxu0
    %v1985 = vadd.f32 %v1905, %v1984
    %v1986 = vpop.f32.mrf.mxu0
    %1987 = vdwg.mxu0
    %v1988 = vmul.f32 %v1980, 0.5
    %v1989 = vmul.f32 %v1985, 0.5
    %v1990 = vmul.f32 %v1980, 0.70710677
    %v1991 = vmul.f32 %v1985, 0.70710677
    %v1992 = verf.f32.pop %v1990
    %v1993 = verf.f32.pop %v1991
    %v1994 = vadd.f32 %v1992, 1.0
    %v1995 = vadd.f32 %v1993, 1.0
    %v1996 = vmul.f32 %v1988, %v1994
    %v1997 = vmul.f32 %v1989, %v1995
    %v1998 = vld [vmem:[%s10] sm:$0xff]
    %v1999 = vld [vmem:[%s10 + $0x8] sm:$0xff]
    %v2000 = vld [vmem:[%s10 + $0x10] sm:$0xff]
    %v2001 = vld [vmem:[%s10 + $0x18] sm:$0xff]
    %v2002 = vld [vmem:[%s10 + $0x20] sm:$0xff]
    %v2003 = vld [vmem:[%s10 + $0x28] sm:$0xff]
    %v2004 = vld [vmem:[%s10 + $0x30] sm:$0xff]
    %v2005 = vld [vmem:[%s10 + $0x38] sm:$0xff]
    %v2006 = vld [vmem:[%s11] sm:$0x1]
    %v2008 = vlaneseq
    %v2009 = vshrl.u32 %v2008, 7
    %v2010 = vsub.s32 0, %v2009
    %v2011 = vrot.slane %v2006, %v2010
    %vm2013 = vcmask 523264
    %v2015 = vsel %vm2013, %v1996, 0
    %v2018 = vsel %vm2013, %v1997, 0
    %2020 = vmatprep.subr.mxu0 0.0
    %2021 = vmatpush1.msra.mxu0 0.0
    %2022 = vmatprep.subr.mxu0 0.0
    %2023 = vmatpush1.msra.mxu0 0.0
    %2024 = vmatprep.subr.mxu0 0.0
    %2025 = vmatpush1.msra.mxu0 0.0
    %2026 = vmatprep.subr.mxu0 0.0
    %2027 = vmatpush1.msra.mxu0 0.0
    %2028 = vmatprep.subr.mxu0 0.0
    %2029 = vmatpush1.msra.mxu0 0.0
    %2030 = vmatprep.subr.mxu0 0.0
    %2031 = vmatpush1.msra.mxu0 0.0
    %2032 = vmatprep.subr.mxu0 0.0
    %2033 = vmatpush1.msra.mxu0 0.0
    %2034 = vmatprep.subr.mxu0 0.0
    %2035 = vmatpush1.msra.mxu0 0.0
    %2036 = vmatprep.subr.mxu0 0.0
    %2037 = vmatpush1.msra.mxu0 %v2005
    %2038 = vmatprep.subr.mxu0 0.0
    %2039 = vmatpush1.msra.mxu0 %v2004
    %2040 = vmatprep.subr.mxu0 0.0
    %2041 = vmatpush1.msra.mxu0 %v2003
    %2042 = vmatprep.subr.mxu0 0.0
    %2043 = vmatpush1.msra.mxu0 %v2002
    %2044 = vmatprep.subr.mxu0 0.0
    %2045 = vmatpush1.msra.mxu0 %v2001
    %2046 = vmatprep.subr.mxu0 0.0
    %2047 = vmatpush1.msra.mxu0 %v2000
    %2048 = vmatprep.subr.mxu0 0.0
    %2049 = vmatpush1.msra.mxu0 %v1999
    %2050 = vmatprep.subr.mxu0 0.0
    %2051 = vmatpush1.msra.mxu0 %v1998
    %2052 = vmatprep.subr.mxu0 0.0
    %2053 = vmatpush2.msra.mxu0 0.0
    %2054 = vmatprep.subr.mxu0 0.0
    %2055 = vmatpush2.msra.mxu0 0.0
    %2056 = vmatprep.subr.mxu0 0.0
    %2057 = vmatpush2.msra.mxu0 0.0
    %2058 = vmatprep.subr.mxu0 0.0
    %2059 = vmatpush2.msra.mxu0 0.0
    %2060 = vmatprep.subr.mxu0 0.0
    %2061 = vmatpush2.msra.mxu0 0.0
    %2062 = vmatprep.subr.mxu0 0.0
    %2063 = vmatpush2.msra.mxu0 0.0
    %2064 = vmatprep.subr.mxu0 0.0
    %2065 = vmatpush2.msra.mxu0 0.0
    %2066 = vmatprep.subr.mxu0 0.0
    %2067 = vmatpush2.msra.mxu0 0.0
    %2068 = vmatprep.subr.mxu0 0.0
    %2069 = vmatpush2.msra.mxu0 0.0
    %2070 = vmatprep.subr.mxu0 0.0
    %2071 = vmatpush2.msra.mxu0 0.0
    %2072 = vmatprep.subr.mxu0 0.0
    %2073 = vmatpush2.msra.mxu0 0.0
    %2074 = vmatprep.subr.mxu0 0.0
    %2075 = vmatpush2.msra.mxu0 0.0
    %2076 = vmatprep.subr.mxu0 0.0
    %2077 = vmatpush2.msra.mxu0 0.0
    %2078 = vmatprep.subr.mxu0 0.0
    %2079 = vmatpush2.msra.mxu0 0.0
    %2080 = vmatprep.subr.mxu0 0.0
    %2081 = vmatpush2.msra.mxu0 0.0
    %2082 = vmatprep.subr.mxu0 0.0
    %2083 = vmatpush2.msra.mxu0 0.0
    %2084 = vmatprep.mubr.f32.mxu0 0.0
    %2085 = vmatmul.mubr.f32.gmra.mxu0 %v2015
    %v2086 = vpop.f32.mrf.mxu0
    %v2087 = vadd.f32 %v2011, %v2086
    %v2088 = vpop.f32.mrf.mxu0
    %2089 = vmatprep.mubr.f32.mxu0 0.0
    %2090 = vmatmul.mubr.f32.gmra.mxu0 %v2018
    %v2091 = vpop.f32.mrf.mxu0
    %v2092 = vadd.f32 %v2011, %v2091
    %v2093 = vpop.f32.mrf.mxu0
    %2094 = vdwg.mxu0
    %v2095 = vadd.f32 %v2087, %v1850
    %v2096 = vadd.f32 %v2092, %v1851
    %s2097 = scalar_lea.vmem %s3, 64
    %v2098 = vld [vmem:[%s2097] sm:$0xff]
    %v2099 = vld [vmem:[%s2097 + $0x8] sm:$0xff]
    %v2100 = vld [vmem:[%s2097 + $0x10] sm:$0xff]
    %v2101 = vld [vmem:[%s2097 + $0x18] sm:$0xff]
    %v2102 = vld [vmem:[%s2097 + $0x20] sm:$0xff]
    %v2103 = vld [vmem:[%s2097 + $0x28] sm:$0xff]
    %v2104 = vld [vmem:[%s2097 + $0x30] sm:$0xff]
    %v2105 = vld [vmem:[%s2097 + $0x38] sm:$0xff]
    %s2106 = scalar_lea.vmem %s4, 64
    %v2107 = vld [vmem:[%s2106] sm:$0xff]
    %v2108 = vld [vmem:[%s2106 + $0x8] sm:$0xff]
    %v2109 = vld [vmem:[%s2106 + $0x10] sm:$0xff]
    %v2110 = vld [vmem:[%s2106 + $0x18] sm:$0xff]
    %v2111 = vld [vmem:[%s2106 + $0x20] sm:$0xff]
    %v2112 = vld [vmem:[%s2106 + $0x28] sm:$0xff]
    %v2113 = vld [vmem:[%s2106 + $0x30] sm:$0xff]
    %v2114 = vld [vmem:[%s2106 + $0x38] sm:$0xff]
    %s2115 = scalar_lea.vmem %s1, 1
    %v2116 = vld [vmem:[%s2115] sm:$0x1]
    %s2117 = scalar_lea.vmem %s2, 1
    %v2118 = vld [vmem:[%s2117] sm:$0x1]
    %v2119 = vsel %vm62, %v2095, 0.0
    %2120 = vadd.xlane.f32.xlu0 %v2119
    %v2121 = vpop.xlane.xlu0 %2120
    %v2122 = vsel %vm62, %v2096, 0.0
    %2123 = vadd.xlane.f32.xlu0 %v2122
    %v2124 = vpop.xlane.xlu0 %2123
    %v2125 = vmul.f32 %v2121, %v69
    %v2126 = vmul.f32 %v2124, %v69
    %v2127 = vsub.f32 %v2095, %v2125
    %v2128 = vsub.f32 %v2096, %v2126
    %v2129 = vmul.f32 %v2127, %v2127
    %v2130 = vmul.f32 %v2128, %v2128
    %v2131 = vsel %vm62, %v2129, 0.0
    %2132 = vadd.xlane.f32.xlu0 %v2131
    %v2133 = vpop.xlane.xlu0 %2132
    %v2134 = vsel %vm62, %v2130, 0.0
    %2135 = vadd.xlane.f32.xlu0 %v2134
    %v2136 = vpop.xlane.xlu0 %2135
    %v2137 = vmul.f32 %v2133, %v69
    %v2138 = vmul.f32 %v2136, %v69
    %v2139 = vadd.f32 %v2137, 1e-05
    %v2140 = vadd.f32 %v2138, 1e-05
    %v2141 = vrsqrt.pop %v2139
    %v2142 = vrsqrt.pop %v2140
    %v2143 = vmul.f32 %v2127, %v2141
    %v2144 = vmul.f32 %v2128, %v2142
    %v2146 = vlaneseq
    %v2147 = vshrl.u32 %v2146, 7
    %v2148 = vsub.s32 0, %v2147
    %v2149 = vrot.slane %v2116, %v2148
    %v2151 = vmul.f32 %v2143, %v2149
    %v2152 = vmul.f32 %v2144, %v2149
    %v2154 = vlaneseq
    %v2155 = vshrl.u32 %v2154, 7
    %v2156 = vsub.s32 0, %v2155
    %v2157 = vrot.slane %v2118, %v2156
    %v2159 = vadd.f32 %v2151, %v2157
    %v2160 = vadd.f32 %v2152, %v2157
    %v2162 = vsel %vm62, %v2159, 0
    %v2165 = vsel %vm62, %v2160, 0
    %2167 = vmatprep.subr.mxu0 0.0
    %2168 = vmatpush1.msra.mxu0 0.0
    %2169 = vmatprep.subr.mxu0 0.0
    %2170 = vmatpush1.msra.mxu0 0.0
    %2171 = vmatprep.subr.mxu0 0.0
    %2172 = vmatpush1.msra.mxu0 0.0
    %2173 = vmatprep.subr.mxu0 0.0
    %2174 = vmatpush1.msra.mxu0 0.0
    %2175 = vmatprep.subr.mxu0 0.0
    %2176 = vmatpush1.msra.mxu0 0.0
    %2177 = vmatprep.subr.mxu0 0.0
    %2178 = vmatpush1.msra.mxu0 0.0
    %2179 = vmatprep.subr.mxu0 0.0
    %2180 = vmatpush1.msra.mxu0 0.0
    %2181 = vmatprep.subr.mxu0 0.0
    %2182 = vmatpush1.msra.mxu0 0.0
    %2183 = vmatprep.subr.mxu0 0.0
    %2184 = vmatpush1.msra.mxu0 0.0
    %2185 = vmatprep.subr.mxu0 0.0
    %2186 = vmatpush1.msra.mxu0 0.0
    %2187 = vmatprep.subr.mxu0 0.0
    %2188 = vmatpush1.msra.mxu0 0.0
    %2189 = vmatprep.subr.mxu0 0.0
    %2190 = vmatpush1.msra.mxu0 0.0
    %2191 = vmatprep.subr.mxu0 %v2105
    %2192 = vmatpush1.msra.mxu0 %v2104
    %2193 = vmatprep.subr.mxu0 %v2103
    %2194 = vmatpush1.msra.mxu0 %v2102
    %2195 = vmatprep.subr.mxu0 %v2101
    %2196 = vmatpush1.msra.mxu0 %v2100
    %2197 = vmatprep.subr.mxu0 %v2099
    %2198 = vmatpush1.msra.mxu0 %v2098
    %2199 = vmatprep.subr.mxu0 0.0
    %2200 = vmatpush2.msra.mxu0 0.0
    %2201 = vmatprep.subr.mxu0 0.0
    %2202 = vmatpush2.msra.mxu0 0.0
    %2203 = vmatprep.subr.mxu0 0.0
    %2204 = vmatpush2.msra.mxu0 0.0
    %2205 = vmatprep.subr.mxu0 0.0
    %2206 = vmatpush2.msra.mxu0 0.0
    %2207 = vmatprep.subr.mxu0 0.0
    %2208 = vmatpush2.msra.mxu0 0.0
    %2209 = vmatprep.subr.mxu0 0.0
    %2210 = vmatpush2.msra.mxu0 0.0
    %2211 = vmatprep.subr.mxu0 0.0
    %2212 = vmatpush2.msra.mxu0 0.0
    %2213 = vmatprep.subr.mxu0 0.0
    %2214 = vmatpush2.msra.mxu0 0.0
    %2215 = vmatprep.subr.mxu0 0.0
    %2216 = vmatpush2.msra.mxu0 0.0
    %2217 = vmatprep.subr.mxu0 0.0
    %2218 = vmatpush2.msra.mxu0 0.0
    %2219 = vmatprep.subr.mxu0 0.0
    %2220 = vmatpush2.msra.mxu0 0.0
    %2221 = vmatprep.subr.mxu0 0.0
    %2222 = vmatpush2.msra.mxu0 0.0
    %2223 = vmatprep.subr.mxu0 0.0
    %2224 = vmatpush2.msra.mxu0 0.0
    %2225 = vmatprep.subr.mxu0 0.0
    %2226 = vmatpush2.msra.mxu0 0.0
    %2227 = vmatprep.subr.mxu0 0.0
    %2228 = vmatpush2.msra.mxu0 0.0
    %2229 = vmatprep.subr.mxu0 0.0
    %2230 = vmatpush2.msra.mxu0 0.0
    %2231 = vmatprep.mubr.f32.mxu0 0.0
    %2232 = vmatmul.mubr.f32.gmra.mxu0 %v2162
    %v2233 = vpop.f32.mrf.mxu0
    %v2234 = vadd.f32 0.0, %v2233
    %v2235 = vpop.f32.mrf.mxu0
    %v2236 = vadd.f32 0.0, %v2235
    %2237 = vmatprep.mubr.f32.mxu0 0.0
    %2238 = vmatmul.mubr.f32.gmra.mxu0 %v2165
    %v2239 = vpop.f32.mrf.mxu0
    %v2240 = vadd.f32 0.0, %v2239
    %v2241 = vpop.f32.mrf.mxu0
    %v2242 = vadd.f32 0.0, %v2241
    %2243 = vdwg.mxu0
    %2245 = vrot.lane.b32.xlu0 %v2234, 64
    %v2246 = vpop.permute.xlu0 %2245
    %v2247 = vsel %vm192, %v2234, 0
    %v2249 = vsel %vm192, %v2246, 0
    %2251 = vmatprep.subr.mxu0 0.0
    %2252 = vmatpush1.xpose.msra.mxu0 0.0
    %2253 = vmatprep.subr.mxu0 0.0
    %2254 = vmatpush1.xpose.msra.mxu0 0.0
    %2255 = vmatprep.subr.mxu0 0.0
    %2256 = vmatpush1.xpose.msra.mxu0 0.0
    %2257 = vmatprep.subr.mxu0 0.0
    %2258 = vmatpush1.xpose.msra.mxu0 0.0
    %2259 = vmatprep.subr.mxu0 0.0
    %2260 = vmatpush1.xpose.msra.mxu0 0.0
    %2261 = vmatprep.subr.mxu0 0.0
    %2262 = vmatpush1.xpose.msra.mxu0 0.0
    %2263 = vmatprep.subr.mxu0 0.0
    %2264 = vmatpush1.xpose.msra.mxu0 0.0
    %2265 = vmatprep.subr.mxu0 0.0
    %2266 = vmatpush1.xpose.msra.mxu0 0.0
    %2267 = vmatprep.subr.mxu0 0.0
    %2268 = vmatpush1.xpose.msra.mxu0 0.0
    %2269 = vmatprep.subr.mxu0 0.0
    %2270 = vmatpush1.xpose.msra.mxu0 0.0
    %2271 = vmatprep.subr.mxu0 0.0
    %2272 = vmatpush1.xpose.msra.mxu0 0.0
    %2273 = vmatprep.subr.mxu0 0.0
    %2274 = vmatpush1.xpose.msra.mxu0 0.0
    %2275 = vmatprep.subr.mxu0 0.0
    %2276 = vmatpush1.xpose.msra.mxu0 0.0
    %2277 = vmatprep.subr.mxu0 0.0
    %2278 = vmatpush1.xpose.msra.mxu0 0.0
    %2279 = vmatprep.subr.mxu0 0.0
    %2280 = vmatpush1.xpose.msra.mxu0 0.0
    %2281 = vmatprep.subr.mxu0 0.0
    %2282 = vmatpush1.xpose.msra.mxu0 %v2249
    %2283 = vmatprep.subr.mxu0 0.0
    %2284 = vmatpush2.xpose.msra.mxu0 0.0
    %2285 = vmatprep.subr.mxu0 0.0
    %2286 = vmatpush2.xpose.msra.mxu0 0.0
    %2287 = vmatprep.subr.mxu0 0.0
    %2288 = vmatpush2.xpose.msra.mxu0 0.0
    %2289 = vmatprep.subr.mxu0 0.0
    %2290 = vmatpush2.xpose.msra.mxu0 0.0
    %2291 = vmatprep.subr.mxu0 0.0
    %2292 = vmatpush2.xpose.msra.mxu0 0.0
    %2293 = vmatprep.subr.mxu0 0.0
    %2294 = vmatpush2.xpose.msra.mxu0 0.0
    %2295 = vmatprep.subr.mxu0 0.0
    %2296 = vmatpush2.xpose.msra.mxu0 0.0
    %2297 = vmatprep.subr.mxu0 0.0
    %2298 = vmatpush2.xpose.msra.mxu0 0.0
    %2299 = vmatprep.subr.mxu0 0.0
    %2300 = vmatpush2.xpose.msra.mxu0 0.0
    %2301 = vmatprep.subr.mxu0 0.0
    %2302 = vmatpush2.xpose.msra.mxu0 0.0
    %2303 = vmatprep.subr.mxu0 0.0
    %2304 = vmatpush2.xpose.msra.mxu0 0.0
    %2305 = vmatprep.subr.mxu0 0.0
    %2306 = vmatpush2.xpose.msra.mxu0 0.0
    %2307 = vmatprep.subr.mxu0 0.0
    %2308 = vmatpush2.xpose.msra.mxu0 0.0
    %2309 = vmatprep.subr.mxu0 0.0
    %2310 = vmatpush2.xpose.msra.mxu0 0.0
    %2311 = vmatprep.subr.mxu0 0.0
    %2312 = vmatpush2.xpose.msra.mxu0 0.0
    %2313 = vmatprep.subr.mxu0 0.0
    %2314 = vmatpush2.xpose.msra.mxu0 0.0
    %2315 = vmatprep.mubr.f32.mxu0 0.0
    %2316 = vmatmul.mubr.f32.gmra.mxu0 %v2247
    %v2317 = vpop.f32.mrf.mxu0
    %v2318 = vadd.f32 0.0, %v2317
    %v2319 = vpop.f32.mrf.mxu0
    %2320 = vdwg.mxu0
    %2322 = vrot.lane.b32.xlu0 %v2240, 64
    %v2323 = vpop.permute.xlu0 %2322
    %v2324 = vsel %vm192, %v2240, 0
    %v2326 = vsel %vm192, %v2323, 0
    %2328 = vmatprep.subr.mxu0 0.0
    %2329 = vmatpush1.xpose.msra.mxu0 0.0
    %2330 = vmatprep.subr.mxu0 0.0
    %2331 = vmatpush1.xpose.msra.mxu0 0.0
    %2332 = vmatprep.subr.mxu0 0.0
    %2333 = vmatpush1.xpose.msra.mxu0 0.0
    %2334 = vmatprep.subr.mxu0 0.0
    %2335 = vmatpush1.xpose.msra.mxu0 0.0
    %2336 = vmatprep.subr.mxu0 0.0
    %2337 = vmatpush1.xpose.msra.mxu0 0.0
    %2338 = vmatprep.subr.mxu0 0.0
    %2339 = vmatpush1.xpose.msra.mxu0 0.0
    %2340 = vmatprep.subr.mxu0 0.0
    %2341 = vmatpush1.xpose.msra.mxu0 0.0
    %2342 = vmatprep.subr.mxu0 0.0
    %2343 = vmatpush1.xpose.msra.mxu0 0.0
    %2344 = vmatprep.subr.mxu0 0.0
    %2345 = vmatpush1.xpose.msra.mxu0 0.0
    %2346 = vmatprep.subr.mxu0 0.0
    %2347 = vmatpush1.xpose.msra.mxu0 0.0
    %2348 = vmatprep.subr.mxu0 0.0
    %2349 = vmatpush1.xpose.msra.mxu0 0.0
    %2350 = vmatprep.subr.mxu0 0.0
    %2351 = vmatpush1.xpose.msra.mxu0 0.0
    %2352 = vmatprep.subr.mxu0 0.0
    %2353 = vmatpush1.xpose.msra.mxu0 0.0
    %2354 = vmatprep.subr.mxu0 0.0
    %2355 = vmatpush1.xpose.msra.mxu0 0.0
    %2356 = vmatprep.subr.mxu0 0.0
    %2357 = vmatpush1.xpose.msra.mxu0 0.0
    %2358 = vmatprep.subr.mxu0 0.0
    %2359 = vmatpush1.xpose.msra.mxu0 %v2326
    %2360 = vmatprep.subr.mxu0 0.0
    %2361 = vmatpush2.xpose.msra.mxu0 0.0
    %2362 = vmatprep.subr.mxu0 0.0
    %2363 = vmatpush2.xpose.msra.mxu0 0.0
    %2364 = vmatprep.subr.mxu0 0.0
    %2365 = vmatpush2.xpose.msra.mxu0 0.0
    %2366 = vmatprep.subr.mxu0 0.0
    %2367 = vmatpush2.xpose.msra.mxu0 0.0
    %2368 = vmatprep.subr.mxu0 0.0
    %2369 = vmatpush2.xpose.msra.mxu0 0.0
    %2370 = vmatprep.subr.mxu0 0.0
    %2371 = vmatpush2.xpose.msra.mxu0 0.0
    %2372 = vmatprep.subr.mxu0 0.0
    %2373 = vmatpush2.xpose.msra.mxu0 0.0
    %2374 = vmatprep.subr.mxu0 0.0
    %2375 = vmatpush2.xpose.msra.mxu0 0.0
    %2376 = vmatprep.subr.mxu0 0.0
    %2377 = vmatpush2.xpose.msra.mxu0 0.0
    %2378 = vmatprep.subr.mxu0 0.0
    %2379 = vmatpush2.xpose.msra.mxu0 0.0
    %2380 = vmatprep.subr.mxu0 0.0
    %2381 = vmatpush2.xpose.msra.mxu0 0.0
    %2382 = vmatprep.subr.mxu0 0.0
    %2383 = vmatpush2.xpose.msra.mxu0 0.0
    %2384 = vmatprep.subr.mxu0 0.0
    %2385 = vmatpush2.xpose.msra.mxu0 0.0
    %2386 = vmatprep.subr.mxu0 0.0
    %2387 = vmatpush2.xpose.msra.mxu0 0.0
    %2388 = vmatprep.subr.mxu0 0.0
    %2389 = vmatpush2.xpose.msra.mxu0 0.0
    %2390 = vmatprep.subr.mxu0 0.0
    %2391 = vmatpush2.xpose.msra.mxu0 0.0
    %2392 = vmatprep.mubr.f32.mxu0 0.0
    %2393 = vmatmul.mubr.f32.gmra.mxu0 %v2324
    %v2394 = vpop.f32.mrf.mxu0
    %v2395 = vadd.f32 0.0, %v2394
    %v2396 = vpop.f32.mrf.mxu0
    %2397 = vdwg.mxu0
    %v2398 = vmul.f32 %v2318, 0.25
    %v2399 = vmul.f32 %v2395, 0.25
    %v2400 = vsel %vm346, %v2398, -inf
    %2401 = vmax.xlane.f32.xlu0 %v2400
    %v2402 = vpop.xlane.xlu0 %2401
    %v2403 = vsel %vm346, %v2399, -inf
    %2404 = vmax.xlane.f32.xlu0 %v2403
    %v2405 = vpop.xlane.xlu0 %2404
    %v2406 = vsub.f32 %v2398, %v2402
    %v2407 = vsub.f32 %v2399, %v2405
    %v2408 = vmul.f32 %v2406, 1.442695
    %v2409 = vpow.pop %v2408
    %v2410 = vmul.f32 %v2407, 1.442695
    %v2411 = vpow.pop %v2410
    %v2412 = vsel %vm346, %v2409, 0.0
    %2413 = vadd.xlane.f32.xlu0 %v2412
    %v2414 = vpop.xlane.xlu0 %2413
    %v2415 = vsel %vm346, %v2411, 0.0
    %2416 = vadd.xlane.f32.xlu0 %v2415
    %v2417 = vpop.xlane.xlu0 %2416
    %v2418 = vrcp.pop %v2414
    %v2419 = vrcp.pop %v2417
    %v2420 = vmul.f32 %v2409, %v2418
    %v2421 = vmul.f32 %v2411, %v2419
    %v2423 = vsel %vm346, %v2420, 0
    %2425 = vmatprep.subr.mxu0 0.0
    %2426 = vmatpush1.msra.mxu0 0.0
    %2427 = vmatprep.subr.mxu0 0.0
    %2428 = vmatpush1.msra.mxu0 0.0
    %2429 = vmatprep.subr.mxu0 0.0
    %2430 = vmatpush1.msra.mxu0 0.0
    %2431 = vmatprep.subr.mxu0 0.0
    %2432 = vmatpush1.msra.mxu0 0.0
    %2433 = vmatprep.subr.mxu0 0.0
    %2434 = vmatpush1.msra.mxu0 0.0
    %2435 = vmatprep.subr.mxu0 0.0
    %2436 = vmatpush1.msra.mxu0 0.0
    %2437 = vmatprep.subr.mxu0 0.0
    %2438 = vmatpush1.msra.mxu0 0.0
    %2439 = vmatprep.subr.mxu0 0.0
    %2440 = vmatpush1.msra.mxu0 0.0
    %2441 = vmatprep.subr.mxu0 0.0
    %2442 = vmatpush1.msra.mxu0 0.0
    %2443 = vmatprep.subr.mxu0 0.0
    %2444 = vmatpush1.msra.mxu0 0.0
    %2445 = vmatprep.subr.mxu0 0.0
    %2446 = vmatpush1.msra.mxu0 0.0
    %2447 = vmatprep.subr.mxu0 0.0
    %2448 = vmatpush1.msra.mxu0 0.0
    %2449 = vmatprep.subr.mxu0 0.0
    %2450 = vmatpush1.msra.mxu0 0.0
    %2451 = vmatprep.subr.mxu0 0.0
    %2452 = vmatpush1.msra.mxu0 0.0
    %2453 = vmatprep.subr.mxu0 0.0
    %2454 = vmatpush1.msra.mxu0 0.0
    %2455 = vmatprep.subr.mxu0 0.0
    %2456 = vmatpush1.msra.mxu0 %v2236
    %2457 = vmatprep.subr.mxu0 0.0
    %2458 = vmatpush2.msra.mxu0 0.0
    %2459 = vmatprep.subr.mxu0 0.0
    %2460 = vmatpush2.msra.mxu0 0.0
    %2461 = vmatprep.subr.mxu0 0.0
    %2462 = vmatpush2.msra.mxu0 0.0
    %2463 = vmatprep.subr.mxu0 0.0
    %2464 = vmatpush2.msra.mxu0 0.0
    %2465 = vmatprep.subr.mxu0 0.0
    %2466 = vmatpush2.msra.mxu0 0.0
    %2467 = vmatprep.subr.mxu0 0.0
    %2468 = vmatpush2.msra.mxu0 0.0
    %2469 = vmatprep.subr.mxu0 0.0
    %2470 = vmatpush2.msra.mxu0 0.0
    %2471 = vmatprep.subr.mxu0 0.0
    %2472 = vmatpush2.msra.mxu0 0.0
    %2473 = vmatprep.subr.mxu0 0.0
    %2474 = vmatpush2.msra.mxu0 0.0
    %2475 = vmatprep.subr.mxu0 0.0
    %2476 = vmatpush2.msra.mxu0 0.0
    %2477 = vmatprep.subr.mxu0 0.0
    %2478 = vmatpush2.msra.mxu0 0.0
    %2479 = vmatprep.subr.mxu0 0.0
    %2480 = vmatpush2.msra.mxu0 0.0
    %2481 = vmatprep.subr.mxu0 0.0
    %2482 = vmatpush2.msra.mxu0 0.0
    %2483 = vmatprep.subr.mxu0 0.0
    %2484 = vmatpush2.msra.mxu0 0.0
    %2485 = vmatprep.subr.mxu0 0.0
    %2486 = vmatpush2.msra.mxu0 0.0
    %2487 = vmatprep.subr.mxu0 0.0
    %2488 = vmatpush2.msra.mxu0 0.0
    %2489 = vmatprep.mubr.f32.mxu0 0.0
    %2490 = vmatmul.mubr.f32.gmra.mxu0 %v2423
    %v2491 = vpop.f32.mrf.mxu0
    %v2492 = vadd.f32 0.0, %v2491
    %v2493 = vpop.f32.mrf.mxu0
    %2494 = vdwg.mxu0
    %v2496 = vsel %vm346, %v2421, 0
    %2498 = vmatprep.subr.mxu0 0.0
    %2499 = vmatpush1.msra.mxu0 0.0
    %2500 = vmatprep.subr.mxu0 0.0
    %2501 = vmatpush1.msra.mxu0 0.0
    %2502 = vmatprep.subr.mxu0 0.0
    %2503 = vmatpush1.msra.mxu0 0.0
    %2504 = vmatprep.subr.mxu0 0.0
    %2505 = vmatpush1.msra.mxu0 0.0
    %2506 = vmatprep.subr.mxu0 0.0
    %2507 = vmatpush1.msra.mxu0 0.0
    %2508 = vmatprep.subr.mxu0 0.0
    %2509 = vmatpush1.msra.mxu0 0.0
    %2510 = vmatprep.subr.mxu0 0.0
    %2511 = vmatpush1.msra.mxu0 0.0
    %2512 = vmatprep.subr.mxu0 0.0
    %2513 = vmatpush1.msra.mxu0 0.0
    %2514 = vmatprep.subr.mxu0 0.0
    %2515 = vmatpush1.msra.mxu0 0.0
    %2516 = vmatprep.subr.mxu0 0.0
    %2517 = vmatpush1.msra.mxu0 0.0
    %2518 = vmatprep.subr.mxu0 0.0
    %2519 = vmatpush1.msra.mxu0 0.0
    %2520 = vmatprep.subr.mxu0 0.0
    %2521 = vmatpush1.msra.mxu0 0.0
    %2522 = vmatprep.subr.mxu0 0.0
    %2523 = vmatpush1.msra.mxu0 0.0
    %2524 = vmatprep.subr.mxu0 0.0
    %2525 = vmatpush1.msra.mxu0 0.0
    %2526 = vmatprep.subr.mxu0 0.0
    %2527 = vmatpush1.msra.mxu0 0.0
    %2528 = vmatprep.subr.mxu0 0.0
    %2529 = vmatpush1.msra.mxu0 %v2242
    %2530 = vmatprep.subr.mxu0 0.0
    %2531 = vmatpush2.msra.mxu0 0.0
    %2532 = vmatprep.subr.mxu0 0.0
    %2533 = vmatpush2.msra.mxu0 0.0
    %2534 = vmatprep.subr.mxu0 0.0
    %2535 = vmatpush2.msra.mxu0 0.0
    %2536 = vmatprep.subr.mxu0 0.0
    %2537 = vmatpush2.msra.mxu0 0.0
    %2538 = vmatprep.subr.mxu0 0.0
    %2539 = vmatpush2.msra.mxu0 0.0
    %2540 = vmatprep.subr.mxu0 0.0
    %2541 = vmatpush2.msra.mxu0 0.0
    %2542 = vmatprep.subr.mxu0 0.0
    %2543 = vmatpush2.msra.mxu0 0.0
    %2544 = vmatprep.subr.mxu0 0.0
    %2545 = vmatpush2.msra.mxu0 0.0
    %2546 = vmatprep.subr.mxu0 0.0
    %2547 = vmatpush2.msra.mxu0 0.0
    %2548 = vmatprep.subr.mxu0 0.0
    %2549 = vmatpush2.msra.mxu0 0.0
    %2550 = vmatprep.subr.mxu0 0.0
    %2551 = vmatpush2.msra.mxu0 0.0
    %2552 = vmatprep.subr.mxu0 0.0
    %2553 = vmatpush2.msra.mxu0 0.0
    %2554 = vmatprep.subr.mxu0 0.0
    %2555 = vmatpush2.msra.mxu0 0.0
    %2556 = vmatprep.subr.mxu0 0.0
    %2557 = vmatpush2.msra.mxu0 0.0
    %2558 = vmatprep.subr.mxu0 0.0
    %2559 = vmatpush2.msra.mxu0 0.0
    %2560 = vmatprep.subr.mxu0 0.0
    %2561 = vmatpush2.msra.mxu0 0.0
    %2562 = vmatprep.mubr.f32.mxu0 0.0
    %2563 = vmatmul.mubr.f32.gmra.mxu0 %v2496
    %v2564 = vpop.f32.mrf.mxu0
    %v2565 = vadd.f32 0.0, %v2564
    %v2566 = vpop.f32.mrf.mxu0
    %2567 = vdwg.mxu0
    %2568 = vrot.lane.b32.xlu0 %v2234, 112
    %v2569 = vpop.permute.xlu0 %2568
    %2570 = vrot.lane.b32.xlu0 %v2234, 48
    %v2571 = vpop.permute.xlu0 %2570
    %v2572 = vsel %vm192, %v2569, 0
    %v2574 = vsel %vm192, %v2571, 0
    %2576 = vmatprep.subr.mxu0 0.0
    %2577 = vmatpush1.xpose.msra.mxu0 0.0
    %2578 = vmatprep.subr.mxu0 0.0
    %2579 = vmatpush1.xpose.msra.mxu0 0.0
    %2580 = vmatprep.subr.mxu0 0.0
    %2581 = vmatpush1.xpose.msra.mxu0 0.0
    %2582 = vmatprep.subr.mxu0 0.0
    %2583 = vmatpush1.xpose.msra.mxu0 0.0
    %2584 = vmatprep.subr.mxu0 0.0
    %2585 = vmatpush1.xpose.msra.mxu0 0.0
    %2586 = vmatprep.subr.mxu0 0.0
    %2587 = vmatpush1.xpose.msra.mxu0 0.0
    %2588 = vmatprep.subr.mxu0 0.0
    %2589 = vmatpush1.xpose.msra.mxu0 0.0
    %2590 = vmatprep.subr.mxu0 0.0
    %2591 = vmatpush1.xpose.msra.mxu0 0.0
    %2592 = vmatprep.subr.mxu0 0.0
    %2593 = vmatpush1.xpose.msra.mxu0 0.0
    %2594 = vmatprep.subr.mxu0 0.0
    %2595 = vmatpush1.xpose.msra.mxu0 0.0
    %2596 = vmatprep.subr.mxu0 0.0
    %2597 = vmatpush1.xpose.msra.mxu0 0.0
    %2598 = vmatprep.subr.mxu0 0.0
    %2599 = vmatpush1.xpose.msra.mxu0 0.0
    %2600 = vmatprep.subr.mxu0 0.0
    %2601 = vmatpush1.xpose.msra.mxu0 0.0
    %2602 = vmatprep.subr.mxu0 0.0
    %2603 = vmatpush1.xpose.msra.mxu0 0.0
    %2604 = vmatprep.subr.mxu0 0.0
    %2605 = vmatpush1.xpose.msra.mxu0 0.0
    %2606 = vmatprep.subr.mxu0 0.0
    %2607 = vmatpush1.xpose.msra.mxu0 %v2574
    %2608 = vmatprep.subr.mxu0 0.0
    %2609 = vmatpush2.xpose.msra.mxu0 0.0
    %2610 = vmatprep.subr.mxu0 0.0
    %2611 = vmatpush2.xpose.msra.mxu0 0.0
    %2612 = vmatprep.subr.mxu0 0.0
    %2613 = vmatpush2.xpose.msra.mxu0 0.0
    %2614 = vmatprep.subr.mxu0 0.0
    %2615 = vmatpush2.xpose.msra.mxu0 0.0
    %2616 = vmatprep.subr.mxu0 0.0
    %2617 = vmatpush2.xpose.msra.mxu0 0.0
    %2618 = vmatprep.subr.mxu0 0.0
    %2619 = vmatpush2.xpose.msra.mxu0 0.0
    %2620 = vmatprep.subr.mxu0 0.0
    %2621 = vmatpush2.xpose.msra.mxu0 0.0
    %2622 = vmatprep.subr.mxu0 0.0
    %2623 = vmatpush2.xpose.msra.mxu0 0.0
    %2624 = vmatprep.subr.mxu0 0.0
    %2625 = vmatpush2.xpose.msra.mxu0 0.0
    %2626 = vmatprep.subr.mxu0 0.0
    %2627 = vmatpush2.xpose.msra.mxu0 0.0
    %2628 = vmatprep.subr.mxu0 0.0
    %2629 = vmatpush2.xpose.msra.mxu0 0.0
    %2630 = vmatprep.subr.mxu0 0.0
    %2631 = vmatpush2.xpose.msra.mxu0 0.0
    %2632 = vmatprep.subr.mxu0 0.0
    %2633 = vmatpush2.xpose.msra.mxu0 0.0
    %2634 = vmatprep.subr.mxu0 0.0
    %2635 = vmatpush2.xpose.msra.mxu0 0.0
    %2636 = vmatprep.subr.mxu0 0.0
    %2637 = vmatpush2.xpose.msra.mxu0 0.0
    %2638 = vmatprep.subr.mxu0 0.0
    %2639 = vmatpush2.xpose.msra.mxu0 0.0
    %2640 = vmatprep.mubr.f32.mxu0 0.0
    %2641 = vmatmul.mubr.f32.gmra.mxu0 %v2572
    %v2642 = vpop.f32.mrf.mxu0
    %v2643 = vadd.f32 0.0, %v2642
    %v2644 = vpop.f32.mrf.mxu0
    %2645 = vdwg.mxu0
    %2646 = vrot.lane.b32.xlu0 %v2240, 112
    %v2647 = vpop.permute.xlu0 %2646
    %2648 = vrot.lane.b32.xlu0 %v2240, 48
    %v2649 = vpop.permute.xlu0 %2648
    %v2650 = vsel %vm192, %v2647, 0
    %v2652 = vsel %vm192, %v2649, 0
    %2654 = vmatprep.subr.mxu0 0.0
    %2655 = vmatpush1.xpose.msra.mxu0 0.0
    %2656 = vmatprep.subr.mxu0 0.0
    %2657 = vmatpush1.xpose.msra.mxu0 0.0
    %2658 = vmatprep.subr.mxu0 0.0
    %2659 = vmatpush1.xpose.msra.mxu0 0.0
    %2660 = vmatprep.subr.mxu0 0.0
    %2661 = vmatpush1.xpose.msra.mxu0 0.0
    %2662 = vmatprep.subr.mxu0 0.0
    %2663 = vmatpush1.xpose.msra.mxu0 0.0
    %2664 = vmatprep.subr.mxu0 0.0
    %2665 = vmatpush1.xpose.msra.mxu0 0.0
    %2666 = vmatprep.subr.mxu0 0.0
    %2667 = vmatpush1.xpose.msra.mxu0 0.0
    %2668 = vmatprep.subr.mxu0 0.0
    %2669 = vmatpush1.xpose.msra.mxu0 0.0
    %2670 = vmatprep.subr.mxu0 0.0
    %2671 = vmatpush1.xpose.msra.mxu0 0.0
    %2672 = vmatprep.subr.mxu0 0.0
    %2673 = vmatpush1.xpose.msra.mxu0 0.0
    %2674 = vmatprep.subr.mxu0 0.0
    %2675 = vmatpush1.xpose.msra.mxu0 0.0
    %2676 = vmatprep.subr.mxu0 0.0
    %2677 = vmatpush1.xpose.msra.mxu0 0.0
    %2678 = vmatprep.subr.mxu0 0.0
    %2679 = vmatpush1.xpose.msra.mxu0 0.0
    %2680 = vmatprep.subr.mxu0 0.0
    %2681 = vmatpush1.xpose.msra.mxu0 0.0
    %2682 = vmatprep.subr.mxu0 0.0
    %2683 = vmatpush1.xpose.msra.mxu0 0.0
    %2684 = vmatprep.subr.mxu0 0.0
    %2685 = vmatpush1.xpose.msra.mxu0 %v2652
    %2686 = vmatprep.subr.mxu0 0.0
    %2687 = vmatpush2.xpose.msra.mxu0 0.0
    %2688 = vmatprep.subr.mxu0 0.0
    %2689 = vmatpush2.xpose.msra.mxu0 0.0
    %2690 = vmatprep.subr.mxu0 0.0
    %2691 = vmatpush2.xpose.msra.mxu0 0.0
    %2692 = vmatprep.subr.mxu0 0.0
    %2693 = vmatpush2.xpose.msra.mxu0 0.0
    %2694 = vmatprep.subr.mxu0 0.0
    %2695 = vmatpush2.xpose.msra.mxu0 0.0
    %2696 = vmatprep.subr.mxu0 0.0
    %2697 = vmatpush2.xpose.msra.mxu0 0.0
    %2698 = vmatprep.subr.mxu0 0.0
    %2699 = vmatpush2.xpose.msra.mxu0 0.0
    %2700 = vmatprep.subr.mxu0 0.0
    %2701 = vmatpush2.xpose.msra.mxu0 0.0
    %2702 = vmatprep.subr.mxu0 0.0
    %2703 = vmatpush2.xpose.msra.mxu0 0.0
    %2704 = vmatprep.subr.mxu0 0.0
    %2705 = vmatpush2.xpose.msra.mxu0 0.0
    %2706 = vmatprep.subr.mxu0 0.0
    %2707 = vmatpush2.xpose.msra.mxu0 0.0
    %2708 = vmatprep.subr.mxu0 0.0
    %2709 = vmatpush2.xpose.msra.mxu0 0.0
    %2710 = vmatprep.subr.mxu0 0.0
    %2711 = vmatpush2.xpose.msra.mxu0 0.0
    %2712 = vmatprep.subr.mxu0 0.0
    %2713 = vmatpush2.xpose.msra.mxu0 0.0
    %2714 = vmatprep.subr.mxu0 0.0
    %2715 = vmatpush2.xpose.msra.mxu0 0.0
    %2716 = vmatprep.subr.mxu0 0.0
    %2717 = vmatpush2.xpose.msra.mxu0 0.0
    %2718 = vmatprep.mubr.f32.mxu0 0.0
    %2719 = vmatmul.mubr.f32.gmra.mxu0 %v2650
    %v2720 = vpop.f32.mrf.mxu0
    %v2721 = vadd.f32 0.0, %v2720
    %v2722 = vpop.f32.mrf.mxu0
    %2723 = vdwg.mxu0
    %v2724 = vmul.f32 %v2643, 0.25
    %v2725 = vmul.f32 %v2721, 0.25
    %v2726 = vsel %vm346, %v2724, -inf
    %2727 = vmax.xlane.f32.xlu0 %v2726
    %v2728 = vpop.xlane.xlu0 %2727
    %v2729 = vsel %vm346, %v2725, -inf
    %2730 = vmax.xlane.f32.xlu0 %v2729
    %v2731 = vpop.xlane.xlu0 %2730
    %v2732 = vsub.f32 %v2724, %v2728
    %v2733 = vsub.f32 %v2725, %v2731
    %v2734 = vmul.f32 %v2732, 1.442695
    %v2735 = vpow.pop %v2734
    %v2736 = vmul.f32 %v2733, 1.442695
    %v2737 = vpow.pop %v2736
    %v2738 = vsel %vm346, %v2735, 0.0
    %2739 = vadd.xlane.f32.xlu0 %v2738
    %v2740 = vpop.xlane.xlu0 %2739
    %v2741 = vsel %vm346, %v2737, 0.0
    %2742 = vadd.xlane.f32.xlu0 %v2741
    %v2743 = vpop.xlane.xlu0 %2742
    %v2744 = vrcp.pop %v2740
    %v2745 = vrcp.pop %v2743
    %v2746 = vmul.f32 %v2735, %v2744
    %v2747 = vmul.f32 %v2737, %v2745
    %2749 = vrot.lane.b32.xlu0 %v2236, 112
    %v2750 = vpop.permute.xlu0 %2749
    %v2753 = vsel %vm346, %v2746, 0
    %2755 = vmatprep.subr.mxu0 0.0
    %2756 = vmatpush1.msra.mxu0 0.0
    %2757 = vmatprep.subr.mxu0 0.0
    %2758 = vmatpush1.msra.mxu0 0.0
    %2759 = vmatprep.subr.mxu0 0.0
    %2760 = vmatpush1.msra.mxu0 0.0
    %2761 = vmatprep.subr.mxu0 0.0
    %2762 = vmatpush1.msra.mxu0 0.0
    %2763 = vmatprep.subr.mxu0 0.0
    %2764 = vmatpush1.msra.mxu0 0.0
    %2765 = vmatprep.subr.mxu0 0.0
    %2766 = vmatpush1.msra.mxu0 0.0
    %2767 = vmatprep.subr.mxu0 0.0
    %2768 = vmatpush1.msra.mxu0 0.0
    %2769 = vmatprep.subr.mxu0 0.0
    %2770 = vmatpush1.msra.mxu0 0.0
    %2771 = vmatprep.subr.mxu0 0.0
    %2772 = vmatpush1.msra.mxu0 0.0
    %2773 = vmatprep.subr.mxu0 0.0
    %2774 = vmatpush1.msra.mxu0 0.0
    %2775 = vmatprep.subr.mxu0 0.0
    %2776 = vmatpush1.msra.mxu0 0.0
    %2777 = vmatprep.subr.mxu0 0.0
    %2778 = vmatpush1.msra.mxu0 0.0
    %2779 = vmatprep.subr.mxu0 0.0
    %2780 = vmatpush1.msra.mxu0 0.0
    %2781 = vmatprep.subr.mxu0 0.0
    %2782 = vmatpush1.msra.mxu0 0.0
    %2783 = vmatprep.subr.mxu0 0.0
    %2784 = vmatpush1.msra.mxu0 0.0
    %2785 = vmatprep.subr.mxu0 0.0
    %2786 = vmatpush1.msra.mxu0 %v2750
    %2787 = vmatprep.subr.mxu0 0.0
    %2788 = vmatpush2.msra.mxu0 0.0
    %2789 = vmatprep.subr.mxu0 0.0
    %2790 = vmatpush2.msra.mxu0 0.0
    %2791 = vmatprep.subr.mxu0 0.0
    %2792 = vmatpush2.msra.mxu0 0.0
    %2793 = vmatprep.subr.mxu0 0.0
    %2794 = vmatpush2.msra.mxu0 0.0
    %2795 = vmatprep.subr.mxu0 0.0
    %2796 = vmatpush2.msra.mxu0 0.0
    %2797 = vmatprep.subr.mxu0 0.0
    %2798 = vmatpush2.msra.mxu0 0.0
    %2799 = vmatprep.subr.mxu0 0.0
    %2800 = vmatpush2.msra.mxu0 0.0
    %2801 = vmatprep.subr.mxu0 0.0
    %2802 = vmatpush2.msra.mxu0 0.0
    %2803 = vmatprep.subr.mxu0 0.0
    %2804 = vmatpush2.msra.mxu0 0.0
    %2805 = vmatprep.subr.mxu0 0.0
    %2806 = vmatpush2.msra.mxu0 0.0
    %2807 = vmatprep.subr.mxu0 0.0
    %2808 = vmatpush2.msra.mxu0 0.0
    %2809 = vmatprep.subr.mxu0 0.0
    %2810 = vmatpush2.msra.mxu0 0.0
    %2811 = vmatprep.subr.mxu0 0.0
    %2812 = vmatpush2.msra.mxu0 0.0
    %2813 = vmatprep.subr.mxu0 0.0
    %2814 = vmatpush2.msra.mxu0 0.0
    %2815 = vmatprep.subr.mxu0 0.0
    %2816 = vmatpush2.msra.mxu0 0.0
    %2817 = vmatprep.subr.mxu0 0.0
    %2818 = vmatpush2.msra.mxu0 0.0
    %2819 = vmatprep.mubr.f32.mxu0 0.0
    %2820 = vmatmul.mubr.f32.gmra.mxu0 %v2753
    %v2821 = vpop.f32.mrf.mxu0
    %v2822 = vadd.f32 0.0, %v2821
    %v2823 = vpop.f32.mrf.mxu0
    %2824 = vdwg.mxu0
    %2826 = vrot.lane.b32.xlu0 %v2242, 112
    %v2827 = vpop.permute.xlu0 %2826
    %v2830 = vsel %vm346, %v2747, 0
    %2832 = vmatprep.subr.mxu0 0.0
    %2833 = vmatpush1.msra.mxu0 0.0
    %2834 = vmatprep.subr.mxu0 0.0
    %2835 = vmatpush1.msra.mxu0 0.0
    %2836 = vmatprep.subr.mxu0 0.0
    %2837 = vmatpush1.msra.mxu0 0.0
    %2838 = vmatprep.subr.mxu0 0.0
    %2839 = vmatpush1.msra.mxu0 0.0
    %2840 = vmatprep.subr.mxu0 0.0
    %2841 = vmatpush1.msra.mxu0 0.0
    %2842 = vmatprep.subr.mxu0 0.0
    %2843 = vmatpush1.msra.mxu0 0.0
    %2844 = vmatprep.subr.mxu0 0.0
    %2845 = vmatpush1.msra.mxu0 0.0
    %2846 = vmatprep.subr.mxu0 0.0
    %2847 = vmatpush1.msra.mxu0 0.0
    %2848 = vmatprep.subr.mxu0 0.0
    %2849 = vmatpush1.msra.mxu0 0.0
    %2850 = vmatprep.subr.mxu0 0.0
    %2851 = vmatpush1.msra.mxu0 0.0
    %2852 = vmatprep.subr.mxu0 0.0
    %2853 = vmatpush1.msra.mxu0 0.0
    %2854 = vmatprep.subr.mxu0 0.0
    %2855 = vmatpush1.msra.mxu0 0.0
    %2856 = vmatprep.subr.mxu0 0.0
    %2857 = vmatpush1.msra.mxu0 0.0
    %2858 = vmatprep.subr.mxu0 0.0
    %2859 = vmatpush1.msra.mxu0 0.0
    %2860 = vmatprep.subr.mxu0 0.0
    %2861 = vmatpush1.msra.mxu0 0.0
    %2862 = vmatprep.subr.mxu0 0.0
    %2863 = vmatpush1.msra.mxu0 %v2827
    %2864 = vmatprep.subr.mxu0 0.0
    %2865 = vmatpush2.msra.mxu0 0.0
    %2866 = vmatprep.subr.mxu0 0.0
    %2867 = vmatpush2.msra.mxu0 0.0
    %2868 = vmatprep.subr.mxu0 0.0
    %2869 = vmatpush2.msra.mxu0 0.0
    %2870 = vmatprep.subr.mxu0 0.0
    %2871 = vmatpush2.msra.mxu0 0.0
    %2872 = vmatprep.subr.mxu0 0.0
    %2873 = vmatpush2.msra.mxu0 0.0
    %2874 = vmatprep.subr.mxu0 0.0
    %2875 = vmatpush2.msra.mxu0 0.0
    %2876 = vmatprep.subr.mxu0 0.0
    %2877 = vmatpush2.msra.mxu0 0.0
    %2878 = vmatprep.subr.mxu0 0.0
    %2879 = vmatpush2.msra.mxu0 0.0
    %2880 = vmatprep.subr.mxu0 0.0
    %2881 = vmatpush2.msra.mxu0 0.0
    %2882 = vmatprep.subr.mxu0 0.0
    %2883 = vmatpush2.msra.mxu0 0.0
    %2884 = vmatprep.subr.mxu0 0.0
    %2885 = vmatpush2.msra.mxu0 0.0
    %2886 = vmatprep.subr.mxu0 0.0
    %2887 = vmatpush2.msra.mxu0 0.0
    %2888 = vmatprep.subr.mxu0 0.0
    %2889 = vmatpush2.msra.mxu0 0.0
    %2890 = vmatprep.subr.mxu0 0.0
    %2891 = vmatpush2.msra.mxu0 0.0
    %2892 = vmatprep.subr.mxu0 0.0
    %2893 = vmatpush2.msra.mxu0 0.0
    %2894 = vmatprep.subr.mxu0 0.0
    %2895 = vmatpush2.msra.mxu0 0.0
    %2896 = vmatprep.mubr.f32.mxu0 0.0
    %2897 = vmatmul.mubr.f32.gmra.mxu0 %v2830
    %v2898 = vpop.f32.mrf.mxu0
    %v2899 = vadd.f32 0.0, %v2898
    %v2900 = vpop.f32.mrf.mxu0
    %2901 = vdwg.mxu0
    %v2903 = vsel %vm192, %v2822, 0
    %v2906 = vsel %vm192, %v2899, 0
    %2908 = vmatprep.subr.mxu0 0.0
    %2909 = vmatpush1.msra.mxu0 0.0
    %2910 = vmatprep.subr.mxu0 0.0
    %2911 = vmatpush1.msra.mxu0 0.0
    %2912 = vmatprep.subr.mxu0 0.0
    %2913 = vmatpush1.msra.mxu0 0.0
    %2914 = vmatprep.subr.mxu0 0.0
    %2915 = vmatpush1.msra.mxu0 0.0
    %2916 = vmatprep.subr.mxu0 0.0
    %2917 = vmatpush1.msra.mxu0 0.0
    %2918 = vmatprep.subr.mxu0 0.0
    %2919 = vmatpush1.msra.mxu0 0.0
    %2920 = vmatprep.subr.mxu0 0.0
    %2921 = vmatpush1.msra.mxu0 0.0
    %2922 = vmatprep.subr.mxu0 0.0
    %2923 = vmatpush1.msra.mxu0 0.0
    %2924 = vmatprep.subr.mxu0 0.0
    %2925 = vmatpush1.msra.mxu0 0.0
    %2926 = vmatprep.subr.mxu0 0.0
    %2927 = vmatpush1.msra.mxu0 0.0
    %2928 = vmatprep.subr.mxu0 0.0
    %2929 = vmatpush1.msra.mxu0 0.0
    %2930 = vmatprep.subr.mxu0 0.0
    %2931 = vmatpush1.msra.mxu0 0.0
    %2932 = vmatprep.subr.mxu0 0.0
    %2933 = vmatpush1.msra.mxu0 0.0
    %2934 = vmatprep.subr.mxu0 0.0
    %2935 = vmatpush1.msra.mxu0 0.0
    %2936 = vmatprep.subr.mxu0 0.0
    %2937 = vmatpush1.msra.mxu0 %v2110
    %2938 = vmatprep.subr.mxu0 0.0
    %2939 = vmatpush1.msra.mxu0 %v2109
    %2940 = vmatprep.subr.mxu0 0.0
    %2941 = vmatpush2.msra.mxu0 0.0
    %2942 = vmatprep.subr.mxu0 0.0
    %2943 = vmatpush2.msra.mxu0 0.0
    %2944 = vmatprep.subr.mxu0 0.0
    %2945 = vmatpush2.msra.mxu0 0.0
    %2946 = vmatprep.subr.mxu0 0.0
    %2947 = vmatpush2.msra.mxu0 0.0
    %2948 = vmatprep.subr.mxu0 0.0
    %2949 = vmatpush2.msra.mxu0 0.0
    %2950 = vmatprep.subr.mxu0 0.0
    %2951 = vmatpush2.msra.mxu0 0.0
    %2952 = vmatprep.subr.mxu0 0.0
    %2953 = vmatpush2.msra.mxu0 0.0
    %2954 = vmatprep.subr.mxu0 0.0
    %2955 = vmatpush2.msra.mxu0 0.0
    %2956 = vmatprep.subr.mxu0 0.0
    %2957 = vmatpush2.msra.mxu0 0.0
    %2958 = vmatprep.subr.mxu0 0.0
    %2959 = vmatpush2.msra.mxu0 0.0
    %2960 = vmatprep.subr.mxu0 0.0
    %2961 = vmatpush2.msra.mxu0 0.0
    %2962 = vmatprep.subr.mxu0 0.0
    %2963 = vmatpush2.msra.mxu0 0.0
    %2964 = vmatprep.subr.mxu0 0.0
    %2965 = vmatpush2.msra.mxu0 0.0
    %2966 = vmatprep.subr.mxu0 0.0
    %2967 = vmatpush2.msra.mxu0 0.0
    %2968 = vmatprep.subr.mxu0 0.0
    %2969 = vmatpush2.msra.mxu0 0.0
    %2970 = vmatprep.subr.mxu0 0.0
    %2971 = vmatpush2.msra.mxu0 0.0
    %2972 = vmatprep.mubr.f32.mxu0 0.0
    %2973 = vmatmul.mubr.f32.gmra.mxu0 %v2903
    %v2974 = vpop.f32.mrf.mxu0
    %v2975 = vadd.f32 0.0, %v2974
    %v2976 = vpop.f32.mrf.mxu0
    %2977 = vmatprep.mubr.f32.mxu0 0.0
    %2978 = vmatmul.mubr.f32.gmra.mxu0 %v2906
    %v2979 = vpop.f32.mrf.mxu0
    %v2980 = vadd.f32 0.0, %v2979
    %v2981 = vpop.f32.mrf.mxu0
    %2982 = vdwg.mxu0
    %v2984 = vsel %vm192, %v2492, 0
    %v2987 = vsel %vm192, %v2565, 0
    %2989 = vmatprep.subr.mxu0 0.0
    %2990 = vmatpush1.msra.mxu0 0.0
    %2991 = vmatprep.subr.mxu0 0.0
    %2992 = vmatpush1.msra.mxu0 0.0
    %2993 = vmatprep.subr.mxu0 0.0
    %2994 = vmatpush1.msra.mxu0 0.0
    %2995 = vmatprep.subr.mxu0 0.0
    %2996 = vmatpush1.msra.mxu0 0.0
    %2997 = vmatprep.subr.mxu0 0.0
    %2998 = vmatpush1.msra.mxu0 0.0
    %2999 = vmatprep.subr.mxu0 0.0
    %3000 = vmatpush1.msra.mxu0 0.0
    %3001 = vmatprep.subr.mxu0 0.0
    %3002 = vmatpush1.msra.mxu0 0.0
    %3003 = vmatprep.subr.mxu0 0.0
    %3004 = vmatpush1.msra.mxu0 0.0
    %3005 = vmatprep.subr.mxu0 0.0
    %3006 = vmatpush1.msra.mxu0 0.0
    %3007 = vmatprep.subr.mxu0 0.0
    %3008 = vmatpush1.msra.mxu0 0.0
    %3009 = vmatprep.subr.mxu0 0.0
    %3010 = vmatpush1.msra.mxu0 0.0
    %3011 = vmatprep.subr.mxu0 0.0
    %3012 = vmatpush1.msra.mxu0 0.0
    %3013 = vmatprep.subr.mxu0 0.0
    %3014 = vmatpush1.msra.mxu0 0.0
    %3015 = vmatprep.subr.mxu0 0.0
    %3016 = vmatpush1.msra.mxu0 0.0
    %3017 = vmatprep.subr.mxu0 0.0
    %3018 = vmatpush1.msra.mxu0 %v2108
    %3019 = vmatprep.subr.mxu0 0.0
    %3020 = vmatpush1.msra.mxu0 %v2107
    %3021 = vmatprep.subr.mxu0 0.0
    %3022 = vmatpush2.msra.mxu0 0.0
    %3023 = vmatprep.subr.mxu0 0.0
    %3024 = vmatpush2.msra.mxu0 0.0
    %3025 = vmatprep.subr.mxu0 0.0
    %3026 = vmatpush2.msra.mxu0 0.0
    %3027 = vmatprep.subr.mxu0 0.0
    %3028 = vmatpush2.msra.mxu0 0.0
    %3029 = vmatprep.subr.mxu0 0.0
    %3030 = vmatpush2.msra.mxu0 0.0
    %3031 = vmatprep.subr.mxu0 0.0
    %3032 = vmatpush2.msra.mxu0 0.0
    %3033 = vmatprep.subr.mxu0 0.0
    %3034 = vmatpush2.msra.mxu0 0.0
    %3035 = vmatprep.subr.mxu0 0.0
    %3036 = vmatpush2.msra.mxu0 0.0
    %3037 = vmatprep.subr.mxu0 0.0
    %3038 = vmatpush2.msra.mxu0 0.0
    %3039 = vmatprep.subr.mxu0 0.0
    %3040 = vmatpush2.msra.mxu0 0.0
    %3041 = vmatprep.subr.mxu0 0.0
    %3042 = vmatpush2.msra.mxu0 0.0
    %3043 = vmatprep.subr.mxu0 0.0
    %3044 = vmatpush2.msra.mxu0 0.0
    %3045 = vmatprep.subr.mxu0 0.0
    %3046 = vmatpush2.msra.mxu0 0.0
    %3047 = vmatprep.subr.mxu0 0.0
    %3048 = vmatpush2.msra.mxu0 0.0
    %3049 = vmatprep.subr.mxu0 0.0
    %3050 = vmatpush2.msra.mxu0 0.0
    %3051 = vmatprep.subr.mxu0 0.0
    %3052 = vmatpush2.msra.mxu0 0.0
    %3053 = vmatprep.mubr.f32.mxu0 0.0
    %3054 = vmatmul.mubr.f32.gmra.mxu0 %v2984
    %v3055 = vpop.f32.mrf.mxu0
    %v3056 = vadd.f32 %v2975, %v3055
    %v3057 = vpop.f32.mrf.mxu0
    %3058 = vmatprep.mubr.f32.mxu0 0.0
    %3059 = vmatmul.mubr.f32.gmra.mxu0 %v2987
    %v3060 = vpop.f32.mrf.mxu0
    %v3061 = vadd.f32 %v2980, %v3060
    %v3062 = vpop.f32.mrf.mxu0
    %3063 = vdwg.mxu0
    %3064 = vrot.lane.b32.xlu0 %v2234, 96
    %v3065 = vpop.permute.xlu0 %3064
    %3066 = vrot.lane.b32.xlu0 %v2234, 32
    %v3067 = vpop.permute.xlu0 %3066
    %v3068 = vsel %vm192, %v3065, 0
    %v3070 = vsel %vm192, %v3067, 0
    %3072 = vmatprep.subr.mxu0 0.0
    %3073 = vmatpush1.xpose.msra.mxu0 0.0
    %3074 = vmatprep.subr.mxu0 0.0
    %3075 = vmatpush1.xpose.msra.mxu0 0.0
    %3076 = vmatprep.subr.mxu0 0.0
    %3077 = vmatpush1.xpose.msra.mxu0 0.0
    %3078 = vmatprep.subr.mxu0 0.0
    %3079 = vmatpush1.xpose.msra.mxu0 0.0
    %3080 = vmatprep.subr.mxu0 0.0
    %3081 = vmatpush1.xpose.msra.mxu0 0.0
    %3082 = vmatprep.subr.mxu0 0.0
    %3083 = vmatpush1.xpose.msra.mxu0 0.0
    %3084 = vmatprep.subr.mxu0 0.0
    %3085 = vmatpush1.xpose.msra.mxu0 0.0
    %3086 = vmatprep.subr.mxu0 0.0
    %3087 = vmatpush1.xpose.msra.mxu0 0.0
    %3088 = vmatprep.subr.mxu0 0.0
    %3089 = vmatpush1.xpose.msra.mxu0 0.0
    %3090 = vmatprep.subr.mxu0 0.0
    %3091 = vmatpush1.xpose.msra.mxu0 0.0
    %3092 = vmatprep.subr.mxu0 0.0
    %3093 = vmatpush1.xpose.msra.mxu0 0.0
    %3094 = vmatprep.subr.mxu0 0.0
    %3095 = vmatpush1.xpose.msra.mxu0 0.0
    %3096 = vmatprep.subr.mxu0 0.0
    %3097 = vmatpush1.xpose.msra.mxu0 0.0
    %3098 = vmatprep.subr.mxu0 0.0
    %3099 = vmatpush1.xpose.msra.mxu0 0.0
    %3100 = vmatprep.subr.mxu0 0.0
    %3101 = vmatpush1.xpose.msra.mxu0 0.0
    %3102 = vmatprep.subr.mxu0 0.0
    %3103 = vmatpush1.xpose.msra.mxu0 %v3070
    %3104 = vmatprep.subr.mxu0 0.0
    %3105 = vmatpush2.xpose.msra.mxu0 0.0
    %3106 = vmatprep.subr.mxu0 0.0
    %3107 = vmatpush2.xpose.msra.mxu0 0.0
    %3108 = vmatprep.subr.mxu0 0.0
    %3109 = vmatpush2.xpose.msra.mxu0 0.0
    %3110 = vmatprep.subr.mxu0 0.0
    %3111 = vmatpush2.xpose.msra.mxu0 0.0
    %3112 = vmatprep.subr.mxu0 0.0
    %3113 = vmatpush2.xpose.msra.mxu0 0.0
    %3114 = vmatprep.subr.mxu0 0.0
    %3115 = vmatpush2.xpose.msra.mxu0 0.0
    %3116 = vmatprep.subr.mxu0 0.0
    %3117 = vmatpush2.xpose.msra.mxu0 0.0
    %3118 = vmatprep.subr.mxu0 0.0
    %3119 = vmatpush2.xpose.msra.mxu0 0.0
    %3120 = vmatprep.subr.mxu0 0.0
    %3121 = vmatpush2.xpose.msra.mxu0 0.0
    %3122 = vmatprep.subr.mxu0 0.0
    %3123 = vmatpush2.xpose.msra.mxu0 0.0
    %3124 = vmatprep.subr.mxu0 0.0
    %3125 = vmatpush2.xpose.msra.mxu0 0.0
    %3126 = vmatprep.subr.mxu0 0.0
    %3127 = vmatpush2.xpose.msra.mxu0 0.0
    %3128 = vmatprep.subr.mxu0 0.0
    %3129 = vmatpush2.xpose.msra.mxu0 0.0
    %3130 = vmatprep.subr.mxu0 0.0
    %3131 = vmatpush2.xpose.msra.mxu0 0.0
    %3132 = vmatprep.subr.mxu0 0.0
    %3133 = vmatpush2.xpose.msra.mxu0 0.0
    %3134 = vmatprep.subr.mxu0 0.0
    %3135 = vmatpush2.xpose.msra.mxu0 0.0
    %3136 = vmatprep.mubr.f32.mxu0 0.0
    %3137 = vmatmul.mubr.f32.gmra.mxu0 %v3068
    %v3138 = vpop.f32.mrf.mxu0
    %v3139 = vadd.f32 0.0, %v3138
    %v3140 = vpop.f32.mrf.mxu0
    %3141 = vdwg.mxu0
    %3142 = vrot.lane.b32.xlu0 %v2240, 96
    %v3143 = vpop.permute.xlu0 %3142
    %3144 = vrot.lane.b32.xlu0 %v2240, 32
    %v3145 = vpop.permute.xlu0 %3144
    %v3146 = vsel %vm192, %v3143, 0
    %v3148 = vsel %vm192, %v3145, 0
    %3150 = vmatprep.subr.mxu0 0.0
    %3151 = vmatpush1.xpose.msra.mxu0 0.0
    %3152 = vmatprep.subr.mxu0 0.0
    %3153 = vmatpush1.xpose.msra.mxu0 0.0
    %3154 = vmatprep.subr.mxu0 0.0
    %3155 = vmatpush1.xpose.msra.mxu0 0.0
    %3156 = vmatprep.subr.mxu0 0.0
    %3157 = vmatpush1.xpose.msra.mxu0 0.0
    %3158 = vmatprep.subr.mxu0 0.0
    %3159 = vmatpush1.xpose.msra.mxu0 0.0
    %3160 = vmatprep.subr.mxu0 0.0
    %3161 = vmatpush1.xpose.msra.mxu0 0.0
    %3162 = vmatprep.subr.mxu0 0.0
    %3163 = vmatpush1.xpose.msra.mxu0 0.0
    %3164 = vmatprep.subr.mxu0 0.0
    %3165 = vmatpush1.xpose.msra.mxu0 0.0
    %3166 = vmatprep.subr.mxu0 0.0
    %3167 = vmatpush1.xpose.msra.mxu0 0.0
    %3168 = vmatprep.subr.mxu0 0.0
    %3169 = vmatpush1.xpose.msra.mxu0 0.0
    %3170 = vmatprep.subr.mxu0 0.0
    %3171 = vmatpush1.xpose.msra.mxu0 0.0
    %3172 = vmatprep.subr.mxu0 0.0
    %3173 = vmatpush1.xpose.msra.mxu0 0.0
    %3174 = vmatprep.subr.mxu0 0.0
    %3175 = vmatpush1.xpose.msra.mxu0 0.0
    %3176 = vmatprep.subr.mxu0 0.0
    %3177 = vmatpush1.xpose.msra.mxu0 0.0
    %3178 = vmatprep.subr.mxu0 0.0
    %3179 = vmatpush1.xpose.msra.mxu0 0.0
    %3180 = vmatprep.subr.mxu0 0.0
    %3181 = vmatpush1.xpose.msra.mxu0 %v3148
    %3182 = vmatprep.subr.mxu0 0.0
    %3183 = vmatpush2.xpose.msra.mxu0 0.0
    %3184 = vmatprep.subr.mxu0 0.0
    %3185 = vmatpush2.xpose.msra.mxu0 0.0
    %3186 = vmatprep.subr.mxu0 0.0
    %3187 = vmatpush2.xpose.msra.mxu0 0.0
    %3188 = vmatprep.subr.mxu0 0.0
    %3189 = vmatpush2.xpose.msra.mxu0 0.0
    %3190 = vmatprep.subr.mxu0 0.0
    %3191 = vmatpush2.xpose.msra.mxu0 0.0
    %3192 = vmatprep.subr.mxu0 0.0
    %3193 = vmatpush2.xpose.msra.mxu0 0.0
    %3194 = vmatprep.subr.mxu0 0.0
    %3195 = vmatpush2.xpose.msra.mxu0 0.0
    %3196 = vmatprep.subr.mxu0 0.0
    %3197 = vmatpush2.xpose.msra.mxu0 0.0
    %3198 = vmatprep.subr.mxu0 0.0
    %3199 = vmatpush2.xpose.msra.mxu0 0.0
    %3200 = vmatprep.subr.mxu0 0.0
    %3201 = vmatpush2.xpose.msra.mxu0 0.0
    %3202 = vmatprep.subr.mxu0 0.0
    %3203 = vmatpush2.xpose.msra.mxu0 0.0
    %3204 = vmatprep.subr.mxu0 0.0
    %3205 = vmatpush2.xpose.msra.mxu0 0.0
    %3206 = vmatprep.subr.mxu0 0.0
    %3207 = vmatpush2.xpose.msra.mxu0 0.0
    %3208 = vmatprep.subr.mxu0 0.0
    %3209 = vmatpush2.xpose.msra.mxu0 0.0
    %3210 = vmatprep.subr.mxu0 0.0
    %3211 = vmatpush2.xpose.msra.mxu0 0.0
    %3212 = vmatprep.subr.mxu0 0.0
    %3213 = vmatpush2.xpose.msra.mxu0 0.0
    %3214 = vmatprep.mubr.f32.mxu0 0.0
    %3215 = vmatmul.mubr.f32.gmra.mxu0 %v3146
    %v3216 = vpop.f32.mrf.mxu0
    %v3217 = vadd.f32 0.0, %v3216
    %v3218 = vpop.f32.mrf.mxu0
    %3219 = vdwg.mxu0
    %v3220 = vmul.f32 %v3139, 0.25
    %v3221 = vmul.f32 %v3217, 0.25
    %v3222 = vsel %vm346, %v3220, -inf
    %3223 = vmax.xlane.f32.xlu0 %v3222
    %v3224 = vpop.xlane.xlu0 %3223
    %v3225 = vsel %vm346, %v3221, -inf
    %3226 = vmax.xlane.f32.xlu0 %v3225
    %v3227 = vpop.xlane.xlu0 %3226
    %v3228 = vsub.f32 %v3220, %v3224
    %v3229 = vsub.f32 %v3221, %v3227
    %v3230 = vmul.f32 %v3228, 1.442695
    %v3231 = vpow.pop %v3230
    %v3232 = vmul.f32 %v3229, 1.442695
    %v3233 = vpow.pop %v3232
    %v3234 = vsel %vm346, %v3231, 0.0
    %3235 = vadd.xlane.f32.xlu0 %v3234
    %v3236 = vpop.xlane.xlu0 %3235
    %v3237 = vsel %vm346, %v3233, 0.0
    %3238 = vadd.xlane.f32.xlu0 %v3237
    %v3239 = vpop.xlane.xlu0 %3238
    %v3240 = vrcp.pop %v3236
    %v3241 = vrcp.pop %v3239
    %v3242 = vmul.f32 %v3231, %v3240
    %v3243 = vmul.f32 %v3233, %v3241
    %3244 = vrot.lane.b32.xlu0 %v2236, 96
    %v3245 = vpop.permute.xlu0 %3244
    %v3248 = vsel %vm346, %v3242, 0
    %3250 = vmatprep.subr.mxu0 0.0
    %3251 = vmatpush1.msra.mxu0 0.0
    %3252 = vmatprep.subr.mxu0 0.0
    %3253 = vmatpush1.msra.mxu0 0.0
    %3254 = vmatprep.subr.mxu0 0.0
    %3255 = vmatpush1.msra.mxu0 0.0
    %3256 = vmatprep.subr.mxu0 0.0
    %3257 = vmatpush1.msra.mxu0 0.0
    %3258 = vmatprep.subr.mxu0 0.0
    %3259 = vmatpush1.msra.mxu0 0.0
    %3260 = vmatprep.subr.mxu0 0.0
    %3261 = vmatpush1.msra.mxu0 0.0
    %3262 = vmatprep.subr.mxu0 0.0
    %3263 = vmatpush1.msra.mxu0 0.0
    %3264 = vmatprep.subr.mxu0 0.0
    %3265 = vmatpush1.msra.mxu0 0.0
    %3266 = vmatprep.subr.mxu0 0.0
    %3267 = vmatpush1.msra.mxu0 0.0
    %3268 = vmatprep.subr.mxu0 0.0
    %3269 = vmatpush1.msra.mxu0 0.0
    %3270 = vmatprep.subr.mxu0 0.0
    %3271 = vmatpush1.msra.mxu0 0.0
    %3272 = vmatprep.subr.mxu0 0.0
    %3273 = vmatpush1.msra.mxu0 0.0
    %3274 = vmatprep.subr.mxu0 0.0
    %3275 = vmatpush1.msra.mxu0 0.0
    %3276 = vmatprep.subr.mxu0 0.0
    %3277 = vmatpush1.msra.mxu0 0.0
    %3278 = vmatprep.subr.mxu0 0.0
    %3279 = vmatpush1.msra.mxu0 0.0
    %3280 = vmatprep.subr.mxu0 0.0
    %3281 = vmatpush1.msra.mxu0 %v3245
    %3282 = vmatprep.subr.mxu0 0.0
    %3283 = vmatpush2.msra.mxu0 0.0
    %3284 = vmatprep.subr.mxu0 0.0
    %3285 = vmatpush2.msra.mxu0 0.0
    %3286 = vmatprep.subr.mxu0 0.0
    %3287 = vmatpush2.msra.mxu0 0.0
    %3288 = vmatprep.subr.mxu0 0.0
    %3289 = vmatpush2.msra.mxu0 0.0
    %3290 = vmatprep.subr.mxu0 0.0
    %3291 = vmatpush2.msra.mxu0 0.0
    %3292 = vmatprep.subr.mxu0 0.0
    %3293 = vmatpush2.msra.mxu0 0.0
    %3294 = vmatprep.subr.mxu0 0.0
    %3295 = vmatpush2.msra.mxu0 0.0
    %3296 = vmatprep.subr.mxu0 0.0
    %3297 = vmatpush2.msra.mxu0 0.0
    %3298 = vmatprep.subr.mxu0 0.0
    %3299 = vmatpush2.msra.mxu0 0.0
    %3300 = vmatprep.subr.mxu0 0.0
    %3301 = vmatpush2.msra.mxu0 0.0
    %3302 = vmatprep.subr.mxu0 0.0
    %3303 = vmatpush2.msra.mxu0 0.0
    %3304 = vmatprep.subr.mxu0 0.0
    %3305 = vmatpush2.msra.mxu0 0.0
    %3306 = vmatprep.subr.mxu0 0.0
    %3307 = vmatpush2.msra.mxu0 0.0
    %3308 = vmatprep.subr.mxu0 0.0
    %3309 = vmatpush2.msra.mxu0 0.0
    %3310 = vmatprep.subr.mxu0 0.0
    %3311 = vmatpush2.msra.mxu0 0.0
    %3312 = vmatprep.subr.mxu0 0.0
    %3313 = vmatpush2.msra.mxu0 0.0
    %3314 = vmatprep.mubr.f32.mxu0 0.0
    %3315 = vmatmul.mubr.f32.gmra.mxu0 %v3248
    %v3316 = vpop.f32.mrf.mxu0
    %v3317 = vadd.f32 0.0, %v3316
    %v3318 = vpop.f32.mrf.mxu0
    %3319 = vdwg.mxu0
    %3320 = vrot.lane.b32.xlu0 %v2242, 96
    %v3321 = vpop.permute.xlu0 %3320
    %v3324 = vsel %vm346, %v3243, 0
    %3326 = vmatprep.subr.mxu0 0.0
    %3327 = vmatpush1.msra.mxu0 0.0
    %3328 = vmatprep.subr.mxu0 0.0
    %3329 = vmatpush1.msra.mxu0 0.0
    %3330 = vmatprep.subr.mxu0 0.0
    %3331 = vmatpush1.msra.mxu0 0.0
    %3332 = vmatprep.subr.mxu0 0.0
    %3333 = vmatpush1.msra.mxu0 0.0
    %3334 = vmatprep.subr.mxu0 0.0
    %3335 = vmatpush1.msra.mxu0 0.0
    %3336 = vmatprep.subr.mxu0 0.0
    %3337 = vmatpush1.msra.mxu0 0.0
    %3338 = vmatprep.subr.mxu0 0.0
    %3339 = vmatpush1.msra.mxu0 0.0
    %3340 = vmatprep.subr.mxu0 0.0
    %3341 = vmatpush1.msra.mxu0 0.0
    %3342 = vmatprep.subr.mxu0 0.0
    %3343 = vmatpush1.msra.mxu0 0.0
    %3344 = vmatprep.subr.mxu0 0.0
    %3345 = vmatpush1.msra.mxu0 0.0
    %3346 = vmatprep.subr.mxu0 0.0
    %3347 = vmatpush1.msra.mxu0 0.0
    %3348 = vmatprep.subr.mxu0 0.0
    %3349 = vmatpush1.msra.mxu0 0.0
    %3350 = vmatprep.subr.mxu0 0.0
    %3351 = vmatpush1.msra.mxu0 0.0
    %3352 = vmatprep.subr.mxu0 0.0
    %3353 = vmatpush1.msra.mxu0 0.0
    %3354 = vmatprep.subr.mxu0 0.0
    %3355 = vmatpush1.msra.mxu0 0.0
    %3356 = vmatprep.subr.mxu0 0.0
    %3357 = vmatpush1.msra.mxu0 %v3321
    %3358 = vmatprep.subr.mxu0 0.0
    %3359 = vmatpush2.msra.mxu0 0.0
    %3360 = vmatprep.subr.mxu0 0.0
    %3361 = vmatpush2.msra.mxu0 0.0
    %3362 = vmatprep.subr.mxu0 0.0
    %3363 = vmatpush2.msra.mxu0 0.0
    %3364 = vmatprep.subr.mxu0 0.0
    %3365 = vmatpush2.msra.mxu0 0.0
    %3366 = vmatprep.subr.mxu0 0.0
    %3367 = vmatpush2.msra.mxu0 0.0
    %3368 = vmatprep.subr.mxu0 0.0
    %3369 = vmatpush2.msra.mxu0 0.0
    %3370 = vmatprep.subr.mxu0 0.0
    %3371 = vmatpush2.msra.mxu0 0.0
    %3372 = vmatprep.subr.mxu0 0.0
    %3373 = vmatpush2.msra.mxu0 0.0
    %3374 = vmatprep.subr.mxu0 0.0
    %3375 = vmatpush2.msra.mxu0 0.0
    %3376 = vmatprep.subr.mxu0 0.0
    %3377 = vmatpush2.msra.mxu0 0.0
    %3378 = vmatprep.subr.mxu0 0.0
    %3379 = vmatpush2.msra.mxu0 0.0
    %3380 = vmatprep.subr.mxu0 0.0
    %3381 = vmatpush2.msra.mxu0 0.0
    %3382 = vmatprep.subr.mxu0 0.0
    %3383 = vmatpush2.msra.mxu0 0.0
    %3384 = vmatprep.subr.mxu0 0.0
    %3385 = vmatpush2.msra.mxu0 0.0
    %3386 = vmatprep.subr.mxu0 0.0
    %3387 = vmatpush2.msra.mxu0 0.0
    %3388 = vmatprep.subr.mxu0 0.0
    %3389 = vmatpush2.msra.mxu0 0.0
    %3390 = vmatprep.mubr.f32.mxu0 0.0
    %3391 = vmatmul.mubr.f32.gmra.mxu0 %v3324
    %v3392 = vpop.f32.mrf.mxu0
    %v3393 = vadd.f32 0.0, %v3392
    %v3394 = vpop.f32.mrf.mxu0
    %3395 = vdwg.mxu0
    %v3397 = vsel %vm192, %v3317, 0
    %v3400 = vsel %vm192, %v3393, 0
    %3402 = vmatprep.subr.mxu0 0.0
    %3403 = vmatpush1.msra.mxu0 0.0
    %3404 = vmatprep.subr.mxu0 0.0
    %3405 = vmatpush1.msra.mxu0 0.0
    %3406 = vmatprep.subr.mxu0 0.0
    %3407 = vmatpush1.msra.mxu0 0.0
    %3408 = vmatprep.subr.mxu0 0.0
    %3409 = vmatpush1.msra.mxu0 0.0
    %3410 = vmatprep.subr.mxu0 0.0
    %3411 = vmatpush1.msra.mxu0 0.0
    %3412 = vmatprep.subr.mxu0 0.0
    %3413 = vmatpush1.msra.mxu0 0.0
    %3414 = vmatprep.subr.mxu0 0.0
    %3415 = vmatpush1.msra.mxu0 0.0
    %3416 = vmatprep.subr.mxu0 0.0
    %3417 = vmatpush1.msra.mxu0 0.0
    %3418 = vmatprep.subr.mxu0 0.0
    %3419 = vmatpush1.msra.mxu0 0.0
    %3420 = vmatprep.subr.mxu0 0.0
    %3421 = vmatpush1.msra.mxu0 0.0
    %3422 = vmatprep.subr.mxu0 0.0
    %3423 = vmatpush1.msra.mxu0 0.0
    %3424 = vmatprep.subr.mxu0 0.0
    %3425 = vmatpush1.msra.mxu0 0.0
    %3426 = vmatprep.subr.mxu0 0.0
    %3427 = vmatpush1.msra.mxu0 0.0
    %3428 = vmatprep.subr.mxu0 0.0
    %3429 = vmatpush1.msra.mxu0 0.0
    %3430 = vmatprep.subr.mxu0 0.0
    %3431 = vmatpush1.msra.mxu0 %v2112
    %3432 = vmatprep.subr.mxu0 0.0
    %3433 = vmatpush1.msra.mxu0 %v2111
    %3434 = vmatprep.subr.mxu0 0.0
    %3435 = vmatpush2.msra.mxu0 0.0
    %3436 = vmatprep.subr.mxu0 0.0
    %3437 = vmatpush2.msra.mxu0 0.0
    %3438 = vmatprep.subr.mxu0 0.0
    %3439 = vmatpush2.msra.mxu0 0.0
    %3440 = vmatprep.subr.mxu0 0.0
    %3441 = vmatpush2.msra.mxu0 0.0
    %3442 = vmatprep.subr.mxu0 0.0
    %3443 = vmatpush2.msra.mxu0 0.0
    %3444 = vmatprep.subr.mxu0 0.0
    %3445 = vmatpush2.msra.mxu0 0.0
    %3446 = vmatprep.subr.mxu0 0.0
    %3447 = vmatpush2.msra.mxu0 0.0
    %3448 = vmatprep.subr.mxu0 0.0
    %3449 = vmatpush2.msra.mxu0 0.0
    %3450 = vmatprep.subr.mxu0 0.0
    %3451 = vmatpush2.msra.mxu0 0.0
    %3452 = vmatprep.subr.mxu0 0.0
    %3453 = vmatpush2.msra.mxu0 0.0
    %3454 = vmatprep.subr.mxu0 0.0
    %3455 = vmatpush2.msra.mxu0 0.0
    %3456 = vmatprep.subr.mxu0 0.0
    %3457 = vmatpush2.msra.mxu0 0.0
    %3458 = vmatprep.subr.mxu0 0.0
    %3459 = vmatpush2.msra.mxu0 0.0
    %3460 = vmatprep.subr.mxu0 0.0
    %3461 = vmatpush2.msra.mxu0 0.0
    %3462 = vmatprep.subr.mxu0 0.0
    %3463 = vmatpush2.msra.mxu0 0.0
    %3464 = vmatprep.subr.mxu0 0.0
    %3465 = vmatpush2.msra.mxu0 0.0
    %3466 = vmatprep.mubr.f32.mxu0 0.0
    %3467 = vmatmul.mubr.f32.gmra.mxu0 %v3397
    %v3468 = vpop.f32.mrf.mxu0
    %v3469 = vadd.f32 0.0, %v3468
    %v3470 = vpop.f32.mrf.mxu0
    %3471 = vmatprep.mubr.f32.mxu0 0.0
    %3472 = vmatmul.mubr.f32.gmra.mxu0 %v3400
    %v3473 = vpop.f32.mrf.mxu0
    %v3474 = vadd.f32 0.0, %v3473
    %v3475 = vpop.f32.mrf.mxu0
    %3476 = vdwg.mxu0
    %v3477 = vadd.f32 %v3056, %v3469
    %v3478 = vadd.f32 %v3061, %v3474
    %3479 = vrot.lane.b32.xlu0 %v2234, 80
    %v3480 = vpop.permute.xlu0 %3479
    %3481 = vrot.lane.b32.xlu0 %v2234, 16
    %v3482 = vpop.permute.xlu0 %3481
    %v3483 = vsel %vm192, %v3480, 0
    %v3485 = vsel %vm192, %v3482, 0
    %3487 = vmatprep.subr.mxu0 0.0
    %3488 = vmatpush1.xpose.msra.mxu0 0.0
    %3489 = vmatprep.subr.mxu0 0.0
    %3490 = vmatpush1.xpose.msra.mxu0 0.0
    %3491 = vmatprep.subr.mxu0 0.0
    %3492 = vmatpush1.xpose.msra.mxu0 0.0
    %3493 = vmatprep.subr.mxu0 0.0
    %3494 = vmatpush1.xpose.msra.mxu0 0.0
    %3495 = vmatprep.subr.mxu0 0.0
    %3496 = vmatpush1.xpose.msra.mxu0 0.0
    %3497 = vmatprep.subr.mxu0 0.0
    %3498 = vmatpush1.xpose.msra.mxu0 0.0
    %3499 = vmatprep.subr.mxu0 0.0
    %3500 = vmatpush1.xpose.msra.mxu0 0.0
    %3501 = vmatprep.subr.mxu0 0.0
    %3502 = vmatpush1.xpose.msra.mxu0 0.0
    %3503 = vmatprep.subr.mxu0 0.0
    %3504 = vmatpush1.xpose.msra.mxu0 0.0
    %3505 = vmatprep.subr.mxu0 0.0
    %3506 = vmatpush1.xpose.msra.mxu0 0.0
    %3507 = vmatprep.subr.mxu0 0.0
    %3508 = vmatpush1.xpose.msra.mxu0 0.0
    %3509 = vmatprep.subr.mxu0 0.0
    %3510 = vmatpush1.xpose.msra.mxu0 0.0
    %3511 = vmatprep.subr.mxu0 0.0
    %3512 = vmatpush1.xpose.msra.mxu0 0.0
    %3513 = vmatprep.subr.mxu0 0.0
    %3514 = vmatpush1.xpose.msra.mxu0 0.0
    %3515 = vmatprep.subr.mxu0 0.0
    %3516 = vmatpush1.xpose.msra.mxu0 0.0
    %3517 = vmatprep.subr.mxu0 0.0
    %3518 = vmatpush1.xpose.msra.mxu0 %v3485
    %3519 = vmatprep.subr.mxu0 0.0
    %3520 = vmatpush2.xpose.msra.mxu0 0.0
    %3521 = vmatprep.subr.mxu0 0.0
    %3522 = vmatpush2.xpose.msra.mxu0 0.0
    %3523 = vmatprep.subr.mxu0 0.0
    %3524 = vmatpush2.xpose.msra.mxu0 0.0
    %3525 = vmatprep.subr.mxu0 0.0
    %3526 = vmatpush2.xpose.msra.mxu0 0.0
    %3527 = vmatprep.subr.mxu0 0.0
    %3528 = vmatpush2.xpose.msra.mxu0 0.0
    %3529 = vmatprep.subr.mxu0 0.0
    %3530 = vmatpush2.xpose.msra.mxu0 0.0
    %3531 = vmatprep.subr.mxu0 0.0
    %3532 = vmatpush2.xpose.msra.mxu0 0.0
    %3533 = vmatprep.subr.mxu0 0.0
    %3534 = vmatpush2.xpose.msra.mxu0 0.0
    %3535 = vmatprep.subr.mxu0 0.0
    %3536 = vmatpush2.xpose.msra.mxu0 0.0
    %3537 = vmatprep.subr.mxu0 0.0
    %3538 = vmatpush2.xpose.msra.mxu0 0.0
    %3539 = vmatprep.subr.mxu0 0.0
    %3540 = vmatpush2.xpose.msra.mxu0 0.0
    %3541 = vmatprep.subr.mxu0 0.0
    %3542 = vmatpush2.xpose.msra.mxu0 0.0
    %3543 = vmatprep.subr.mxu0 0.0
    %3544 = vmatpush2.xpose.msra.mxu0 0.0
    %3545 = vmatprep.subr.mxu0 0.0
    %3546 = vmatpush2.xpose.msra.mxu0 0.0
    %3547 = vmatprep.subr.mxu0 0.0
    %3548 = vmatpush2.xpose.msra.mxu0 0.0
    %3549 = vmatprep.subr.mxu0 0.0
    %3550 = vmatpush2.xpose.msra.mxu0 0.0
    %3551 = vmatprep.mubr.f32.mxu0 0.0
    %3552 = vmatmul.mubr.f32.gmra.mxu0 %v3483
    %v3553 = vpop.f32.mrf.mxu0
    %v3554 = vadd.f32 0.0, %v3553
    %v3555 = vpop.f32.mrf.mxu0
    %3556 = vdwg.mxu0
    %3557 = vrot.lane.b32.xlu0 %v2240, 80
    %v3558 = vpop.permute.xlu0 %3557
    %3559 = vrot.lane.b32.xlu0 %v2240, 16
    %v3560 = vpop.permute.xlu0 %3559
    %v3561 = vsel %vm192, %v3558, 0
    %v3563 = vsel %vm192, %v3560, 0
    %3565 = vmatprep.subr.mxu0 0.0
    %3566 = vmatpush1.xpose.msra.mxu0 0.0
    %3567 = vmatprep.subr.mxu0 0.0
    %3568 = vmatpush1.xpose.msra.mxu0 0.0
    %3569 = vmatprep.subr.mxu0 0.0
    %3570 = vmatpush1.xpose.msra.mxu0 0.0
    %3571 = vmatprep.subr.mxu0 0.0
    %3572 = vmatpush1.xpose.msra.mxu0 0.0
    %3573 = vmatprep.subr.mxu0 0.0
    %3574 = vmatpush1.xpose.msra.mxu0 0.0
    %3575 = vmatprep.subr.mxu0 0.0
    %3576 = vmatpush1.xpose.msra.mxu0 0.0
    %3577 = vmatprep.subr.mxu0 0.0
    %3578 = vmatpush1.xpose.msra.mxu0 0.0
    %3579 = vmatprep.subr.mxu0 0.0
    %3580 = vmatpush1.xpose.msra.mxu0 0.0
    %3581 = vmatprep.subr.mxu0 0.0
    %3582 = vmatpush1.xpose.msra.mxu0 0.0
    %3583 = vmatprep.subr.mxu0 0.0
    %3584 = vmatpush1.xpose.msra.mxu0 0.0
    %3585 = vmatprep.subr.mxu0 0.0
    %3586 = vmatpush1.xpose.msra.mxu0 0.0
    %3587 = vmatprep.subr.mxu0 0.0
    %3588 = vmatpush1.xpose.msra.mxu0 0.0
    %3589 = vmatprep.subr.mxu0 0.0
    %3590 = vmatpush1.xpose.msra.mxu0 0.0
    %3591 = vmatprep.subr.mxu0 0.0
    %3592 = vmatpush1.xpose.msra.mxu0 0.0
    %3593 = vmatprep.subr.mxu0 0.0
    %3594 = vmatpush1.xpose.msra.mxu0 0.0
    %3595 = vmatprep.subr.mxu0 0.0
    %3596 = vmatpush1.xpose.msra.mxu0 %v3563
    %3597 = vmatprep.subr.mxu0 0.0
    %3598 = vmatpush2.xpose.msra.mxu0 0.0
    %3599 = vmatprep.subr.mxu0 0.0
    %3600 = vmatpush2.xpose.msra.mxu0 0.0
    %3601 = vmatprep.subr.mxu0 0.0
    %3602 = vmatpush2.xpose.msra.mxu0 0.0
    %3603 = vmatprep.subr.mxu0 0.0
    %3604 = vmatpush2.xpose.msra.mxu0 0.0
    %3605 = vmatprep.subr.mxu0 0.0
    %3606 = vmatpush2.xpose.msra.mxu0 0.0
    %3607 = vmatprep.subr.mxu0 0.0
    %3608 = vmatpush2.xpose.msra.mxu0 0.0
    %3609 = vmatprep.subr.mxu0 0.0
    %3610 = vmatpush2.xpose.msra.mxu0 0.0
    %3611 = vmatprep.subr.mxu0 0.0
    %3612 = vmatpush2.xpose.msra.mxu0 0.0
    %3613 = vmatprep.subr.mxu0 0.0
    %3614 = vmatpush2.xpose.msra.mxu0 0.0
    %3615 = vmatprep.subr.mxu0 0.0
    %3616 = vmatpush2.xpose.msra.mxu0 0.0
    %3617 = vmatprep.subr.mxu0 0.0
    %3618 = vmatpush2.xpose.msra.mxu0 0.0
    %3619 = vmatprep.subr.mxu0 0.0
    %3620 = vmatpush2.xpose.msra.mxu0 0.0
    %3621 = vmatprep.subr.mxu0 0.0
    %3622 = vmatpush2.xpose.msra.mxu0 0.0
    %3623 = vmatprep.subr.mxu0 0.0
    %3624 = vmatpush2.xpose.msra.mxu0 0.0
    %3625 = vmatprep.subr.mxu0 0.0
    %3626 = vmatpush2.xpose.msra.mxu0 0.0
    %3627 = vmatprep.subr.mxu0 0.0
    %3628 = vmatpush2.xpose.msra.mxu0 0.0
    %3629 = vmatprep.mubr.f32.mxu0 0.0
    %3630 = vmatmul.mubr.f32.gmra.mxu0 %v3561
    %v3631 = vpop.f32.mrf.mxu0
    %v3632 = vadd.f32 0.0, %v3631
    %v3633 = vpop.f32.mrf.mxu0
    %3634 = vdwg.mxu0
    %v3635 = vmul.f32 %v3554, 0.25
    %v3636 = vmul.f32 %v3632, 0.25
    %v3637 = vsel %vm346, %v3635, -inf
    %3638 = vmax.xlane.f32.xlu0 %v3637
    %v3639 = vpop.xlane.xlu0 %3638
    %v3640 = vsel %vm346, %v3636, -inf
    %3641 = vmax.xlane.f32.xlu0 %v3640
    %v3642 = vpop.xlane.xlu0 %3641
    %v3643 = vsub.f32 %v3635, %v3639
    %v3644 = vsub.f32 %v3636, %v3642
    %v3645 = vmul.f32 %v3643, 1.442695
    %v3646 = vpow.pop %v3645
    %v3647 = vmul.f32 %v3644, 1.442695
    %v3648 = vpow.pop %v3647
    %v3649 = vsel %vm346, %v3646, 0.0
    %3650 = vadd.xlane.f32.xlu0 %v3649
    %v3651 = vpop.xlane.xlu0 %3650
    %v3652 = vsel %vm346, %v3648, 0.0
    %3653 = vadd.xlane.f32.xlu0 %v3652
    %v3654 = vpop.xlane.xlu0 %3653
    %v3655 = vrcp.pop %v3651
    %v3656 = vrcp.pop %v3654
    %v3657 = vmul.f32 %v3646, %v3655
    %v3658 = vmul.f32 %v3648, %v3656
    %3659 = vrot.lane.b32.xlu0 %v2236, 80
    %v3660 = vpop.permute.xlu0 %3659
    %v3663 = vsel %vm346, %v3657, 0
    %3665 = vmatprep.subr.mxu0 0.0
    %3666 = vmatpush1.msra.mxu0 0.0
    %3667 = vmatprep.subr.mxu0 0.0
    %3668 = vmatpush1.msra.mxu0 0.0
    %3669 = vmatprep.subr.mxu0 0.0
    %3670 = vmatpush1.msra.mxu0 0.0
    %3671 = vmatprep.subr.mxu0 0.0
    %3672 = vmatpush1.msra.mxu0 0.0
    %3673 = vmatprep.subr.mxu0 0.0
    %3674 = vmatpush1.msra.mxu0 0.0
    %3675 = vmatprep.subr.mxu0 0.0
    %3676 = vmatpush1.msra.mxu0 0.0
    %3677 = vmatprep.subr.mxu0 0.0
    %3678 = vmatpush1.msra.mxu0 0.0
    %3679 = vmatprep.subr.mxu0 0.0
    %3680 = vmatpush1.msra.mxu0 0.0
    %3681 = vmatprep.subr.mxu0 0.0
    %3682 = vmatpush1.msra.mxu0 0.0
    %3683 = vmatprep.subr.mxu0 0.0
    %3684 = vmatpush1.msra.mxu0 0.0
    %3685 = vmatprep.subr.mxu0 0.0
    %3686 = vmatpush1.msra.mxu0 0.0
    %3687 = vmatprep.subr.mxu0 0.0
    %3688 = vmatpush1.msra.mxu0 0.0
    %3689 = vmatprep.subr.mxu0 0.0
    %3690 = vmatpush1.msra.mxu0 0.0
    %3691 = vmatprep.subr.mxu0 0.0
    %3692 = vmatpush1.msra.mxu0 0.0
    %3693 = vmatprep.subr.mxu0 0.0
    %3694 = vmatpush1.msra.mxu0 0.0
    %3695 = vmatprep.subr.mxu0 0.0
    %3696 = vmatpush1.msra.mxu0 %v3660
    %3697 = vmatprep.subr.mxu0 0.0
    %3698 = vmatpush2.msra.mxu0 0.0
    %3699 = vmatprep.subr.mxu0 0.0
    %3700 = vmatpush2.msra.mxu0 0.0
    %3701 = vmatprep.subr.mxu0 0.0
    %3702 = vmatpush2.msra.mxu0 0.0
    %3703 = vmatprep.subr.mxu0 0.0
    %3704 = vmatpush2.msra.mxu0 0.0
    %3705 = vmatprep.subr.mxu0 0.0
    %3706 = vmatpush2.msra.mxu0 0.0
    %3707 = vmatprep.subr.mxu0 0.0
    %3708 = vmatpush2.msra.mxu0 0.0
    %3709 = vmatprep.subr.mxu0 0.0
    %3710 = vmatpush2.msra.mxu0 0.0
    %3711 = vmatprep.subr.mxu0 0.0
    %3712 = vmatpush2.msra.mxu0 0.0
    %3713 = vmatprep.subr.mxu0 0.0
    %3714 = vmatpush2.msra.mxu0 0.0
    %3715 = vmatprep.subr.mxu0 0.0
    %3716 = vmatpush2.msra.mxu0 0.0
    %3717 = vmatprep.subr.mxu0 0.0
    %3718 = vmatpush2.msra.mxu0 0.0
    %3719 = vmatprep.subr.mxu0 0.0
    %3720 = vmatpush2.msra.mxu0 0.0
    %3721 = vmatprep.subr.mxu0 0.0
    %3722 = vmatpush2.msra.mxu0 0.0
    %3723 = vmatprep.subr.mxu0 0.0
    %3724 = vmatpush2.msra.mxu0 0.0
    %3725 = vmatprep.subr.mxu0 0.0
    %3726 = vmatpush2.msra.mxu0 0.0
    %3727 = vmatprep.subr.mxu0 0.0
    %3728 = vmatpush2.msra.mxu0 0.0
    %3729 = vmatprep.mubr.f32.mxu0 0.0
    %3730 = vmatmul.mubr.f32.gmra.mxu0 %v3663
    %v3731 = vpop.f32.mrf.mxu0
    %v3732 = vadd.f32 0.0, %v3731
    %v3733 = vpop.f32.mrf.mxu0
    %3734 = vdwg.mxu0
    %3735 = vrot.lane.b32.xlu0 %v2242, 80
    %v3736 = vpop.permute.xlu0 %3735
    %v3739 = vsel %vm346, %v3658, 0
    %3741 = vmatprep.subr.mxu0 0.0
    %3742 = vmatpush1.msra.mxu0 0.0
    %3743 = vmatprep.subr.mxu0 0.0
    %3744 = vmatpush1.msra.mxu0 0.0
    %3745 = vmatprep.subr.mxu0 0.0
    %3746 = vmatpush1.msra.mxu0 0.0
    %3747 = vmatprep.subr.mxu0 0.0
    %3748 = vmatpush1.msra.mxu0 0.0
    %3749 = vmatprep.subr.mxu0 0.0
    %3750 = vmatpush1.msra.mxu0 0.0
    %3751 = vmatprep.subr.mxu0 0.0
    %3752 = vmatpush1.msra.mxu0 0.0
    %3753 = vmatprep.subr.mxu0 0.0
    %3754 = vmatpush1.msra.mxu0 0.0
    %3755 = vmatprep.subr.mxu0 0.0
    %3756 = vmatpush1.msra.mxu0 0.0
    %3757 = vmatprep.subr.mxu0 0.0
    %3758 = vmatpush1.msra.mxu0 0.0
    %3759 = vmatprep.subr.mxu0 0.0
    %3760 = vmatpush1.msra.mxu0 0.0
    %3761 = vmatprep.subr.mxu0 0.0
    %3762 = vmatpush1.msra.mxu0 0.0
    %3763 = vmatprep.subr.mxu0 0.0
    %3764 = vmatpush1.msra.mxu0 0.0
    %3765 = vmatprep.subr.mxu0 0.0
    %3766 = vmatpush1.msra.mxu0 0.0
    %3767 = vmatprep.subr.mxu0 0.0
    %3768 = vmatpush1.msra.mxu0 0.0
    %3769 = vmatprep.subr.mxu0 0.0
    %3770 = vmatpush1.msra.mxu0 0.0
    %3771 = vmatprep.subr.mxu0 0.0
    %3772 = vmatpush1.msra.mxu0 %v3736
    %3773 = vmatprep.subr.mxu0 0.0
    %3774 = vmatpush2.msra.mxu0 0.0
    %3775 = vmatprep.subr.mxu0 0.0
    %3776 = vmatpush2.msra.mxu0 0.0
    %3777 = vmatprep.subr.mxu0 0.0
    %3778 = vmatpush2.msra.mxu0 0.0
    %3779 = vmatprep.subr.mxu0 0.0
    %3780 = vmatpush2.msra.mxu0 0.0
    %3781 = vmatprep.subr.mxu0 0.0
    %3782 = vmatpush2.msra.mxu0 0.0
    %3783 = vmatprep.subr.mxu0 0.0
    %3784 = vmatpush2.msra.mxu0 0.0
    %3785 = vmatprep.subr.mxu0 0.0
    %3786 = vmatpush2.msra.mxu0 0.0
    %3787 = vmatprep.subr.mxu0 0.0
    %3788 = vmatpush2.msra.mxu0 0.0
    %3789 = vmatprep.subr.mxu0 0.0
    %3790 = vmatpush2.msra.mxu0 0.0
    %3791 = vmatprep.subr.mxu0 0.0
    %3792 = vmatpush2.msra.mxu0 0.0
    %3793 = vmatprep.subr.mxu0 0.0
    %3794 = vmatpush2.msra.mxu0 0.0
    %3795 = vmatprep.subr.mxu0 0.0
    %3796 = vmatpush2.msra.mxu0 0.0
    %3797 = vmatprep.subr.mxu0 0.0
    %3798 = vmatpush2.msra.mxu0 0.0
    %3799 = vmatprep.subr.mxu0 0.0
    %3800 = vmatpush2.msra.mxu0 0.0
    %3801 = vmatprep.subr.mxu0 0.0
    %3802 = vmatpush2.msra.mxu0 0.0
    %3803 = vmatprep.subr.mxu0 0.0
    %3804 = vmatpush2.msra.mxu0 0.0
    %3805 = vmatprep.mubr.f32.mxu0 0.0
    %3806 = vmatmul.mubr.f32.gmra.mxu0 %v3739
    %v3807 = vpop.f32.mrf.mxu0
    %v3808 = vadd.f32 0.0, %v3807
    %v3809 = vpop.f32.mrf.mxu0
    %3810 = vdwg.mxu0
    %v3812 = vsel %vm192, %v3732, 0
    %v3815 = vsel %vm192, %v3808, 0
    %3817 = vmatprep.subr.mxu0 0.0
    %3818 = vmatpush1.msra.mxu0 0.0
    %3819 = vmatprep.subr.mxu0 0.0
    %3820 = vmatpush1.msra.mxu0 0.0
    %3821 = vmatprep.subr.mxu0 0.0
    %3822 = vmatpush1.msra.mxu0 0.0
    %3823 = vmatprep.subr.mxu0 0.0
    %3824 = vmatpush1.msra.mxu0 0.0
    %3825 = vmatprep.subr.mxu0 0.0
    %3826 = vmatpush1.msra.mxu0 0.0
    %3827 = vmatprep.subr.mxu0 0.0
    %3828 = vmatpush1.msra.mxu0 0.0
    %3829 = vmatprep.subr.mxu0 0.0
    %3830 = vmatpush1.msra.mxu0 0.0
    %3831 = vmatprep.subr.mxu0 0.0
    %3832 = vmatpush1.msra.mxu0 0.0
    %3833 = vmatprep.subr.mxu0 0.0
    %3834 = vmatpush1.msra.mxu0 0.0
    %3835 = vmatprep.subr.mxu0 0.0
    %3836 = vmatpush1.msra.mxu0 0.0
    %3837 = vmatprep.subr.mxu0 0.0
    %3838 = vmatpush1.msra.mxu0 0.0
    %3839 = vmatprep.subr.mxu0 0.0
    %3840 = vmatpush1.msra.mxu0 0.0
    %3841 = vmatprep.subr.mxu0 0.0
    %3842 = vmatpush1.msra.mxu0 0.0
    %3843 = vmatprep.subr.mxu0 0.0
    %3844 = vmatpush1.msra.mxu0 0.0
    %3845 = vmatprep.subr.mxu0 0.0
    %3846 = vmatpush1.msra.mxu0 %v2114
    %3847 = vmatprep.subr.mxu0 0.0
    %3848 = vmatpush1.msra.mxu0 %v2113
    %3849 = vmatprep.subr.mxu0 0.0
    %3850 = vmatpush2.msra.mxu0 0.0
    %3851 = vmatprep.subr.mxu0 0.0
    %3852 = vmatpush2.msra.mxu0 0.0
    %3853 = vmatprep.subr.mxu0 0.0
    %3854 = vmatpush2.msra.mxu0 0.0
    %3855 = vmatprep.subr.mxu0 0.0
    %3856 = vmatpush2.msra.mxu0 0.0
    %3857 = vmatprep.subr.mxu0 0.0
    %3858 = vmatpush2.msra.mxu0 0.0
    %3859 = vmatprep.subr.mxu0 0.0
    %3860 = vmatpush2.msra.mxu0 0.0
    %3861 = vmatprep.subr.mxu0 0.0
    %3862 = vmatpush2.msra.mxu0 0.0
    %3863 = vmatprep.subr.mxu0 0.0
    %3864 = vmatpush2.msra.mxu0 0.0
    %3865 = vmatprep.subr.mxu0 0.0
    %3866 = vmatpush2.msra.mxu0 0.0
    %3867 = vmatprep.subr.mxu0 0.0
    %3868 = vmatpush2.msra.mxu0 0.0
    %3869 = vmatprep.subr.mxu0 0.0
    %3870 = vmatpush2.msra.mxu0 0.0
    %3871 = vmatprep.subr.mxu0 0.0
    %3872 = vmatpush2.msra.mxu0 0.0
    %3873 = vmatprep.subr.mxu0 0.0
    %3874 = vmatpush2.msra.mxu0 0.0
    %3875 = vmatprep.subr.mxu0 0.0
    %3876 = vmatpush2.msra.mxu0 0.0
    %3877 = vmatprep.subr.mxu0 0.0
    %3878 = vmatpush2.msra.mxu0 0.0
    %3879 = vmatprep.subr.mxu0 0.0
    %3880 = vmatpush2.msra.mxu0 0.0
    %3881 = vmatprep.mubr.f32.mxu0 0.0
    %3882 = vmatmul.mubr.f32.gmra.mxu0 %v3812
    %v3883 = vpop.f32.mrf.mxu0
    %v3884 = vadd.f32 0.0, %v3883
    %v3885 = vpop.f32.mrf.mxu0
    %3886 = vmatprep.mubr.f32.mxu0 0.0
    %3887 = vmatmul.mubr.f32.gmra.mxu0 %v3815
    %v3888 = vpop.f32.mrf.mxu0
    %v3889 = vadd.f32 0.0, %v3888
    %v3890 = vpop.f32.mrf.mxu0
    %3891 = vdwg.mxu0
    %v3892 = vadd.f32 %v3477, %v3884
    %v3893 = vadd.f32 %v3478, %v3889
    %s3894 = scalar_lea.vmem %s5, 1
    %v3895 = vld [vmem:[%s3894] sm:$0x1]
    %v3897 = vlaneseq
    %v3898 = vshrl.u32 %v3897, 7
    %v3899 = vsub.s32 0, %v3898
    %v3900 = vrot.slane %v3895, %v3899
    %v3902 = vadd.f32 %v3892, %v3900
    %v3903 = vadd.f32 %v3893, %v3900
    %v3904 = vadd.f32 %v3902, %v2095
    %v3905 = vadd.f32 %v3903, %v2096
    %s3906 = scalar_lea.vmem %s6, 1
    %v3907 = vld [vmem:[%s3906] sm:$0x1]
    %s3908 = scalar_lea.vmem %s7, 1
    %v3909 = vld [vmem:[%s3908] sm:$0x1]
    %v3910 = vsel %vm62, %v3904, 0.0
    %3911 = vadd.xlane.f32.xlu0 %v3910
    %v3912 = vpop.xlane.xlu0 %3911
    %v3913 = vsel %vm62, %v3905, 0.0
    %3914 = vadd.xlane.f32.xlu0 %v3913
    %v3915 = vpop.xlane.xlu0 %3914
    %v3916 = vmul.f32 %v3912, %v69
    %v3917 = vmul.f32 %v3915, %v69
    %v3918 = vsub.f32 %v3904, %v3916
    %v3919 = vsub.f32 %v3905, %v3917
    %v3920 = vmul.f32 %v3918, %v3918
    %v3921 = vmul.f32 %v3919, %v3919
    %v3922 = vsel %vm62, %v3920, 0.0
    %3923 = vadd.xlane.f32.xlu0 %v3922
    %v3924 = vpop.xlane.xlu0 %3923
    %v3925 = vsel %vm62, %v3921, 0.0
    %3926 = vadd.xlane.f32.xlu0 %v3925
    %v3927 = vpop.xlane.xlu0 %3926
    %v3928 = vmul.f32 %v3924, %v69
    %v3929 = vmul.f32 %v3927, %v69
    %v3930 = vadd.f32 %v3928, 1e-05
    %v3931 = vadd.f32 %v3929, 1e-05
    %v3932 = vrsqrt.pop %v3930
    %v3933 = vrsqrt.pop %v3931
    %v3934 = vmul.f32 %v3918, %v3932
    %v3935 = vmul.f32 %v3919, %v3933
    %v3937 = vlaneseq
    %v3938 = vshrl.u32 %v3937, 7
    %v3939 = vsub.s32 0, %v3938
    %v3940 = vrot.slane %v3907, %v3939
    %v3942 = vmul.f32 %v3934, %v3940
    %v3943 = vmul.f32 %v3935, %v3940
    %v3945 = vlaneseq
    %v3946 = vshrl.u32 %v3945, 7
    %v3947 = vsub.s32 0, %v3946
    %v3948 = vrot.slane %v3909, %v3947
    %v3950 = vadd.f32 %v3942, %v3948
    %v3951 = vadd.f32 %v3943, %v3948
    %s3952 = scalar_lea.vmem %s8, 32
    %v3953 = vld [vmem:[%s3952] sm:$0xff]
    %v3954 = vld [vmem:[%s3952 + $0x8] sm:$0xff]
    %v3955 = vld [vmem:[%s3952 + $0x10] sm:$0xff]
    %v3956 = vld [vmem:[%s3952 + $0x18] sm:$0xff]
    %s3957 = scalar_lea.vmem %s9, 1
    %v3958 = vld [vmem:[%s3957] sm:$0x1]
    %v3960 = vlaneseq
    %v3961 = vshrl.u32 %v3960, 7
    %v3962 = vsub.s32 0, %v3961
    %v3963 = vrot.slane %v3958, %v3962
    %v3966 = vsel %vm62, %v3950, 0
    %v3969 = vsel %vm62, %v3951, 0
    %3971 = vmatprep.subr.mxu0 0.0
    %3972 = vmatpush1.msra.mxu0 0.0
    %3973 = vmatprep.subr.mxu0 0.0
    %3974 = vmatpush1.msra.mxu0 0.0
    %3975 = vmatprep.subr.mxu0 0.0
    %3976 = vmatpush1.msra.mxu0 0.0
    %3977 = vmatprep.subr.mxu0 0.0
    %3978 = vmatpush1.msra.mxu0 0.0
    %3979 = vmatprep.subr.mxu0 0.0
    %3980 = vmatpush1.msra.mxu0 0.0
    %3981 = vmatprep.subr.mxu0 0.0
    %3982 = vmatpush1.msra.mxu0 0.0
    %3983 = vmatprep.subr.mxu0 0.0
    %3984 = vmatpush1.msra.mxu0 0.0
    %3985 = vmatprep.subr.mxu0 0.0
    %3986 = vmatpush1.msra.mxu0 0.0
    %3987 = vmatprep.subr.mxu0 0.0
    %3988 = vmatpush1.msra.mxu0 0.0
    %3989 = vmatprep.subr.mxu0 0.0
    %3990 = vmatpush1.msra.mxu0 0.0
    %3991 = vmatprep.subr.mxu0 0.0
    %3992 = vmatpush1.msra.mxu0 0.0
    %3993 = vmatprep.subr.mxu0 0.0
    %3994 = vmatpush1.msra.mxu0 0.0
    %3995 = vmatprep.subr.mxu0 0.0
    %3996 = vmatpush1.msra.mxu0 %v3956
    %3997 = vmatprep.subr.mxu0 0.0
    %3998 = vmatpush1.msra.mxu0 %v3955
    %3999 = vmatprep.subr.mxu0 0.0
    %4000 = vmatpush1.msra.mxu0 %v3954
    %4001 = vmatprep.subr.mxu0 0.0
    %4002 = vmatpush1.msra.mxu0 %v3953
    %4003 = vmatprep.subr.mxu0 0.0
    %4004 = vmatpush2.msra.mxu0 0.0
    %4005 = vmatprep.subr.mxu0 0.0
    %4006 = vmatpush2.msra.mxu0 0.0
    %4007 = vmatprep.subr.mxu0 0.0
    %4008 = vmatpush2.msra.mxu0 0.0
    %4009 = vmatprep.subr.mxu0 0.0
    %4010 = vmatpush2.msra.mxu0 0.0
    %4011 = vmatprep.subr.mxu0 0.0
    %4012 = vmatpush2.msra.mxu0 0.0
    %4013 = vmatprep.subr.mxu0 0.0
    %4014 = vmatpush2.msra.mxu0 0.0
    %4015 = vmatprep.subr.mxu0 0.0
    %4016 = vmatpush2.msra.mxu0 0.0
    %4017 = vmatprep.subr.mxu0 0.0
    %4018 = vmatpush2.msra.mxu0 0.0
    %4019 = vmatprep.subr.mxu0 0.0
    %4020 = vmatpush2.msra.mxu0 0.0
    %4021 = vmatprep.subr.mxu0 0.0
    %4022 = vmatpush2.msra.mxu0 0.0
    %4023 = vmatprep.subr.mxu0 0.0
    %4024 = vmatpush2.msra.mxu0 0.0
    %4025 = vmatprep.subr.mxu0 0.0
    %4026 = vmatpush2.msra.mxu0 0.0
    %4027 = vmatprep.subr.mxu0 0.0
    %4028 = vmatpush2.msra.mxu0 0.0
    %4029 = vmatprep.subr.mxu0 0.0
    %4030 = vmatpush2.msra.mxu0 0.0
    %4031 = vmatprep.subr.mxu0 0.0
    %4032 = vmatpush2.msra.mxu0 0.0
    %4033 = vmatprep.subr.mxu0 0.0
    %4034 = vmatpush2.msra.mxu0 0.0
    %4035 = vmatprep.mubr.f32.mxu0 0.0
    %4036 = vmatmul.mubr.f32.gmra.mxu0 %v3966
    %v4037 = vpop.f32.mrf.mxu0
    %v4038 = vadd.f32 %v3963, %v4037
    %v4039 = vpop.f32.mrf.mxu0
    %4040 = vmatprep.mubr.f32.mxu0 0.0
    %4041 = vmatmul.mubr.f32.gmra.mxu0 %v3969
    %v4042 = vpop.f32.mrf.mxu0
    %v4043 = vadd.f32 %v3963, %v4042
    %v4044 = vpop.f32.mrf.mxu0
    %4045 = vdwg.mxu0
    %v4046 = vmul.f32 %v4038, 0.5
    %v4047 = vmul.f32 %v4043, 0.5
    %v4048 = vmul.f32 %v4038, 0.70710677
    %v4049 = vmul.f32 %v4043, 0.70710677
    %v4050 = verf.f32.pop %v4048
    %v4051 = verf.f32.pop %v4049
    %v4052 = vadd.f32 %v4050, 1.0
    %v4053 = vadd.f32 %v4051, 1.0
    %v4054 = vmul.f32 %v4046, %v4052
    %v4055 = vmul.f32 %v4047, %v4053
    %s4056 = scalar_lea.vmem %s10, 64
    %v4057 = vld [vmem:[%s4056] sm:$0xff]
    %v4058 = vld [vmem:[%s4056 + $0x8] sm:$0xff]
    %v4059 = vld [vmem:[%s4056 + $0x10] sm:$0xff]
    %v4060 = vld [vmem:[%s4056 + $0x18] sm:$0xff]
    %v4061 = vld [vmem:[%s4056 + $0x20] sm:$0xff]
    %v4062 = vld [vmem:[%s4056 + $0x28] sm:$0xff]
    %v4063 = vld [vmem:[%s4056 + $0x30] sm:$0xff]
    %v4064 = vld [vmem:[%s4056 + $0x38] sm:$0xff]
    %s4065 = scalar_lea.vmem %s11, 1
    %v4066 = vld [vmem:[%s4065] sm:$0x1]
    %v4068 = vlaneseq
    %v4069 = vshrl.u32 %v4068, 7
    %v4070 = vsub.s32 0, %v4069
    %v4071 = vrot.slane %v4066, %v4070
    %v4074 = vsel %vm2013, %v4054, 0
    %v4077 = vsel %vm2013, %v4055, 0
    %4079 = vmatprep.subr.mxu0 0.0
    %4080 = vmatpush1.msra.mxu0 0.0
    %4081 = vmatprep.subr.mxu0 0.0
    %4082 = vmatpush1.msra.mxu0 0.0
    %4083 = vmatprep.subr.mxu0 0.0
    %4084 = vmatpush1.msra.mxu0 0.0
    %4085 = vmatprep.subr.mxu0 0.0
    %4086 = vmatpush1.msra.mxu0 0.0
    %4087 = vmatprep.subr.mxu0 0.0
    %4088 = vmatpush1.msra.mxu0 0.0
    %4089 = vmatprep.subr.mxu0 0.0
    %4090 = vmatpush1.msra.mxu0 0.0
    %4091 = vmatprep.subr.mxu0 0.0
    %4092 = vmatpush1.msra.mxu0 0.0
    %4093 = vmatprep.subr.mxu0 0.0
    %4094 = vmatpush1.msra.mxu0 0.0
    %4095 = vmatprep.subr.mxu0 0.0
    %4096 = vmatpush1.msra.mxu0 %v4064
    %4097 = vmatprep.subr.mxu0 0.0
    %4098 = vmatpush1.msra.mxu0 %v4063
    %4099 = vmatprep.subr.mxu0 0.0
    %4100 = vmatpush1.msra.mxu0 %v4062
    %4101 = vmatprep.subr.mxu0 0.0
    %4102 = vmatpush1.msra.mxu0 %v4061
    %4103 = vmatprep.subr.mxu0 0.0
    %4104 = vmatpush1.msra.mxu0 %v4060
    %4105 = vmatprep.subr.mxu0 0.0
    %4106 = vmatpush1.msra.mxu0 %v4059
    %4107 = vmatprep.subr.mxu0 0.0
    %4108 = vmatpush1.msra.mxu0 %v4058
    %4109 = vmatprep.subr.mxu0 0.0
    %4110 = vmatpush1.msra.mxu0 %v4057
    %4111 = vmatprep.subr.mxu0 0.0
    %4112 = vmatpush2.msra.mxu0 0.0
    %4113 = vmatprep.subr.mxu0 0.0
    %4114 = vmatpush2.msra.mxu0 0.0
    %4115 = vmatprep.subr.mxu0 0.0
    %4116 = vmatpush2.msra.mxu0 0.0
    %4117 = vmatprep.subr.mxu0 0.0
    %4118 = vmatpush2.msra.mxu0 0.0
    %4119 = vmatprep.subr.mxu0 0.0
    %4120 = vmatpush2.msra.mxu0 0.0
    %4121 = vmatprep.subr.mxu0 0.0
    %4122 = vmatpush2.msra.mxu0 0.0
    %4123 = vmatprep.subr.mxu0 0.0
    %4124 = vmatpush2.msra.mxu0 0.0
    %4125 = vmatprep.subr.mxu0 0.0
    %4126 = vmatpush2.msra.mxu0 0.0
    %4127 = vmatprep.subr.mxu0 0.0
    %4128 = vmatpush2.msra.mxu0 0.0
    %4129 = vmatprep.subr.mxu0 0.0
    %4130 = vmatpush2.msra.mxu0 0.0
    %4131 = vmatprep.subr.mxu0 0.0
    %4132 = vmatpush2.msra.mxu0 0.0
    %4133 = vmatprep.subr.mxu0 0.0
    %4134 = vmatpush2.msra.mxu0 0.0
    %4135 = vmatprep.subr.mxu0 0.0
    %4136 = vmatpush2.msra.mxu0 0.0
    %4137 = vmatprep.subr.mxu0 0.0
    %4138 = vmatpush2.msra.mxu0 0.0
    %4139 = vmatprep.subr.mxu0 0.0
    %4140 = vmatpush2.msra.mxu0 0.0
    %4141 = vmatprep.subr.mxu0 0.0
    %4142 = vmatpush2.msra.mxu0 0.0
    %4143 = vmatprep.mubr.f32.mxu0 0.0
    %4144 = vmatmul.mubr.f32.gmra.mxu0 %v4074
    %v4145 = vpop.f32.mrf.mxu0
    %v4146 = vadd.f32 %v4071, %v4145
    %v4147 = vpop.f32.mrf.mxu0
    %4148 = vmatprep.mubr.f32.mxu0 0.0
    %4149 = vmatmul.mubr.f32.gmra.mxu0 %v4077
    %v4150 = vpop.f32.mrf.mxu0
    %v4151 = vadd.f32 %v4071, %v4150
    %v4152 = vpop.f32.mrf.mxu0
    %4153 = vdwg.mxu0
    %v4154 = vadd.f32 %v4146, %v3904
    %v4155 = vadd.f32 %v4151, %v3905
    %4156 = vst.msk [vmem:[#allocation2] sm:$0xff] %vm62, %v4154
    %4157 = vst.msk [vmem:[#allocation2 + $0x8] sm:$0xff] %vm62, %v4155
    // Predicated region
    $region50: #{transformer_forward.1} parent=1 // pred_check
      _
    $region51: #{transformer_forward.1} parent=1 // pred_check_branch
      %4159 = sbr.rel (0) target = $region53
    $region52: #{transformer_forward.1} parent=1 // pred_region
      %s4161 = ssub.s32 256, 256
      %4162 = vsyncadd [#allocation3], %s4161
      %s4163 = sshll.u32 [#allocation2], 4
      %s4164 = int_to_ptr.vmem [resolvable:$true] %s4163
      %4169 = dma.vmem_to_hbm [thread:$0]  %s4164, 256, %s12, [#allocation3], 128, 128, 8
    $region53: #{transformer_forward.1} parent=1 // pred_fallthru
      _
    // Predicated region
    $region54: #{transformer_forward.1} parent=1 // pred_check
      _
    $region55: #{transformer_forward.1} parent=1 // pred_check_branch
      %4171 = sbr.rel (0) target = $region57
    $region56: #{transformer_forward.1} parent=1 // pred_region
      %4172 = dma.done [#allocation3], 256
    $region57: #{transformer_forward.1} parent=1 // pred_fallthru
      _
    %4173 = vsyncpa [#allocation3], 1

</llo_original>
